<compile_context>
chip_gen: v7x
topology: tpu7x:2x2x1
jax: 0.10.0
libtpu: 0.0.40
codegen_flags: <defaults>
</compile_context>

<pallas_src>
import functools

import jax
import jax.numpy as jnp
from jax.experimental import pallas as pl
from jax.experimental.pallas import tpu as pltpu


def se_attention_kernel(x_ref, ln_w_ref, ln_b_ref, wqkv_ref, bqkv_ref,
                        wproj_ref, bproj_ref, out_ref, o_scr, *, num_heads):
    """One grid step: bt batch elements; LN -> MHSA -> proj -> token mean."""
    bt, n_tok, c = x_ref.shape
    hd = c // num_heads
    m = bt * n_tok

    # Activation arrives as bf16 (halved DMA); LayerNorm math stays in f32
    # (v5e has no bf16 VPU/EUP path, and it is numerically the right call).
    x = x_ref[...].reshape(m, c).astype(jnp.float32)

    # --- LayerNorm over channels (eps = 1e-5, elementwise affine) -----------
    mean = jnp.mean(x, axis=-1, keepdims=True)
    var = jnp.mean(jnp.square(x - mean), axis=-1, keepdims=True)
    xn = (x - mean) * jax.lax.rsqrt(var + 1e-5)
    xn = xn * ln_w_ref[0] + ln_b_ref[0]

    # --- QKV projection on the whole (bt*N, C) block: bf16 MXU, f32 accum ---
    # The 1/sqrt(hd) scale is already folded into the q columns of wqkv/bqkv,
    # and the whole qkv intermediate is cast to bf16 exactly once here.
    qkv = (jnp.dot(xn.astype(jnp.bfloat16), wqkv_ref[...],
                   preferred_element_type=jnp.float32)
           + bqkv_ref[0]).astype(jnp.bfloat16)

    # --- multi-head attention, batched over the bt batch elements -----------
    # TODO(synk): attn_drop / proj_drop are identity in eval mode; dropout not applied.
    for h in range(num_heads):
        qh = qkv[:, h * hd:(h + 1) * hd].reshape(bt, n_tok, hd)
        kh = qkv[:, c + h * hd:c + (h + 1) * hd].reshape(bt, n_tok, hd)
        vh = qkv[:, 2 * c + h * hd:2 * c + (h + 1) * hd].reshape(bt, n_tok, hd)
        # scores: contract last dims of q and k directly (no explicit transpose)
        s = jax.lax.dot_general(
            qh, kh,
            dimension_numbers=(((2,), (2,)), ((0,), (0,))),
            preferred_element_type=jnp.float32)                 # (bt, N, N) f32
        s = s - jnp.max(s, axis=-1, keepdims=True)
        p = jnp.exp(s)
        p = p * pl.reciprocal(jnp.sum(p, axis=-1, keepdims=True), approx=True)
        oh = jax.lax.dot_general(
            p.astype(jnp.bfloat16), vh,
            dimension_numbers=(((2,), (1,)), ((0,), (0,))),
            preferred_element_type=jnp.float32)                 # (bt, N, hd)
        o_scr[:, :, h * hd:(h + 1) * hd] = oh.astype(o_scr.dtype)

    # --- output projection on the whole (bt*N, C) block ----------------------
    o = o_scr[...].reshape(m, c)
    y = jnp.dot(o, wproj_ref[...], preferred_element_type=jnp.float32) + bproj_ref[0]

    # --- AdaptiveAvgPool1d(1) over tokens: mean via 1/N multiply -------------
    y = y.reshape(bt, n_tok, c)
    out_ref[...] = (jnp.sum(y, axis=1, keepdims=True) * (1.0 / n_tok)
                    ).astype(out_ref.dtype)


def _adaptive_pool_matrix(in_size, out_size, dtype=jnp.float32):
    """Row-stochastic matrix reproducing PyTorch adaptive-avg-pool windows."""
    i = jnp.arange(out_size)
    starts = (i * in_size) // out_size
    ends = ((i + 1) * in_size + out_size - 1) // out_size
    pos = jnp.arange(in_size)
    mask = ((pos[None, :] >= starts[:, None]) &
            (pos[None, :] < ends[:, None])).astype(dtype)
    return mask / jnp.sum(mask, axis=1, keepdims=True)


def _adaptive_avg_pool2d(x, out_hw):
    """NCHW adaptive average pool (reference path only)."""
    _, _, h, w = x.shape
    ph = _adaptive_pool_matrix(h, out_hw, x.dtype)
    pw = _adaptive_pool_matrix(w, out_hw, x.dtype)
    return jnp.einsum('ph,bchw,qw->bcpq', ph, x, pw)


def _choose_batch_block(b, n, c, *, max_bt=32, min_steps=4,
                        vmem_budget=24 * 1024 * 1024):
    """VMEM-budget-aware batch-block size.

    Keeps >= min_steps grid steps (>= 2 per v7x TensorCore so the BlockSpec
    pipeline can hide the x-block prologue DMA) whenever the batch allows,
    caps bt by an estimate of the per-step VMEM footprint, and never silently
    collapses to a giant single block.  The wrapper pads B up to a multiple of
    the returned bt.
    """
    # Rough live VMEM bytes per batch element inside one grid step.
    per_elem = (2 * 2 * n * c          # bf16 x block, double-buffered
                + 2 * 3 * n * c        # bf16 qkv intermediate
                + 2 * 4 * n * c        # f32 LayerNorm / projection temporaries
                + 2 * 4 * n * n        # f32 scores + probs (one head live)
                + 2 * n * c)           # bf16 head-output scratch
    # Constant-index weight blocks are still double-buffered by default;
    # documented cost (tiny at these sizes).
    # TODO(synk): pipeline_mode=pl.Buffered(1) on weight specs would reclaim it.
    weight_bytes = 2 * 2 * (4 * c * c + 4 * c)
    avail = vmem_budget - weight_bytes
    if avail < per_elem:
        # TODO(synk): flash-style token tiling for very large un-pooled N.
        raise ValueError(
            f"SE attention block with N={n}, C={c} does not fit the VMEM "
            "budget even at batch-block 1; tile attention over tokens.")
    bt = int(min(max_bt, avail // per_elem, pl.cdiv(b, min_steps), b))
    return max(bt, 1)


def se_forward_pallas(x, params, *, patch=8, num_heads=4):
    b, c, h, w = x.shape
    assert c % num_heads == 0
    if h > patch:                     # mirrors the PyTorch `if h > self.patch` guard
        # Fused pool + NCHW->BNC layout change: single pass over x.
        ph = _adaptive_pool_matrix(h, patch, x.dtype)
        pw = _adaptive_pool_matrix(w, patch, x.dtype)
        xt = jnp.einsum('ph,bchw,qw->bpqc', ph, x, pw).reshape(b, patch * patch, c)
    else:
        # TODO(synk): the no-pool NCHW->BNC transpose remains XLA glue.
        xt = jnp.transpose(x, (0, 2, 3, 1)).reshape(b, h * w, c)
    n = xt.shape[1]

    bt = _choose_batch_block(b, n, c)
    b_pad = pl.cdiv(b, bt) * bt
    # bf16 activations: halves the dominant per-step DMA; LN is f32 in-kernel.
    xt = xt.astype(jnp.bfloat16)
    if b_pad != b:
        xt = jnp.concatenate(
            [xt, jnp.zeros((b_pad - b, n, c), xt.dtype)], axis=0)
    grid = (b_pad // bt,)

    hd = c // num_heads
    scale = hd ** -0.5
    # Fold the q scale into the weights (before the bf16 cast) and ship the
    # big weight matrices in bf16 (full-rate MXU operands, half DMA/VMEM).
    wqkv = params["wqkv"].at[:, :c].multiply(scale).astype(jnp.bfloat16)
    bqkv = params["bqkv"].at[:, :c].multiply(scale)
    wproj = params["wproj"].astype(jnp.bfloat16)

    kernel = functools.partial(se_attention_kernel, num_heads=num_heads)
    out = pl.pallas_call(
        kernel,
        out_shape=jax.ShapeDtypeStruct((b_pad, 1, c), jnp.float32),
        grid=grid,
        in_specs=[
            pl.BlockSpec((bt, n, c), lambda i: (i, 0, 0)),      # x (bf16)
            pl.BlockSpec((1, c), lambda i: (0, 0)),             # ln weight
            pl.BlockSpec((1, c), lambda i: (0, 0)),             # ln bias
            pl.BlockSpec((c, 3 * c), lambda i: (0, 0)),         # qkv weight (in, out)
            pl.BlockSpec((1, 3 * c), lambda i: (0, 0)),         # qkv bias (q-scaled)
            pl.BlockSpec((c, c), lambda i: (0, 0)),             # proj weight (in, out)
            pl.BlockSpec((1, c), lambda i: (0, 0)),             # proj bias
        ],
        out_specs=pl.BlockSpec((bt, 1, c), lambda i: (i, 0, 0)),
        scratch_shapes=[pltpu.VMEM((bt, n, c), jnp.bfloat16)],  # concat-free head buffer
        compiler_params=pltpu.CompilerParams(dimension_semantics=("parallel",)),
    )(xt, params["ln_w"], params["ln_b"], wqkv, bqkv, wproj, params["bproj"])
    return out.reshape(b_pad, c)[:b]


def se_forward_reference(x, params, *, patch=8, num_heads=4):
    """Pure-JAX f32 reference mirroring the PyTorch forward (eval mode)."""
    b, c, h, w = x.shape
    if h > patch:
        x = _adaptive_avg_pool2d(x, patch)
    n = x.shape[2] * x.shape[3]
    xt = jnp.transpose(x.reshape(b, c, n), (0, 2, 1))
    mean = xt.mean(-1, keepdims=True)
    var = ((xt - mean) ** 2).mean(-1, keepdims=True)
    xn = (xt - mean) / jnp.sqrt(var + 1e-5) * params["ln_w"][0] + params["ln_b"][0]
    qkv = xn @ params["wqkv"] + params["bqkv"][0]
    hd = c // num_heads
    qkv = qkv.reshape(b, n, 3, num_heads, hd).transpose(2, 0, 3, 1, 4)
    q, k, v = qkv[0] * hd ** -0.5, qkv[1], qkv[2]
    attn = jax.nn.softmax(q @ jnp.swapaxes(k, -2, -1), axis=-1)
    o = (attn @ v).transpose(0, 2, 1, 3).reshape(b, n, c)
    o = o @ params["wproj"] + params["bproj"][0]
    return o.mean(axis=1)


def init_params(key, c):
    ks = jax.random.split(key, 4)
    s_in = 1.0 / jnp.sqrt(c)
    return {
        "ln_w": jnp.ones((1, c), jnp.float32),
        "ln_b": jnp.zeros((1, c), jnp.float32),
        "wqkv": jax.random.normal(ks[0], (c, 3 * c), jnp.float32) * s_in,
        "bqkv": jax.random.normal(ks[1], (1, 3 * c), jnp.float32) * 0.02,
        "wproj": jax.random.normal(ks[2], (c, c), jnp.float32) * s_in,
        "bproj": jax.random.normal(ks[3], (1, c), jnp.float32) * 0.02,
    }


if __name__ == "__main__":
    key = jax.random.PRNGKey(0)
    kx, kx2, kp = jax.random.split(key, 3)

    # Small analogue of (b, 512, h, w): lane-aligned C (multiple of 128).
    B, C, H, W = 8, 128, 16, 16
    PATCH, NUM_HEADS = 8, 4

    x = jax.random.normal(kx, (B, C, H, W), jnp.float32)
    params = init_params(kp, C)

    out = jax.block_until_ready(
        se_forward_pallas(x, params, patch=PATCH, num_heads=NUM_HEADS))
    ref = se_forward_reference(x, params, patch=PATCH, num_heads=NUM_HEADS)
    assert out.shape == (B, C)
    # bf16 activations/MXU operands + approx reciprocal -> compare against
    # the f32 reference with a correspondingly relaxed tolerance.
    err = jnp.max(jnp.abs(out - ref))
    assert jnp.allclose(out, ref, atol=3e-2, rtol=3e-2), f"max abs err {err}"

    # Second config: odd batch (exercises batch padding) and h == patch
    # (exercises the no-pool path).
    x2 = jax.random.normal(kx2, (5, C, PATCH, PATCH), jnp.float32)
    out2 = jax.block_until_ready(
        se_forward_pallas(x2, params, patch=PATCH, num_heads=NUM_HEADS))
    ref2 = se_forward_reference(x2, params, patch=PATCH, num_heads=NUM_HEADS)
    assert out2.shape == (5, C)
    err2 = jnp.max(jnp.abs(out2 - ref2))
    assert jnp.allclose(out2, ref2, atol=3e-2, rtol=3e-2), f"max abs err {err2}"

    print("KERNEL_OK")
</pallas_src>

<mosaic_0001>
module attributes {stable_mosaic.version = 11 : i64} {
  func.func @se_attention_kernel(%arg0: i32, %arg1: memref<2x64x128xbf16, #tpu.memory_space<vmem>>, %arg2: memref<1x128xf32, #tpu.memory_space<vmem>>, %arg3: memref<1x128xf32, #tpu.memory_space<vmem>>, %arg4: memref<128x384xbf16, #tpu.memory_space<vmem>>, %arg5: memref<1x384xf32, #tpu.memory_space<vmem>>, %arg6: memref<128x128xbf16, #tpu.memory_space<vmem>>, %arg7: memref<1x128xf32, #tpu.memory_space<vmem>>, %arg8: memref<2x1x128xf32, #tpu.memory_space<vmem>>, %arg9: memref<2x64x128xbf16, #tpu.memory_space<vmem>>) attributes {dimension_semantics = [#tpu.dimension_semantics<parallel>], iteration_bounds = array<i64: 4>, scalar_prefetch = 0 : i64, scratch_operands = 1 : i64, tpu.core_type = #tpu.core_type<tc>, window_params = [{transform_indices = @transform_0, window_bounds = array<i64: 2, 64, 128>}, {pipeline_mode = #tpu.pipeline_mode<synchronous>, transform_indices = @transform_1, window_bounds = array<i64: 1, 128>}, {pipeline_mode = #tpu.pipeline_mode<synchronous>, transform_indices = @transform_2, window_bounds = array<i64: 1, 128>}, {pipeline_mode = #tpu.pipeline_mode<synchronous>, transform_indices = @transform_3, window_bounds = array<i64: 128, 384>}, {pipeline_mode = #tpu.pipeline_mode<synchronous>, transform_indices = @transform_4, window_bounds = array<i64: 1, 384>}, {pipeline_mode = #tpu.pipeline_mode<synchronous>, transform_indices = @transform_5, window_bounds = array<i64: 128, 128>}, {pipeline_mode = #tpu.pipeline_mode<synchronous>, transform_indices = @transform_6, window_bounds = array<i64: 1, 128>}, {transform_indices = @transform_7, window_bounds = array<i64: 2, 1, 128>}]} {
    %c0 = arith.constant 0 : index
    %c0_0 = arith.constant 0 : index
    %c0_1 = arith.constant 0 : index
    %0 = vector.load %arg1[%c0, %c0_0, %c0_1] : memref<2x64x128xbf16, #tpu.memory_space<vmem>>, vector<2x64x128xbf16>
    %1 = vector.shape_cast %0 : vector<2x64x128xbf16> to vector<128x128xbf16>
    %2 = arith.extf %1 : vector<128x128xbf16> to vector<128x128xf32>
    %cst = arith.constant dense<0.000000e+00> : vector<128xf32>
    %3 = vector.multi_reduction <add>, %2, %cst [1] : vector<128x128xf32> to vector<128xf32>
    %4 = vector.shape_cast %3 : vector<128xf32> to vector<128x1xf32>
    %cst_2 = arith.constant 1.280000e+02 : f32
    %5 = vector.broadcast %cst_2 : f32 to vector<128x1xf32>
    %6 = arith.divf %4, %5 : vector<128x1xf32>
    %7 = vector.broadcast %6 : vector<128x1xf32> to vector<128x128xf32>
    %8 = arith.subf %2, %7 : vector<128x128xf32>
    %9 = arith.mulf %8, %8 : vector<128x128xf32>
    %cst_3 = arith.constant dense<0.000000e+00> : vector<128xf32>
    %10 = vector.multi_reduction <add>, %9, %cst_3 [1] : vector<128x128xf32> to vector<128xf32>
    %11 = vector.shape_cast %10 : vector<128xf32> to vector<128x1xf32>
    %cst_4 = arith.constant 1.280000e+02 : f32
    %12 = vector.broadcast %cst_4 : f32 to vector<128x1xf32>
    %13 = arith.divf %11, %12 : vector<128x1xf32>
    %14 = vector.broadcast %6 : vector<128x1xf32> to vector<128x128xf32>
    %15 = arith.subf %2, %14 : vector<128x128xf32>
    %cst_5 = arith.constant 9.99999974E-6 : f32
    %16 = vector.broadcast %cst_5 : f32 to vector<128x1xf32>
    %17 = arith.addf %13, %16 : vector<128x1xf32>
    %18 = math.rsqrt %17 : vector<128x1xf32>
    %19 = vector.broadcast %18 : vector<128x1xf32> to vector<128x128xf32>
    %20 = arith.mulf %15, %19 : vector<128x128xf32>
    %c0_6 = arith.constant 0 : index
    %c0_7 = arith.constant 0 : index
    %21 = vector.load %arg2[%c0_6, %c0_7] : memref<1x128xf32, #tpu.memory_space<vmem>>, vector<1x128xf32>
    %22 = vector.shape_cast %21 : vector<1x128xf32> to vector<128xf32>
    %23 = vector.shape_cast %22 : vector<128xf32> to vector<1x128xf32>
    %24 = vector.broadcast %23 : vector<1x128xf32> to vector<128x128xf32>
    %25 = arith.mulf %20, %24 : vector<128x128xf32>
    %c0_8 = arith.constant 0 : index
    %c0_9 = arith.constant 0 : index
    %26 = vector.load %arg3[%c0_8, %c0_9] : memref<1x128xf32, #tpu.memory_space<vmem>>, vector<1x128xf32>
    %27 = vector.shape_cast %26 : vector<1x128xf32> to vector<128xf32>
    %28 = vector.shape_cast %27 : vector<128xf32> to vector<1x128xf32>
    %29 = vector.broadcast %28 : vector<1x128xf32> to vector<128x128xf32>
    %30 = arith.addf %25, %29 : vector<128x128xf32>
    %31 = arith.truncf %30 : vector<128x128xf32> to vector<128x128xbf16>
    %c0_10 = arith.constant 0 : index
    %c0_11 = arith.constant 0 : index
    %32 = vector.load %arg4[%c0_10, %c0_11] : memref<128x384xbf16, #tpu.memory_space<vmem>>, vector<128x384xbf16>
    %cst_12 = arith.constant dense<0.000000e+00> : vector<128x384xf32>
    %33 = tpu.matmul %31, %32, %cst_12 {dimension_numbers = #tpu.dot_dimension_numbers<[1], [0], [0], [1], [0, 0, 1, 1], [], []>} : vector<128x128xbf16>, vector<128x384xbf16>, vector<128x384xf32> -> vector<128x384xf32>
    %c0_13 = arith.constant 0 : index
    %c0_14 = arith.constant 0 : index
    %34 = vector.load %arg5[%c0_13, %c0_14] : memref<1x384xf32, #tpu.memory_space<vmem>>, vector<1x384xf32>
    %35 = vector.shape_cast %34 : vector<1x384xf32> to vector<384xf32>
    %36 = vector.shape_cast %35 : vector<384xf32> to vector<1x384xf32>
    %37 = vector.broadcast %36 : vector<1x384xf32> to vector<128x384xf32>
    %38 = arith.addf %33, %37 : vector<128x384xf32>
    %39 = arith.truncf %38 : vector<128x384xf32> to vector<128x384xbf16>
    %40 = vector.extract_strided_slice %39 {offsets = [0, 0], sizes = [128, 32], strides = [1, 1]} : vector<128x384xbf16> to vector<128x32xbf16>
    %41 = vector.shape_cast %40 : vector<128x32xbf16> to vector<2x64x32xbf16>
    %42 = vector.extract_strided_slice %39 {offsets = [0, 128], sizes = [128, 32], strides = [1, 1]} : vector<128x384xbf16> to vector<128x32xbf16>
    %43 = vector.shape_cast %42 : vector<128x32xbf16> to vector<2x64x32xbf16>
    %44 = vector.extract_strided_slice %39 {offsets = [0, 256], sizes = [128, 32], strides = [1, 1]} : vector<128x384xbf16> to vector<128x32xbf16>
    %45 = vector.shape_cast %44 : vector<128x32xbf16> to vector<2x64x32xbf16>
    %cst_15 = arith.constant dense<0.000000e+00> : vector<2x64x64xf32>
    %46 = tpu.matmul %41, %43, %cst_15 {dimension_numbers = #tpu.dot_dimension_numbers<[2], [2], [1], [1], [0, 0, 0, 1, 1, 1], [0], [0]>} : vector<2x64x32xbf16>, vector<2x64x32xbf16>, vector<2x64x64xf32> -> vector<2x64x64xf32>
    %cst_16 = arith.constant dense<0xFF800000> : vector<2x64xf32>
    %47 = vector.multi_reduction <maximumf>, %46, %cst_16 [2] : vector<2x64x64xf32> to vector<2x64xf32>
    %48 = vector.shape_cast %47 : vector<2x64xf32> to vector<2x64x1xf32>
    %49 = vector.broadcast %48 : vector<2x64x1xf32> to vector<2x64x64xf32>
    %50 = arith.subf %46, %49 : vector<2x64x64xf32>
    %51 = math.exp %50 : vector<2x64x64xf32>
    %cst_17 = arith.constant dense<0.000000e+00> : vector<2x64xf32>
    %52 = vector.multi_reduction <add>, %51, %cst_17 [2] : vector<2x64x64xf32> to vector<2x64xf32>
    %53 = vector.shape_cast %52 : vector<2x64xf32> to vector<2x64x1xf32>
    %54 = tpu.reciprocal %53 {approx = true} : vector<2x64x1xf32> -> vector<2x64x1xf32>
    %55 = vector.broadcast %54 : vector<2x64x1xf32> to vector<2x64x64xf32>
    %56 = arith.mulf %51, %55 : vector<2x64x64xf32>
    %57 = arith.truncf %56 : vector<2x64x64xf32> to vector<2x64x64xbf16>
    %cst_18 = arith.constant dense<0.000000e+00> : vector<2x64x32xf32>
    %58 = tpu.matmul %57, %45, %cst_18 {dimension_numbers = #tpu.dot_dimension_numbers<[2], [1], [1], [2], [0, 0, 0, 1, 1, 2], [0], [0]>} : vector<2x64x64xbf16>, vector<2x64x32xbf16>, vector<2x64x32xf32> -> vector<2x64x32xf32>
    %59 = arith.truncf %58 : vector<2x64x32xf32> to vector<2x64x32xbf16>
    %c0_19 = arith.constant 0 : index
    %c0_20 = arith.constant 0 : index
    %c0_21 = arith.constant 0 : index
    %60 = vector.load %arg9[%c0_19, %c0_20, %c0_21] : memref<2x64x128xbf16, #tpu.memory_space<vmem>>, vector<2x64x32xbf16>
    tpu.vector_store %arg9[%c0_19, %c0_20, %c0_21], %59 {strides = array<i32>} : memref<2x64x128xbf16, #tpu.memory_space<vmem>>, vector<2x64x32xbf16>,
    %61 = vector.extract_strided_slice %39 {offsets = [0, 32], sizes = [128, 32], strides = [1, 1]} : vector<128x384xbf16> to vector<128x32xbf16>
    %62 = vector.shape_cast %61 : vector<128x32xbf16> to vector<2x64x32xbf16>
    %63 = vector.extract_strided_slice %39 {offsets = [0, 160], sizes = [128, 32], strides = [1, 1]} : vector<128x384xbf16> to vector<128x32xbf16>
    %64 = vector.shape_cast %63 : vector<128x32xbf16> to vector<2x64x32xbf16>
    %65 = vector.extract_strided_slice %39 {offsets = [0, 288], sizes = [128, 32], strides = [1, 1]} : vector<128x384xbf16> to vector<128x32xbf16>
    %66 = vector.shape_cast %65 : vector<128x32xbf16> to vector<2x64x32xbf16>
    %cst_22 = arith.constant dense<0.000000e+00> : vector<2x64x64xf32>
    %67 = tpu.matmul %62, %64, %cst_22 {dimension_numbers = #tpu.dot_dimension_numbers<[2], [2], [1], [1], [0, 0, 0, 1, 1, 1], [0], [0]>} : vector<2x64x32xbf16>, vector<2x64x32xbf16>, vector<2x64x64xf32> -> vector<2x64x64xf32>
    %cst_23 = arith.constant dense<0xFF800000> : vector<2x64xf32>
    %68 = vector.multi_reduction <maximumf>, %67, %cst_23 [2] : vector<2x64x64xf32> to vector<2x64xf32>
    %69 = vector.shape_cast %68 : vector<2x64xf32> to vector<2x64x1xf32>
    %70 = vector.broadcast %69 : vector<2x64x1xf32> to vector<2x64x64xf32>
    %71 = arith.subf %67, %70 : vector<2x64x64xf32>
    %72 = math.exp %71 : vector<2x64x64xf32>
    %cst_24 = arith.constant dense<0.000000e+00> : vector<2x64xf32>
    %73 = vector.multi_reduction <add>, %72, %cst_24 [2] : vector<2x64x64xf32> to vector<2x64xf32>
    %74 = vector.shape_cast %73 : vector<2x64xf32> to vector<2x64x1xf32>
    %75 = tpu.reciprocal %74 {approx = true} : vector<2x64x1xf32> -> vector<2x64x1xf32>
    %76 = vector.broadcast %75 : vector<2x64x1xf32> to vector<2x64x64xf32>
    %77 = arith.mulf %72, %76 : vector<2x64x64xf32>
    %78 = arith.truncf %77 : vector<2x64x64xf32> to vector<2x64x64xbf16>
    %cst_25 = arith.constant dense<0.000000e+00> : vector<2x64x32xf32>
    %79 = tpu.matmul %78, %66, %cst_25 {dimension_numbers = #tpu.dot_dimension_numbers<[2], [1], [1], [2], [0, 0, 0, 1, 1, 2], [0], [0]>} : vector<2x64x64xbf16>, vector<2x64x32xbf16>, vector<2x64x32xf32> -> vector<2x64x32xf32>
    %80 = arith.truncf %79 : vector<2x64x32xf32> to vector<2x64x32xbf16>
    %c0_26 = arith.constant 0 : index
    %c0_27 = arith.constant 0 : index
    %c32 = arith.constant 32 : index
    %81 = vector.load %arg9[%c0_26, %c0_27, %c32] : memref<2x64x128xbf16, #tpu.memory_space<vmem>>, vector<2x64x32xbf16>
    tpu.vector_store %arg9[%c0_26, %c0_27, %c32], %80 {strides = array<i32>} : memref<2x64x128xbf16, #tpu.memory_space<vmem>>, vector<2x64x32xbf16>,
    %82 = vector.extract_strided_slice %39 {offsets = [0, 64], sizes = [128, 32], strides = [1, 1]} : vector<128x384xbf16> to vector<128x32xbf16>
    %83 = vector.shape_cast %82 : vector<128x32xbf16> to vector<2x64x32xbf16>
    %84 = vector.extract_strided_slice %39 {offsets = [0, 192], sizes = [128, 32], strides = [1, 1]} : vector<128x384xbf16> to vector<128x32xbf16>
    %85 = vector.shape_cast %84 : vector<128x32xbf16> to vector<2x64x32xbf16>
    %86 = vector.extract_strided_slice %39 {offsets = [0, 320], sizes = [128, 32], strides = [1, 1]} : vector<128x384xbf16> to vector<128x32xbf16>
    %87 = vector.shape_cast %86 : vector<128x32xbf16> to vector<2x64x32xbf16>
    %cst_28 = arith.constant dense<0.000000e+00> : vector<2x64x64xf32>
    %88 = tpu.matmul %83, %85, %cst_28 {dimension_numbers = #tpu.dot_dimension_numbers<[2], [2], [1], [1], [0, 0, 0, 1, 1, 1], [0], [0]>} : vector<2x64x32xbf16>, vector<2x64x32xbf16>, vector<2x64x64xf32> -> vector<2x64x64xf32>
    %cst_29 = arith.constant dense<0xFF800000> : vector<2x64xf32>
    %89 = vector.multi_reduction <maximumf>, %88, %cst_29 [2] : vector<2x64x64xf32> to vector<2x64xf32>
    %90 = vector.shape_cast %89 : vector<2x64xf32> to vector<2x64x1xf32>
    %91 = vector.broadcast %90 : vector<2x64x1xf32> to vector<2x64x64xf32>
    %92 = arith.subf %88, %91 : vector<2x64x64xf32>
    %93 = math.exp %92 : vector<2x64x64xf32>
    %cst_30 = arith.constant dense<0.000000e+00> : vector<2x64xf32>
    %94 = vector.multi_reduction <add>, %93, %cst_30 [2] : vector<2x64x64xf32> to vector<2x64xf32>
    %95 = vector.shape_cast %94 : vector<2x64xf32> to vector<2x64x1xf32>
    %96 = tpu.reciprocal %95 {approx = true} : vector<2x64x1xf32> -> vector<2x64x1xf32>
    %97 = vector.broadcast %96 : vector<2x64x1xf32> to vector<2x64x64xf32>
    %98 = arith.mulf %93, %97 : vector<2x64x64xf32>
    %99 = arith.truncf %98 : vector<2x64x64xf32> to vector<2x64x64xbf16>
    %cst_31 = arith.constant dense<0.000000e+00> : vector<2x64x32xf32>
    %100 = tpu.matmul %99, %87, %cst_31 {dimension_numbers = #tpu.dot_dimension_numbers<[2], [1], [1], [2], [0, 0, 0, 1, 1, 2], [0], [0]>} : vector<2x64x64xbf16>, vector<2x64x32xbf16>, vector<2x64x32xf32> -> vector<2x64x32xf32>
    %101 = arith.truncf %100 : vector<2x64x32xf32> to vector<2x64x32xbf16>
    %c0_32 = arith.constant 0 : index
    %c0_33 = arith.constant 0 : index
    %c64 = arith.constant 64 : index
    %102 = vector.load %arg9[%c0_32, %c0_33, %c64] : memref<2x64x128xbf16, #tpu.memory_space<vmem>>, vector<2x64x32xbf16>
    tpu.vector_store %arg9[%c0_32, %c0_33, %c64], %101 {strides = array<i32>} : memref<2x64x128xbf16, #tpu.memory_space<vmem>>, vector<2x64x32xbf16>,
    %103 = vector.extract_strided_slice %39 {offsets = [0, 96], sizes = [128, 32], strides = [1, 1]} : vector<128x384xbf16> to vector<128x32xbf16>
    %104 = vector.shape_cast %103 : vector<128x32xbf16> to vector<2x64x32xbf16>
    %105 = vector.extract_strided_slice %39 {offsets = [0, 224], sizes = [128, 32], strides = [1, 1]} : vector<128x384xbf16> to vector<128x32xbf16>
    %106 = vector.shape_cast %105 : vector<128x32xbf16> to vector<2x64x32xbf16>
    %107 = vector.extract_strided_slice %39 {offsets = [0, 352], sizes = [128, 32], strides = [1, 1]} : vector<128x384xbf16> to vector<128x32xbf16>
    %108 = vector.shape_cast %107 : vector<128x32xbf16> to vector<2x64x32xbf16>
    %cst_34 = arith.constant dense<0.000000e+00> : vector<2x64x64xf32>
    %109 = tpu.matmul %104, %106, %cst_34 {dimension_numbers = #tpu.dot_dimension_numbers<[2], [2], [1], [1], [0, 0, 0, 1, 1, 1], [0], [0]>} : vector<2x64x32xbf16>, vector<2x64x32xbf16>, vector<2x64x64xf32> -> vector<2x64x64xf32>
    %cst_35 = arith.constant dense<0xFF800000> : vector<2x64xf32>
    %110 = vector.multi_reduction <maximumf>, %109, %cst_35 [2] : vector<2x64x64xf32> to vector<2x64xf32>
    %111 = vector.shape_cast %110 : vector<2x64xf32> to vector<2x64x1xf32>
    %112 = vector.broadcast %111 : vector<2x64x1xf32> to vector<2x64x64xf32>
    %113 = arith.subf %109, %112 : vector<2x64x64xf32>
    %114 = math.exp %113 : vector<2x64x64xf32>
    %cst_36 = arith.constant dense<0.000000e+00> : vector<2x64xf32>
    %115 = vector.multi_reduction <add>, %114, %cst_36 [2] : vector<2x64x64xf32> to vector<2x64xf32>
    %116 = vector.shape_cast %115 : vector<2x64xf32> to vector<2x64x1xf32>
    %117 = tpu.reciprocal %116 {approx = true} : vector<2x64x1xf32> -> vector<2x64x1xf32>
    %118 = vector.broadcast %117 : vector<2x64x1xf32> to vector<2x64x64xf32>
    %119 = arith.mulf %114, %118 : vector<2x64x64xf32>
    %120 = arith.truncf %119 : vector<2x64x64xf32> to vector<2x64x64xbf16>
    %cst_37 = arith.constant dense<0.000000e+00> : vector<2x64x32xf32>
    %121 = tpu.matmul %120, %108, %cst_37 {dimension_numbers = #tpu.dot_dimension_numbers<[2], [1], [1], [2], [0, 0, 0, 1, 1, 2], [0], [0]>} : vector<2x64x64xbf16>, vector<2x64x32xbf16>, vector<2x64x32xf32> -> vector<2x64x32xf32>
    %122 = arith.truncf %121 : vector<2x64x32xf32> to vector<2x64x32xbf16>
    %c0_38 = arith.constant 0 : index
    %c0_39 = arith.constant 0 : index
    %c96 = arith.constant 96 : index
    %123 = vector.load %arg9[%c0_38, %c0_39, %c96] : memref<2x64x128xbf16, #tpu.memory_space<vmem>>, vector<2x64x32xbf16>
    tpu.vector_store %arg9[%c0_38, %c0_39, %c96], %122 {strides = array<i32>} : memref<2x64x128xbf16, #tpu.memory_space<vmem>>, vector<2x64x32xbf16>,
    %c0_40 = arith.constant 0 : index
    %c0_41 = arith.constant 0 : index
    %c0_42 = arith.constant 0 : index
    %124 = vector.load %arg9[%c0_40, %c0_41, %c0_42] : memref<2x64x128xbf16, #tpu.memory_space<vmem>>, vector<2x64x128xbf16>
    %125 = vector.shape_cast %124 : vector<2x64x128xbf16> to vector<128x128xbf16>
    %c0_43 = arith.constant 0 : index
    %c0_44 = arith.constant 0 : index
    %126 = vector.load %arg6[%c0_43, %c0_44] : memref<128x128xbf16, #tpu.memory_space<vmem>>, vector<128x128xbf16>
    %cst_45 = arith.constant dense<0.000000e+00> : vector<128x128xf32>
    %127 = tpu.matmul %125, %126, %cst_45 {dimension_numbers = #tpu.dot_dimension_numbers<[1], [0], [0], [1], [0, 0, 1, 1], [], []>} : vector<128x128xbf16>, vector<128x128xbf16>, vector<128x128xf32> -> vector<128x128xf32>
    %c0_46 = arith.constant 0 : index
    %c0_47 = arith.constant 0 : index
    %128 = vector.load %arg7[%c0_46, %c0_47] : memref<1x128xf32, #tpu.memory_space<vmem>>, vector<1x128xf32>
    %129 = vector.shape_cast %128 : vector<1x128xf32> to vector<128xf32>
    %130 = vector.shape_cast %129 : vector<128xf32> to vector<1x128xf32>
    %131 = vector.broadcast %130 : vector<1x128xf32> to vector<128x128xf32>
    %132 = arith.addf %127, %131 : vector<128x128xf32>
    %133 = vector.shape_cast %132 : vector<128x128xf32> to vector<2x64x128xf32>
    %cst_48 = arith.constant dense<0.000000e+00> : vector<2x128xf32>
    %134 = vector.multi_reduction <add>, %133, %cst_48 [1] : vector<2x64x128xf32> to vector<2x128xf32>
    %135 = vector.shape_cast %134 : vector<2x128xf32> to vector<2x1x128xf32>
    %cst_49 = arith.constant 1.562500e-02 : f32
    %136 = vector.broadcast %cst_49 : f32 to vector<2x1x128xf32>
    %137 = arith.mulf %135, %136 : vector<2x1x128xf32>
    %c0_50 = arith.constant 0 : index
    %c0_51 = arith.constant 0 : index
    %c0_52 = arith.constant 0 : index
    %138 = vector.load %arg8[%c0_50, %c0_51, %c0_52] : memref<2x1x128xf32, #tpu.memory_space<vmem>>, vector<2x1x128xf32>
    tpu.vector_store %arg8[%c0_50, %c0_51, %c0_52], %137 {strides = array<i32>} : memref<2x1x128xf32, #tpu.memory_space<vmem>>, vector<2x1x128xf32>,
    return
  }
  func.func @transform_0(%arg0: i32) -> (i32, i32, i32) {
    %c0_i32 = arith.constant 0 : i32
    %c0_i32_0 = arith.constant 0 : i32
    %c0_i32_1 = arith.constant 0 : i32
    return %arg0, %c0_i32, %c0_i32_0 : i32, i32, i32
  }
  func.func @transform_1(%arg0: i32) -> (i32, i32) {
    %c0_i32 = arith.constant 0 : i32
    %c0_i32_0 = arith.constant 0 : i32
    %c0_i32_1 = arith.constant 0 : i32
    return %c0_i32, %c0_i32_0 : i32, i32
  }
  func.func @transform_2(%arg0: i32) -> (i32, i32) {
    %c0_i32 = arith.constant 0 : i32
    %c0_i32_0 = arith.constant 0 : i32
    %c0_i32_1 = arith.constant 0 : i32
    return %c0_i32, %c0_i32_0 : i32, i32
  }
  func.func @transform_3(%arg0: i32) -> (i32, i32) {
    %c0_i32 = arith.constant 0 : i32
    %c0_i32_0 = arith.constant 0 : i32
    %c0_i32_1 = arith.constant 0 : i32
    return %c0_i32, %c0_i32_0 : i32, i32
  }
  func.func @transform_4(%arg0: i32) -> (i32, i32) {
    %c0_i32 = arith.constant 0 : i32
    %c0_i32_0 = arith.constant 0 : i32
    %c0_i32_1 = arith.constant 0 : i32
    return %c0_i32, %c0_i32_0 : i32, i32
  }
  func.func @transform_5(%arg0: i32) -> (i32, i32) {
    %c0_i32 = arith.constant 0 : i32
    %c0_i32_0 = arith.constant 0 : i32
    %c0_i32_1 = arith.constant 0 : i32
    return %c0_i32, %c0_i32_0 : i32, i32
  }
  func.func @transform_6(%arg0: i32) -> (i32, i32) {
    %c0_i32 = arith.constant 0 : i32
    %c0_i32_0 = arith.constant 0 : i32
    %c0_i32_1 = arith.constant 0 : i32
    return %c0_i32, %c0_i32_0 : i32, i32
  }
  func.func @transform_7(%arg0: i32) -> (i32, i32, i32) {
    %c0_i32 = arith.constant 0 : i32
    %c0_i32_0 = arith.constant 0 : i32
    %c0_i32_1 = arith.constant 0 : i32
    return %arg0, %c0_i32, %c0_i32_0 : i32, i32, i32
  }
}

</mosaic_0001>

<llo_original>
// kernel: tpu_custom_call.1
$region0: #{tpu_custom_call.1}
  #allocation0 [shape = 'u32[]', space=smem, size = 0x4, offset = 0x4, fixed_abs, tag = 'smem constant byte address 0x4 - core index']
  #allocation1 [shape = 'u32[144,128]{1,0:T(1,128)}', space=vmem, size = 0x12000, scoped, tag = 'internal scratch']
  #allocation2 [shape = 'bf16[2,64,128]{2,1,0:T(16,128)(2,1)}', space=vmem, size = 0x8000, scoped, tag = 'scratch operand']
  %s0 = inlined_call_operand.hbm [shape: bf16[8,64,128], index: 0, kind: input, shape index: {}]
  %s1 = inlined_call_operand.vmem [shape: f32[1,128], index: 1, kind: input, shape index: {}]
  %s2 = inlined_call_operand.vmem [shape: f32[1,128], index: 2, kind: input, shape index: {}]
  %s3 = inlined_call_operand.hbm [shape: bf16[128,384], index: 3, kind: input, shape index: {}]
  %s4 = inlined_call_operand.vmem [shape: f32[1,384], index: 4, kind: input, shape index: {}]
  %s5 = inlined_call_operand.hbm [shape: bf16[128,128], index: 5, kind: input, shape index: {}]
  %s6 = inlined_call_operand.vmem [shape: f32[1,128], index: 6, kind: input, shape index: {}]
  %s7 = inlined_call_operand.hbm [shape: f32[8,1,128], index: 7, kind: output, shape index: {}]
  %s8 = sld [smem:[#allocation0]]
  $region73: #{tpu_custom_call.1} parent=0
    _
  %s10 = ssub.s32 1, %s8
  %s11 = scalar_select 0, %s10, %s8
  $region1: #{tpu_custom_call.1} parent=0
    #allocation3 [shape = 'u8[65536]{0}', space=vmem, size = 0x10000, scoped, tag = 'input window, operand 0']
    #allocation4 [shape = 's32[2]{0}', space=sflag, size = 0x8, scoped, tag = 'scoped memory for tpu_custom_call.1']
    #allocation5 [shape = 's32[2]{0}', space=sflag, size = 0x8, scoped, tag = 'scoped memory for tpu_custom_call.1']
    #allocation6 [shape = 'u8[98304]{0}', space=vmem, size = 0x18000, scoped, tag = 'input window, operand 3, single buffered']
    #allocation7 [shape = 's32[1]{0}', space=sflag, size = 0x4, scoped, tag = 'scoped memory for tpu_custom_call.1']
    #allocation8 [shape = 'u8[32768]{0}', space=vmem, size = 0x8000, scoped, tag = 'input window, operand 5, single buffered']
    #allocation9 [shape = 'u8[2048]{0}', space=vmem, size = 0x800, scoped, tag = 'output window, operand 0']
    %12 = vsyncpa [#allocation4], 0
    %s13 = scalar_lea.sflag [#allocation4], 1
    %14 = vsyncpa %s13, 0
    %15 = vsyncpa [#allocation7], 0
    %16 = vsyncpa [#allocation5], 0
    %s17 = scalar_lea.sflag [#allocation5], 1
    %18 = vsyncpa %s17, 0
    loop: start=0, step=1, limit=6
    $region2: #{tpu_custom_call.1} parent=1 // loop_pre_header
      _
    $region3: #{tpu_custom_call.1} parent=1 // loop_header
      %s20 = sphi 0, %s24
      %p21 = scmp.ge.s32.totalorder %s20, 6
      %s30 = sphi 0, %s32
      %s33 = sphi 0, %s30
      %s34 = sphi 0, %s33
      %s50 = sphi 0, %s34
      %s54 = sphi 0, %s54
      %s56 = sphi 0, %s54
      %s57 = sphi 0, %s56
      %s71 = sphi 0, %s57
      %s75 = sphi 0, %s75
      %s77 = sphi 0, %s75
      %s78 = sphi 0, %s77
      %s92 = sphi 0, %s78
      %s96 = sphi 0, %s96
      %s98 = sphi 0, %s96
      %s99 = sphi 0, %s98
      %s113 = sphi 0, %s99
      %s117 = sphi 0, %s117
      %s119 = sphi 0, %s117
      %s120 = sphi 0, %s119
      %s134 = sphi 0, %s120
      %s138 = sphi 0, %s138
      %s140 = sphi 0, %s138
      %s141 = sphi 0, %s140
      %s155 = sphi 0, %s141
      %s159 = sphi 0, %s159
      %s161 = sphi 0, %s159
      %s162 = sphi 0, %s161
      %s176 = sphi 0, %s162
      %s182 = sphi 0, %s184
      %s185 = sphi 0, %s182
      %s186 = sphi 0, %s185
      %s202 = sphi 0, %s186
    $region4: #{tpu_custom_call.1} parent=1 // loop_header_branch
      %23 = sbr.rel (%p21) target = $region8
    $region5: #{tpu_custom_call.1} parent=1 // loop_body
      %s25 = ssub.s32 %s20, 1
      %s26 = ssub.s32 %s20, 2
      %s27 = sadd.s32 %s20, 1
      %s28 = ssub.s32 %s20, %s27
      %p29 = scmp.eq.s32.totalorder %s28, 0
      %s31 = sadd.s32 %s30, 1
      %s32 = scalar_select %p29, %s30, %s31
      %p35 = pneg %p29
      %p36 = scmp.eq.s32.totalorder %s20, 3
      %p37 = por %p35, %p36
      %p38 = scmp.ne.s32.totalorder %s30, %s33
      %p39 = scmp.eq.s32.totalorder %s20, 0
      %p40 = por %p38, %p39
      %p41 = scmp.ne.s32.totalorder %s30, %s33
      %p42 = scmp.eq.s32.totalorder %s25, 3
      %p43 = por %p41, %p42
      %p44 = scmp.ne.s32.totalorder %s33, %s34
      %p45 = scmp.eq.s32.totalorder %s25, 0
      %p46 = por %p44, %p45
      %p47 = scmp.ne.s32.totalorder %s33, %s34
      %p48 = scmp.eq.s32.totalorder %s26, 3
      %p49 = por %p47, %p48
      %p51 = scmp.ne.s32.totalorder %s34, %s50
      %p52 = scmp.eq.s32.totalorder %s26, 0
      %p53 = por %p51, %p52
      %s55 = sadd.s32 %s54, 1
      %p58 = scmp.eq.s32.totalorder %s20, 3
      %p59 = scmp.ne.s32.totalorder %s54, %s56
      %p60 = scmp.eq.s32.totalorder %s20, 0
      %p61 = por %p59, %p60
      %p62 = scmp.ne.s32.totalorder %s54, %s56
      %p63 = scmp.eq.s32.totalorder %s25, 3
      %p64 = por %p62, %p63
      %p65 = scmp.ne.s32.totalorder %s56, %s57
      %p66 = scmp.eq.s32.totalorder %s25, 0
      %p67 = por %p65, %p66
      %p68 = scmp.ne.s32.totalorder %s56, %s57
      %p69 = scmp.eq.s32.totalorder %s26, 3
      %p70 = por %p68, %p69
      %p72 = scmp.ne.s32.totalorder %s57, %s71
      %p73 = scmp.eq.s32.totalorder %s26, 0
      %p74 = por %p72, %p73
      %s76 = sadd.s32 %s75, 1
      %p79 = scmp.eq.s32.totalorder %s20, 3
      %p80 = scmp.ne.s32.totalorder %s75, %s77
      %p81 = scmp.eq.s32.totalorder %s20, 0
      %p82 = por %p80, %p81
      %p83 = scmp.ne.s32.totalorder %s75, %s77
      %p84 = scmp.eq.s32.totalorder %s25, 3
      %p85 = por %p83, %p84
      %p86 = scmp.ne.s32.totalorder %s77, %s78
      %p87 = scmp.eq.s32.totalorder %s25, 0
      %p88 = por %p86, %p87
      %p89 = scmp.ne.s32.totalorder %s77, %s78
      %p90 = scmp.eq.s32.totalorder %s26, 3
      %p91 = por %p89, %p90
      %p93 = scmp.ne.s32.totalorder %s78, %s92
      %p94 = scmp.eq.s32.totalorder %s26, 0
      %p95 = por %p93, %p94
      %s97 = sadd.s32 %s96, 1
      %p100 = scmp.eq.s32.totalorder %s20, 3
      %p101 = scmp.ne.s32.totalorder %s96, %s98
      %p102 = scmp.eq.s32.totalorder %s20, 0
      %p103 = por %p101, %p102
      %p104 = scmp.ne.s32.totalorder %s96, %s98
      %p105 = scmp.eq.s32.totalorder %s25, 3
      %p106 = por %p104, %p105
      %p107 = scmp.ne.s32.totalorder %s98, %s99
      %p108 = scmp.eq.s32.totalorder %s25, 0
      %p109 = por %p107, %p108
      %p110 = scmp.ne.s32.totalorder %s98, %s99
      %p111 = scmp.eq.s32.totalorder %s26, 3
      %p112 = por %p110, %p111
      %p114 = scmp.ne.s32.totalorder %s99, %s113
      %p115 = scmp.eq.s32.totalorder %s26, 0
      %p116 = por %p114, %p115
      %s118 = sadd.s32 %s117, 1
      %p121 = scmp.eq.s32.totalorder %s20, 3
      %p122 = scmp.ne.s32.totalorder %s117, %s119
      %p123 = scmp.eq.s32.totalorder %s20, 0
      %p124 = por %p122, %p123
      %p125 = scmp.ne.s32.totalorder %s117, %s119
      %p126 = scmp.eq.s32.totalorder %s25, 3
      %p127 = por %p125, %p126
      %p128 = scmp.ne.s32.totalorder %s119, %s120
      %p129 = scmp.eq.s32.totalorder %s25, 0
      %p130 = por %p128, %p129
      %p131 = scmp.ne.s32.totalorder %s119, %s120
      %p132 = scmp.eq.s32.totalorder %s26, 3
      %p133 = por %p131, %p132
      %p135 = scmp.ne.s32.totalorder %s120, %s134
      %p136 = scmp.eq.s32.totalorder %s26, 0
      %p137 = por %p135, %p136
      %s139 = sadd.s32 %s138, 1
      %p142 = scmp.eq.s32.totalorder %s20, 3
      %p143 = scmp.ne.s32.totalorder %s138, %s140
      %p144 = scmp.eq.s32.totalorder %s20, 0
      %p145 = por %p143, %p144
      %p146 = scmp.ne.s32.totalorder %s138, %s140
      %p147 = scmp.eq.s32.totalorder %s25, 3
      %p148 = por %p146, %p147
      %p149 = scmp.ne.s32.totalorder %s140, %s141
      %p150 = scmp.eq.s32.totalorder %s25, 0
      %p151 = por %p149, %p150
      %p152 = scmp.ne.s32.totalorder %s140, %s141
      %p153 = scmp.eq.s32.totalorder %s26, 3
      %p154 = por %p152, %p153
      %p156 = scmp.ne.s32.totalorder %s141, %s155
      %p157 = scmp.eq.s32.totalorder %s26, 0
      %p158 = por %p156, %p157
      %s160 = sadd.s32 %s159, 1
      %p163 = scmp.eq.s32.totalorder %s20, 3
      %p164 = scmp.ne.s32.totalorder %s159, %s161
      %p165 = scmp.eq.s32.totalorder %s20, 0
      %p166 = por %p164, %p165
      %p167 = scmp.ne.s32.totalorder %s159, %s161
      %p168 = scmp.eq.s32.totalorder %s25, 3
      %p169 = por %p167, %p168
      %p170 = scmp.ne.s32.totalorder %s161, %s162
      %p171 = scmp.eq.s32.totalorder %s25, 0
      %p172 = por %p170, %p171
      %p173 = scmp.ne.s32.totalorder %s161, %s162
      %p174 = scmp.eq.s32.totalorder %s26, 3
      %p175 = por %p173, %p174
      %p177 = scmp.ne.s32.totalorder %s162, %s176
      %p178 = scmp.eq.s32.totalorder %s26, 0
      %p179 = por %p177, %p178
      %s180 = ssub.s32 %s20, %s27
      %p181 = scmp.eq.s32.totalorder %s180, 0
      %s183 = sadd.s32 %s182, 1
      %s184 = scalar_select %p181, %s182, %s183
      %p187 = pneg %p181
      %p188 = scmp.eq.s32.totalorder %s20, 3
      %p189 = por %p187, %p188
      %p190 = scmp.ne.s32.totalorder %s182, %s185
      %p191 = scmp.eq.s32.totalorder %s20, 0
      %p192 = por %p190, %p191
      %p193 = scmp.ne.s32.totalorder %s182, %s185
      %p194 = scmp.eq.s32.totalorder %s25, 3
      %p195 = por %p193, %p194
      %p196 = scmp.ne.s32.totalorder %s185, %s186
      %p197 = scmp.eq.s32.totalorder %s25, 0
      %p198 = por %p196, %p197
      %p199 = scmp.ne.s32.totalorder %s185, %s186
      %p200 = scmp.eq.s32.totalorder %s26, 3
      %p201 = por %p199, %p200
      %p203 = scmp.ne.s32.totalorder %s186, %s202
      %p204 = scmp.eq.s32.totalorder %s26, 0
      %p205 = por %p203, %p204
      %p206 = scmp.le.s32.totalorder 1, %s20
      %p207 = scmp.lt.s32.totalorder %s20, 5
      %p208 = pnand %p206, %p207
      %p209 = pneg %p208
      // Predicated region
      $region9: #{tpu_custom_call.1} parent=5 // pred_check
        _
      $region10: #{tpu_custom_call.1} parent=5 // pred_check_branch
        %211 = sbr.rel (%p208) target = $region12
      $region11: #{tpu_custom_call.1} parent=5 // pred_region
        %s212 = ssub.s32 %s20, 1
        // Predicated region
        $region13: #{tpu_custom_call.1} parent=11 // pred_check
          %p213 = pneg %p67
        $region14: #{tpu_custom_call.1} parent=11 // pred_check_branch
          %215 = sbr.rel (%p213) target = $region16
        $region15: #{tpu_custom_call.1} parent=11 // pred_region
          _
        $region16: #{tpu_custom_call.1} parent=11 // pred_fallthru
          _
        // Predicated region
        $region17: #{tpu_custom_call.1} parent=11 // pred_check
          %p216 = pneg %p88
        $region18: #{tpu_custom_call.1} parent=11 // pred_check_branch
          %218 = sbr.rel (%p216) target = $region20
        $region19: #{tpu_custom_call.1} parent=11 // pred_region
          _
        $region20: #{tpu_custom_call.1} parent=11 // pred_fallthru
          _
        // Predicated region
        $region21: #{tpu_custom_call.1} parent=11 // pred_check
          %p219 = pneg %p109
        $region22: #{tpu_custom_call.1} parent=11 // pred_check_branch
          %221 = sbr.rel (%p219) target = $region24
        $region23: #{tpu_custom_call.1} parent=11 // pred_region
          %s223 = ssub.s32 3072, 3072
          %224 = vsyncadd [#allocation7], %s223
          %s225 = sshll.u32 [#allocation6], 4
          %s226 = int_to_ptr.vmem [resolvable:$true] %s225
          %231 = dma.hbm_to_vmem [thread:$0]  %s3, 3072, %s226, [#allocation7], 192, 192, 12
        $region24: #{tpu_custom_call.1} parent=11 // pred_fallthru
          _
        // Predicated region
        $region25: #{tpu_custom_call.1} parent=11 // pred_check
          %p232 = pneg %p130
        $region26: #{tpu_custom_call.1} parent=11 // pred_check_branch
          %234 = sbr.rel (%p232) target = $region28
        $region27: #{tpu_custom_call.1} parent=11 // pred_region
          _
        $region28: #{tpu_custom_call.1} parent=11 // pred_fallthru
          _
        // Predicated region
        $region29: #{tpu_custom_call.1} parent=11 // pred_check
          %p235 = pneg %p151
        $region30: #{tpu_custom_call.1} parent=11 // pred_check_branch
          %237 = sbr.rel (%p235) target = $region32
        $region31: #{tpu_custom_call.1} parent=11 // pred_region
          %s239 = ssub.s32 1024, 1024
          %240 = vsyncadd [#allocation7], %s239
          %s241 = sshll.u32 [#allocation8], 4
          %s242 = int_to_ptr.vmem [resolvable:$true] %s241
          %247 = dma.hbm_to_vmem [thread:$0]  %s5, 1024, %s242, [#allocation7], 64, 64, 4
        $region32: #{tpu_custom_call.1} parent=11 // pred_fallthru
          _
        // Predicated region
        $region33: #{tpu_custom_call.1} parent=11 // pred_check
          %p248 = pneg %p172
        $region34: #{tpu_custom_call.1} parent=11 // pred_check_branch
          %250 = sbr.rel (%p248) target = $region36
        $region35: #{tpu_custom_call.1} parent=11 // pred_region
          _
        $region36: #{tpu_custom_call.1} parent=11 // pred_fallthru
          _
      $region12: #{tpu_custom_call.1} parent=5 // pred_fallthru
        _
      %p251 = scmp.lt.s32.totalorder %s20, 4
      // Predicated region
      $region37: #{tpu_custom_call.1} parent=5 // pred_check
        %p252 = pneg %p251
      $region38: #{tpu_custom_call.1} parent=5 // pred_check_branch
        %254 = sbr.rel (%p252) target = $region40
      $region39: #{tpu_custom_call.1} parent=5 // pred_region
        // Predicated region
        $region41: #{tpu_custom_call.1} parent=39 // pred_check
          %p255 = pneg %p40
        $region42: #{tpu_custom_call.1} parent=39 // pred_check_branch
          %257 = sbr.rel (%p255) target = $region44
        $region43: #{tpu_custom_call.1} parent=39 // pred_region
          %s258 = sand.u32 %s30, 1
          %s259 = scalar_lea.sflag [#allocation4], %s258
          %s260 = sand.u32 %s30, 1
          %s261 = smul.addr %s260, 64
          %s262 = scalar_lea.vmem [#allocation3], %s261
          %s263 = smul.u32 2, %s20
          %s265 = ssub.s32 1024, 1024
          %266 = vsyncadd %s259, %s265
          %s267 = smul.addr %s263, 8
          %s268 = smul.addr %s267, 64
          %s269 = scalar_lea.hbm %s0, %s268
          %s270 = sshll.u32 %s262, 4
          %s271 = int_to_ptr.vmem [resolvable:$true] %s270
          %276 = dma.hbm_to_vmem [thread:$0]  %s269, 1024, %s271, %s259, 64, 64, 4
        $region44: #{tpu_custom_call.1} parent=39 // pred_fallthru
          _
      $region40: #{tpu_custom_call.1} parent=5 // pred_fallthru
        _
      %p277 = scmp.le.s32.totalorder 1, %s20
      %p278 = scmp.lt.s32.totalorder %s20, 5
      %p279 = pnand %p277, %p278
      %p280 = pneg %p279
      // Predicated region
      $region45: #{tpu_custom_call.1} parent=5 // pred_check
        _
      $region46: #{tpu_custom_call.1} parent=5 // pred_check_branch
        %282 = sbr.rel (%p279) target = $region48
      $region47: #{tpu_custom_call.1} parent=5 // pred_region
        %s283 = ssub.s32 %s20, 1
        %s284 = sand.u32 %s33, 1
        %s285 = scalar_lea.sflag [#allocation4], %s284
        %s286 = sand.u32 %s33, 1
        %s287 = smul.addr %s286, 64
        %s288 = scalar_lea.vmem [#allocation3], %s287
        // Predicated region
        $region49: #{tpu_custom_call.1} parent=47 // pred_check
          %p289 = pneg %p46
        $region50: #{tpu_custom_call.1} parent=47 // pred_check_branch
          %291 = sbr.rel (%p289) target = $region52
        $region51: #{tpu_custom_call.1} parent=47 // pred_region
          %292 = dma.done %s285, 1024
        $region52: #{tpu_custom_call.1} parent=47 // pred_fallthru
          _
        // Predicated region
        $region53: #{tpu_custom_call.1} parent=47 // pred_check
          %p293 = pneg %p109
        $region54: #{tpu_custom_call.1} parent=47 // pred_check_branch
          %295 = sbr.rel (%p293) target = $region56
        $region55: #{tpu_custom_call.1} parent=47 // pred_region
          %296 = dma.done [#allocation7], 3072
        $region56: #{tpu_custom_call.1} parent=47 // pred_fallthru
          _
        // Predicated region
        $region57: #{tpu_custom_call.1} parent=47 // pred_check
          %p297 = pneg %p151
        $region58: #{tpu_custom_call.1} parent=47 // pred_check_branch
          %299 = sbr.rel (%p297) target = $region60
        $region59: #{tpu_custom_call.1} parent=47 // pred_region
          %300 = dma.done [#allocation7], 1024
        $region60: #{tpu_custom_call.1} parent=47 // pred_fallthru
          _
        %s301 = sand.u32 %s33, 1
        %s302 = scalar_lea.sflag [#allocation4], %s301
        %s303 = sand.u32 %s33, 1
        %s304 = smul.addr %s303, 64
        %s305 = scalar_lea.vmem [#allocation3], %s304
        %p306 = pneg %p46
        %p307 = pneg %p43
        %p308 = pneg %p67
        %p309 = pneg %p64
        %p310 = pneg %p88
        %p311 = pneg %p85
        %p312 = pneg %p109
        %p313 = pneg %p106
        %p314 = pneg %p130
        %p315 = pneg %p127
        %p316 = pneg %p151
        %p317 = pneg %p148
        %p318 = pneg %p172
        %p319 = pneg %p169
        %p320 = pneg %p198
        %p321 = pneg %p195
        %s322 = sand.u32 %s185, 1
        %s323 = scalar_lea.sflag [#allocation5], %s322
        %s324 = sand.u32 %s185, 1
        %s325 = smul.addr %s324, 2
        %s326 = scalar_lea.vmem [#allocation9], %s325
        %s327 = smul.u32 2, %s25
        %s328 = smul.u32 2, %s25
        %v330 = vld [vmem:[%s288] sm:$0xf]
        %v331 = vld [vmem:[%s288 + $0x4] sm:$0xf]
        %v332 = vld [vmem:[%s288 + $0x8] sm:$0xf]
        %v333 = vld [vmem:[%s288 + $0xc] sm:$0xf]
        %v334 = vld [vmem:[%s288 + $0x10] sm:$0xf]
        %v335 = vld [vmem:[%s288 + $0x14] sm:$0xf]
        %v336 = vld [vmem:[%s288 + $0x18] sm:$0xf]
        %v337 = vld [vmem:[%s288 + $0x1c] sm:$0xf]
        %v338 = vld [vmem:[%s288 + $0x20] sm:$0xf]
        %v339 = vld [vmem:[%s288 + $0x24] sm:$0xf]
        %v340 = vld [vmem:[%s288 + $0x28] sm:$0xf]
        %v341 = vld [vmem:[%s288 + $0x2c] sm:$0xf]
        %v342 = vld [vmem:[%s288 + $0x30] sm:$0xf]
        %v343 = vld [vmem:[%s288 + $0x34] sm:$0xf]
        %v344 = vld [vmem:[%s288 + $0x38] sm:$0xf]
        %v345 = vld [vmem:[%s288 + $0x3c] sm:$0xf]
        %v346 = vunpack.c.l.bf16 %v330
        %v347 = vunpack.c.l.bf16 %v331
        %v348 = vunpack.c.l.bf16 %v332
        %v349 = vunpack.c.l.bf16 %v333
        %v350 = vunpack.c.l.bf16 %v334
        %v351 = vunpack.c.l.bf16 %v335
        %v352 = vunpack.c.l.bf16 %v336
        %v353 = vunpack.c.l.bf16 %v337
        %v354 = vunpack.c.l.bf16 %v338
        %v355 = vunpack.c.l.bf16 %v339
        %v356 = vunpack.c.l.bf16 %v340
        %v357 = vunpack.c.l.bf16 %v341
        %v358 = vunpack.c.l.bf16 %v342
        %v359 = vunpack.c.l.bf16 %v343
        %v360 = vunpack.c.l.bf16 %v344
        %v361 = vunpack.c.l.bf16 %v345
        %362 = vadd.xlane.f32.xlu0 %v346
        %v363 = vpop.xlane.xlu0 %362
        %364 = vadd.xlane.f32.xlu0 %v347
        %v365 = vpop.xlane.xlu0 %364
        %366 = vadd.xlane.f32.xlu0 %v348
        %v367 = vpop.xlane.xlu0 %366
        %368 = vadd.xlane.f32.xlu0 %v349
        %v369 = vpop.xlane.xlu0 %368
        %370 = vadd.xlane.f32.xlu0 %v350
        %v371 = vpop.xlane.xlu0 %370
        %372 = vadd.xlane.f32.xlu0 %v351
        %v373 = vpop.xlane.xlu0 %372
        %374 = vadd.xlane.f32.xlu0 %v352
        %v375 = vpop.xlane.xlu0 %374
        %376 = vadd.xlane.f32.xlu0 %v353
        %v377 = vpop.xlane.xlu0 %376
        %378 = vadd.xlane.f32.xlu0 %v354
        %v379 = vpop.xlane.xlu0 %378
        %380 = vadd.xlane.f32.xlu0 %v355
        %v381 = vpop.xlane.xlu0 %380
        %382 = vadd.xlane.f32.xlu0 %v356
        %v383 = vpop.xlane.xlu0 %382
        %384 = vadd.xlane.f32.xlu0 %v357
        %v385 = vpop.xlane.xlu0 %384
        %386 = vadd.xlane.f32.xlu0 %v358
        %v387 = vpop.xlane.xlu0 %386
        %388 = vadd.xlane.f32.xlu0 %v359
        %v389 = vpop.xlane.xlu0 %388
        %390 = vadd.xlane.f32.xlu0 %v360
        %v391 = vpop.xlane.xlu0 %390
        %392 = vadd.xlane.f32.xlu0 %v361
        %v393 = vpop.xlane.xlu0 %392
        %v394 = vrcp.pop 128.0
        %v395 = vmul.f32 %v363, %v394
        %v396 = vmul.f32 %v365, %v394
        %v397 = vmul.f32 %v367, %v394
        %v398 = vmul.f32 %v369, %v394
        %v399 = vmul.f32 %v371, %v394
        %v400 = vmul.f32 %v373, %v394
        %v401 = vmul.f32 %v375, %v394
        %v402 = vmul.f32 %v377, %v394
        %v403 = vmul.f32 %v379, %v394
        %v404 = vmul.f32 %v381, %v394
        %v405 = vmul.f32 %v383, %v394
        %v406 = vmul.f32 %v385, %v394
        %v407 = vmul.f32 %v387, %v394
        %v408 = vmul.f32 %v389, %v394
        %v409 = vmul.f32 %v391, %v394
        %v410 = vmul.f32 %v393, %v394
        %v411 = vsub.f32 %v346, %v395
        %v412 = vsub.f32 %v347, %v396
        %v413 = vsub.f32 %v348, %v397
        %v414 = vsub.f32 %v349, %v398
        %v415 = vsub.f32 %v350, %v399
        %v416 = vsub.f32 %v351, %v400
        %v417 = vsub.f32 %v352, %v401
        %v418 = vsub.f32 %v353, %v402
        %v419 = vsub.f32 %v354, %v403
        %v420 = vsub.f32 %v355, %v404
        %v421 = vsub.f32 %v356, %v405
        %v422 = vsub.f32 %v357, %v406
        %v423 = vsub.f32 %v358, %v407
        %v424 = vsub.f32 %v359, %v408
        %v425 = vsub.f32 %v360, %v409
        %v426 = vsub.f32 %v361, %v410
        %v427 = vmul.f32 %v411, %v411
        %v428 = vmul.f32 %v412, %v412
        %v429 = vmul.f32 %v413, %v413
        %v430 = vmul.f32 %v414, %v414
        %v431 = vmul.f32 %v415, %v415
        %v432 = vmul.f32 %v416, %v416
        %v433 = vmul.f32 %v417, %v417
        %v434 = vmul.f32 %v418, %v418
        %v435 = vmul.f32 %v419, %v419
        %v436 = vmul.f32 %v420, %v420
        %v437 = vmul.f32 %v421, %v421
        %v438 = vmul.f32 %v422, %v422
        %v439 = vmul.f32 %v423, %v423
        %v440 = vmul.f32 %v424, %v424
        %v441 = vmul.f32 %v425, %v425
        %v442 = vmul.f32 %v426, %v426
        %443 = vadd.xlane.f32.xlu0 %v427
        %v444 = vpop.xlane.xlu0 %443
        %445 = vadd.xlane.f32.xlu0 %v428
        %v446 = vpop.xlane.xlu0 %445
        %447 = vadd.xlane.f32.xlu0 %v429
        %v448 = vpop.xlane.xlu0 %447
        %449 = vadd.xlane.f32.xlu0 %v430
        %v450 = vpop.xlane.xlu0 %449
        %451 = vadd.xlane.f32.xlu0 %v431
        %v452 = vpop.xlane.xlu0 %451
        %453 = vadd.xlane.f32.xlu0 %v432
        %v454 = vpop.xlane.xlu0 %453
        %455 = vadd.xlane.f32.xlu0 %v433
        %v456 = vpop.xlane.xlu0 %455
        %457 = vadd.xlane.f32.xlu0 %v434
        %v458 = vpop.xlane.xlu0 %457
        %459 = vadd.xlane.f32.xlu0 %v435
        %v460 = vpop.xlane.xlu0 %459
        %461 = vadd.xlane.f32.xlu0 %v436
        %v462 = vpop.xlane.xlu0 %461
        %463 = vadd.xlane.f32.xlu0 %v437
        %v464 = vpop.xlane.xlu0 %463
        %465 = vadd.xlane.f32.xlu0 %v438
        %v466 = vpop.xlane.xlu0 %465
        %467 = vadd.xlane.f32.xlu0 %v439
        %v468 = vpop.xlane.xlu0 %467
        %469 = vadd.xlane.f32.xlu0 %v440
        %v470 = vpop.xlane.xlu0 %469
        %471 = vadd.xlane.f32.xlu0 %v441
        %v472 = vpop.xlane.xlu0 %471
        %473 = vadd.xlane.f32.xlu0 %v442
        %v474 = vpop.xlane.xlu0 %473
        %v475 = vmul.f32 %v444, %v394
        %v476 = vmul.f32 %v446, %v394
        %v477 = vmul.f32 %v448, %v394
        %v478 = vmul.f32 %v450, %v394
        %v479 = vmul.f32 %v452, %v394
        %v480 = vmul.f32 %v454, %v394
        %v481 = vmul.f32 %v456, %v394
        %v482 = vmul.f32 %v458, %v394
        %v483 = vmul.f32 %v460, %v394
        %v484 = vmul.f32 %v462, %v394
        %v485 = vmul.f32 %v464, %v394
        %v486 = vmul.f32 %v466, %v394
        %v487 = vmul.f32 %v468, %v394
        %v488 = vmul.f32 %v470, %v394
        %v489 = vmul.f32 %v472, %v394
        %v490 = vmul.f32 %v474, %v394
        %v491 = vadd.f32 %v475, 1e-05
        %v492 = vadd.f32 %v476, 1e-05
        %v493 = vadd.f32 %v477, 1e-05
        %v494 = vadd.f32 %v478, 1e-05
        %v495 = vadd.f32 %v479, 1e-05
        %v496 = vadd.f32 %v480, 1e-05
        %v497 = vadd.f32 %v481, 1e-05
        %v498 = vadd.f32 %v482, 1e-05
        %v499 = vadd.f32 %v483, 1e-05
        %v500 = vadd.f32 %v484, 1e-05
        %v501 = vadd.f32 %v485, 1e-05
        %v502 = vadd.f32 %v486, 1e-05
        %v503 = vadd.f32 %v487, 1e-05
        %v504 = vadd.f32 %v488, 1e-05
        %v505 = vadd.f32 %v489, 1e-05
        %v506 = vadd.f32 %v490, 1e-05
        %v507 = vrsqrt.pop %v491
        %v508 = vrsqrt.pop %v492
        %v509 = vrsqrt.pop %v493
        %v510 = vrsqrt.pop %v494
        %v511 = vrsqrt.pop %v495
        %v512 = vrsqrt.pop %v496
        %v513 = vrsqrt.pop %v497
        %v514 = vrsqrt.pop %v498
        %v515 = vrsqrt.pop %v499
        %v516 = vrsqrt.pop %v500
        %v517 = vrsqrt.pop %v501
        %v518 = vrsqrt.pop %v502
        %v519 = vrsqrt.pop %v503
        %v520 = vrsqrt.pop %v504
        %v521 = vrsqrt.pop %v505
        %v522 = vrsqrt.pop %v506
        %v523 = vmul.f32 %v411, %v507
        %v524 = vmul.f32 %v412, %v508
        %v525 = vmul.f32 %v413, %v509
        %v526 = vmul.f32 %v414, %v510
        %v527 = vmul.f32 %v415, %v511
        %v528 = vmul.f32 %v416, %v512
        %v529 = vmul.f32 %v417, %v513
        %v530 = vmul.f32 %v418, %v514
        %v531 = vmul.f32 %v419, %v515
        %v532 = vmul.f32 %v420, %v516
        %v533 = vmul.f32 %v421, %v517
        %v534 = vmul.f32 %v422, %v518
        %v535 = vmul.f32 %v423, %v519
        %v536 = vmul.f32 %v424, %v520
        %v537 = vmul.f32 %v425, %v521
        %v538 = vmul.f32 %v426, %v522
        %v539 = vld [vmem:[%s1] sm:$0x1]
        %v541 = vlaneseq
        %v542 = vshrl.u32 %v541, 7
        %v543 = vsub.s32 0, %v542
        %v544 = vrot.slane %v539, %v543
        %v546 = vmul.f32 %v523, %v544
        %v547 = vmul.f32 %v524, %v544
        %v548 = vmul.f32 %v525, %v544
        %v549 = vmul.f32 %v526, %v544
        %v550 = vmul.f32 %v527, %v544
        %v551 = vmul.f32 %v528, %v544
        %v552 = vmul.f32 %v529, %v544
        %v553 = vmul.f32 %v530, %v544
        %v554 = vmul.f32 %v531, %v544
        %v555 = vmul.f32 %v532, %v544
        %v556 = vmul.f32 %v533, %v544
        %v557 = vmul.f32 %v534, %v544
        %v558 = vmul.f32 %v535, %v544
        %v559 = vmul.f32 %v536, %v544
        %v560 = vmul.f32 %v537, %v544
        %v561 = vmul.f32 %v538, %v544
        %v562 = vld [vmem:[%s2] sm:$0x1]
        %v564 = vlaneseq
        %v565 = vshrl.u32 %v564, 7
        %v566 = vsub.s32 0, %v565
        %v567 = vrot.slane %v562, %v566
        %v569 = vadd.f32 %v546, %v567
        %v570 = vadd.f32 %v547, %v567
        %v571 = vadd.f32 %v548, %v567
        %v572 = vadd.f32 %v549, %v567
        %v573 = vadd.f32 %v550, %v567
        %v574 = vadd.f32 %v551, %v567
        %v575 = vadd.f32 %v552, %v567
        %v576 = vadd.f32 %v553, %v567
        %v577 = vadd.f32 %v554, %v567
        %v578 = vadd.f32 %v555, %v567
        %v579 = vadd.f32 %v556, %v567
        %v580 = vadd.f32 %v557, %v567
        %v581 = vadd.f32 %v558, %v567
        %v582 = vadd.f32 %v559, %v567
        %v583 = vadd.f32 %v560, %v567
        %v584 = vadd.f32 %v561, %v567
        %v585 = vpack.c.bf16 %v570, %v569
        %v586 = vpack.c.bf16 %v572, %v571
        %v587 = vpack.c.bf16 %v574, %v573
        %v588 = vpack.c.bf16 %v576, %v575
        %v589 = vpack.c.bf16 %v578, %v577
        %v590 = vpack.c.bf16 %v580, %v579
        %v591 = vpack.c.bf16 %v582, %v581
        %v592 = vpack.c.bf16 %v584, %v583
        %v593 = vld [vmem:[#allocation6] sm:$0xff]
        %v594 = vld [vmem:[#allocation6 + $0x8] sm:$0xf]
        %v595 = vld [vmem:[#allocation6 + $0xc] sm:$0xff]
        %v596 = vld [vmem:[#allocation6 + $0x14] sm:$0xf]
        %v597 = vld [vmem:[#allocation6 + $0x18] sm:$0xff]
        %v598 = vld [vmem:[#allocation6 + $0x20] sm:$0xf]
        %v599 = vld [vmem:[#allocation6 + $0x24] sm:$0xff]
        %v600 = vld [vmem:[#allocation6 + $0x2c] sm:$0xf]
        %v601 = vld [vmem:[#allocation6 + $0x30] sm:$0xff]
        %v602 = vld [vmem:[#allocation6 + $0x38] sm:$0xf]
        %v603 = vld [vmem:[#allocation6 + $0x3c] sm:$0xff]
        %v604 = vld [vmem:[#allocation6 + $0x44] sm:$0xf]
        %v605 = vld [vmem:[#allocation6 + $0x48] sm:$0xff]
        %v606 = vld [vmem:[#allocation6 + $0x50] sm:$0xf]
        %v607 = vld [vmem:[#allocation6 + $0x54] sm:$0xff]
        %v608 = vld [vmem:[#allocation6 + $0x5c] sm:$0xf]
        %v609 = vld [vmem:[#allocation6 + $0x60] sm:$0xff]
        %v610 = vld [vmem:[#allocation6 + $0x68] sm:$0xf]
        %v611 = vld [vmem:[#allocation6 + $0x6c] sm:$0xff]
        %v612 = vld [vmem:[#allocation6 + $0x74] sm:$0xf]
        %v613 = vld [vmem:[#allocation6 + $0x78] sm:$0xff]
        %v614 = vld [vmem:[#allocation6 + $0x80] sm:$0xf]
        %v615 = vld [vmem:[#allocation6 + $0x84] sm:$0xff]
        %v616 = vld [vmem:[#allocation6 + $0x8c] sm:$0xf]
        %v617 = vld [vmem:[#allocation6 + $0x90] sm:$0xff]
        %v618 = vld [vmem:[#allocation6 + $0x98] sm:$0xf]
        %v619 = vld [vmem:[#allocation6 + $0x9c] sm:$0xff]
        %v620 = vld [vmem:[#allocation6 + $0xa4] sm:$0xf]
        %v621 = vld [vmem:[#allocation6 + $0xa8] sm:$0xff]
        %v622 = vld [vmem:[#allocation6 + $0xb0] sm:$0xf]
        %v623 = vld [vmem:[#allocation6 + $0xb4] sm:$0xff]
        %v624 = vld [vmem:[#allocation6 + $0xbc] sm:$0xf]
        %v625 = vld [vmem:[%s4] sm:$0x7]
        %v627 = vlaneseq
        %v628 = vshrl.u32 %v627, 7
        %v629 = vsub.s32 0, %v628
        %v630 = vrot.slane %v625, %v629
        %v631 = vlaneseq
        %v632 = vshrl.u32 %v631, 7
        %v633 = vsub.s32 1, %v632
        %v634 = vrot.slane %v625, %v633
        %v635 = vlaneseq
        %v636 = vshrl.u32 %v635, 7
        %v637 = vsub.s32 2, %v636
        %v638 = vrot.slane %v625, %v637
        %v674 = vunpack.c.l.b16 %v593
        %v675 = vunpack.c.h.b16 %v593
        %v676 = vunpack.c.l.b16 %v594
        %v677 = vunpack.c.l.b16 %v595
        %v678 = vunpack.c.h.b16 %v595
        %v679 = vunpack.c.l.b16 %v596
        %v680 = vunpack.c.l.b16 %v597
        %v681 = vunpack.c.h.b16 %v597
        %v682 = vunpack.c.l.b16 %v598
        %v683 = vunpack.c.l.b16 %v599
        %v684 = vunpack.c.h.b16 %v599
        %v685 = vunpack.c.l.b16 %v600
        %v686 = vunpack.c.l.b16 %v601
        %v687 = vunpack.c.h.b16 %v601
        %v688 = vunpack.c.l.b16 %v602
        %v689 = vunpack.c.l.b16 %v603
        %v690 = vunpack.c.h.b16 %v603
        %v691 = vunpack.c.l.b16 %v604
        %v692 = vunpack.c.l.b16 %v605
        %v693 = vunpack.c.h.b16 %v605
        %v694 = vunpack.c.l.b16 %v606
        %v695 = vunpack.c.l.b16 %v607
        %v696 = vunpack.c.h.b16 %v607
        %v697 = vunpack.c.l.b16 %v608
        %v698 = vunpack.c.l.b16 %v609
        %v699 = vunpack.c.h.b16 %v609
        %v700 = vunpack.c.l.b16 %v610
        %v701 = vunpack.c.l.b16 %v611
        %v702 = vunpack.c.h.b16 %v611
        %v703 = vunpack.c.l.b16 %v612
        %v704 = vunpack.c.l.b16 %v613
        %v705 = vunpack.c.h.b16 %v613
        %v706 = vunpack.c.l.b16 %v614
        %v707 = vunpack.c.l.b16 %v615
        %v708 = vunpack.c.h.b16 %v615
        %v709 = vunpack.c.l.b16 %v616
        %v710 = vunpack.c.l.b16 %v617
        %v711 = vunpack.c.h.b16 %v617
        %v712 = vunpack.c.l.b16 %v618
        %v713 = vunpack.c.l.b16 %v619
        %v714 = vunpack.c.h.b16 %v619
        %v715 = vunpack.c.l.b16 %v620
        %v716 = vunpack.c.l.b16 %v621
        %v717 = vunpack.c.h.b16 %v621
        %v718 = vunpack.c.l.b16 %v622
        %v719 = vunpack.c.l.b16 %v623
        %v720 = vunpack.c.h.b16 %v623
        %v721 = vunpack.c.l.b16 %v624
        %v722 = vpack.c.b16 %v677, %v674
        %v723 = vpack.c.b16 %v678, %v675
        %v724 = vpack.c.b16 %v679, %v676
        %v725 = vpack.c.b16 %v683, %v680
        %v726 = vpack.c.b16 %v684, %v681
        %v727 = vpack.c.b16 %v685, %v682
        %v728 = vpack.c.b16 %v689, %v686
        %v729 = vpack.c.b16 %v690, %v687
        %v730 = vpack.c.b16 %v691, %v688
        %v731 = vpack.c.b16 %v695, %v692
        %v732 = vpack.c.b16 %v696, %v693
        %v733 = vpack.c.b16 %v697, %v694
        %v734 = vpack.c.b16 %v701, %v698
        %v735 = vpack.c.b16 %v702, %v699
        %v736 = vpack.c.b16 %v703, %v700
        %v737 = vpack.c.b16 %v707, %v704
        %v738 = vpack.c.b16 %v708, %v705
        %v739 = vpack.c.b16 %v709, %v706
        %v740 = vpack.c.b16 %v713, %v710
        %v741 = vpack.c.b16 %v714, %v711
        %v742 = vpack.c.b16 %v715, %v712
        %v743 = vpack.c.b16 %v719, %v716
        %v744 = vpack.c.b16 %v720, %v717
        %v745 = vpack.c.b16 %v721, %v718
        %770 = vmatprep.subr.bf16.mxu0 %v723
        %771 = vmatpush1.bf16.msra.mxu0 %v722
        %772 = vmatprep.subr.bf16.mxu0 %v726
        %773 = vmatpush1.bf16.msra.mxu0 %v725
        %774 = vmatprep.subr.bf16.mxu0 %v729
        %775 = vmatpush1.bf16.msra.mxu0 %v728
        %776 = vmatprep.subr.bf16.mxu0 %v732
        %777 = vmatpush1.bf16.msra.mxu0 %v731
        %778 = vmatprep.subr.bf16.mxu0 %v735
        %779 = vmatpush1.bf16.msra.mxu0 %v734
        %780 = vmatprep.subr.bf16.mxu0 %v738
        %781 = vmatpush1.bf16.msra.mxu0 %v737
        %782 = vmatprep.subr.bf16.mxu0 %v741
        %783 = vmatpush1.bf16.msra.mxu0 %v740
        %784 = vmatprep.subr.bf16.mxu0 %v744
        %785 = vmatpush1.bf16.msra.mxu0 %v743
        %786 = vmatprep.subr.bf16.mxu0 0
        %787 = vmatpush1.bf16.msra.mxu0 0
        %788 = vmatprep.subr.bf16.mxu0 0
        %789 = vmatpush1.bf16.msra.mxu0 0
        %790 = vmatprep.subr.bf16.mxu0 0
        %791 = vmatpush1.bf16.msra.mxu0 0
        %792 = vmatprep.subr.bf16.mxu0 0
        %793 = vmatpush1.bf16.msra.mxu0 0
        %794 = vmatprep.subr.bf16.mxu0 0
        %795 = vmatpush1.bf16.msra.mxu0 0
        %796 = vmatprep.subr.bf16.mxu0 0
        %797 = vmatpush1.bf16.msra.mxu0 0
        %798 = vmatprep.subr.bf16.mxu0 0
        %799 = vmatpush1.bf16.msra.mxu0 0
        %800 = vmatprep.subr.bf16.mxu0 0
        %801 = vmatpush1.bf16.msra.mxu0 0
        %802 = vmatprep.mubr.bf16.mxu0 0
        %803 = vmatmul.mubr.bf16.gmra.mrb[0].mxu0 %v585
        %v804 = vpop.f32.mrb[0].mxu0
        %v805 = vadd.f32 %v630, %v804
        %v806 = vpop.f32.mrb[0].mxu0
        %v807 = vadd.f32 %v634, %v806
        %v808 = vpop.f32.mrb[0].mxu0
        %v809 = vadd.f32 %v630, %v808
        %v810 = vpop.f32.mrb[0].mxu0
        %v811 = vadd.f32 %v634, %v810
        %812 = vmatprep.mubr.bf16.mxu0 0
        %813 = vmatmul.mubr.bf16.gmra.mrb[0].mxu0 %v586
        %v814 = vpop.f32.mrb[0].mxu0
        %v815 = vadd.f32 %v630, %v814
        %v816 = vpop.f32.mrb[0].mxu0
        %v817 = vadd.f32 %v634, %v816
        %v818 = vpop.f32.mrb[0].mxu0
        %v819 = vadd.f32 %v630, %v818
        %v820 = vpop.f32.mrb[0].mxu0
        %v821 = vadd.f32 %v634, %v820
        %822 = vmatprep.mubr.bf16.mxu0 0
        %823 = vmatmul.mubr.bf16.gmra.mrb[0].mxu0 %v587
        %v824 = vpop.f32.mrb[0].mxu0
        %v825 = vadd.f32 %v630, %v824
        %v826 = vpop.f32.mrb[0].mxu0
        %v827 = vadd.f32 %v634, %v826
        %v828 = vpop.f32.mrb[0].mxu0
        %v829 = vadd.f32 %v630, %v828
        %v830 = vpop.f32.mrb[0].mxu0
        %v831 = vadd.f32 %v634, %v830
        %832 = vmatprep.mubr.bf16.mxu0 0
        %833 = vmatmul.mubr.bf16.gmra.mrb[0].mxu0 %v588
        %v834 = vpop.f32.mrb[0].mxu0
        %v835 = vadd.f32 %v630, %v834
        %v836 = vpop.f32.mrb[0].mxu0
        %v837 = vadd.f32 %v634, %v836
        %v838 = vpop.f32.mrb[0].mxu0
        %v839 = vadd.f32 %v630, %v838
        %v840 = vpop.f32.mrb[0].mxu0
        %v841 = vadd.f32 %v634, %v840
        %842 = vmatprep.mubr.bf16.mxu0 0
        %843 = vmatmul.mubr.bf16.gmra.mrb[0].mxu0 %v589
        %v844 = vpop.f32.mrb[0].mxu0
        %v845 = vadd.f32 %v630, %v844
        %v846 = vpop.f32.mrb[0].mxu0
        %v847 = vadd.f32 %v634, %v846
        %v848 = vpop.f32.mrb[0].mxu0
        %v849 = vadd.f32 %v630, %v848
        %v850 = vpop.f32.mrb[0].mxu0
        %v851 = vadd.f32 %v634, %v850
        %852 = vmatprep.mubr.bf16.mxu0 0
        %853 = vmatmul.mubr.bf16.gmra.mrb[0].mxu0 %v590
        %v854 = vpop.f32.mrb[0].mxu0
        %v855 = vadd.f32 %v630, %v854
        %v856 = vpop.f32.mrb[0].mxu0
        %v857 = vadd.f32 %v634, %v856
        %v858 = vpop.f32.mrb[0].mxu0
        %v859 = vadd.f32 %v630, %v858
        %v860 = vpop.f32.mrb[0].mxu0
        %v861 = vadd.f32 %v634, %v860
        %862 = vmatprep.mubr.bf16.mxu0 0
        %863 = vmatmul.mubr.bf16.gmra.mrb[0].mxu0 %v591
        %v864 = vpop.f32.mrb[0].mxu0
        %v865 = vadd.f32 %v630, %v864
        %v866 = vpop.f32.mrb[0].mxu0
        %v867 = vadd.f32 %v634, %v866
        %v868 = vpop.f32.mrb[0].mxu0
        %v869 = vadd.f32 %v630, %v868
        %v870 = vpop.f32.mrb[0].mxu0
        %v871 = vadd.f32 %v634, %v870
        %872 = vmatprep.mubr.bf16.mxu0 0
        %873 = vmatmul.mubr.bf16.gmra.mrb[0].mxu0 %v592
        %v874 = vpop.f32.mrb[0].mxu0
        %v875 = vadd.f32 %v630, %v874
        %v876 = vpop.f32.mrb[0].mxu0
        %v877 = vadd.f32 %v634, %v876
        %v878 = vpop.f32.mrb[0].mxu0
        %v879 = vadd.f32 %v630, %v878
        %v880 = vpop.f32.mrb[0].mxu0
        %v881 = vadd.f32 %v634, %v880
        %882 = vdwg.mxu0
        %883 = vmatprep.subr.bf16.mxu0 0
        %884 = vmatpush1.bf16.msra.mxu0 %v724
        %885 = vmatprep.subr.bf16.mxu0 0
        %886 = vmatpush1.bf16.msra.mxu0 %v727
        %887 = vmatprep.subr.bf16.mxu0 0
        %888 = vmatpush1.bf16.msra.mxu0 %v730
        %889 = vmatprep.subr.bf16.mxu0 0
        %890 = vmatpush1.bf16.msra.mxu0 %v733
        %891 = vmatprep.subr.bf16.mxu0 0
        %892 = vmatpush1.bf16.msra.mxu0 %v736
        %893 = vmatprep.subr.bf16.mxu0 0
        %894 = vmatpush1.bf16.msra.mxu0 %v739
        %895 = vmatprep.subr.bf16.mxu0 0
        %896 = vmatpush1.bf16.msra.mxu0 %v742
        %897 = vmatprep.subr.bf16.mxu0 0
        %898 = vmatpush1.bf16.msra.mxu0 %v745
        %899 = vmatprep.subr.bf16.mxu0 0
        %900 = vmatpush1.bf16.msra.mxu0 0
        %901 = vmatprep.subr.bf16.mxu0 0
        %902 = vmatpush1.bf16.msra.mxu0 0
        %903 = vmatprep.subr.bf16.mxu0 0
        %904 = vmatpush1.bf16.msra.mxu0 0
        %905 = vmatprep.subr.bf16.mxu0 0
        %906 = vmatpush1.bf16.msra.mxu0 0
        %907 = vmatprep.subr.bf16.mxu0 0
        %908 = vmatpush1.bf16.msra.mxu0 0
        %909 = vmatprep.subr.bf16.mxu0 0
        %910 = vmatpush1.bf16.msra.mxu0 0
        %911 = vmatprep.subr.bf16.mxu0 0
        %912 = vmatpush1.bf16.msra.mxu0 0
        %913 = vmatprep.subr.bf16.mxu0 0
        %914 = vmatpush1.bf16.msra.mxu0 0
        %915 = vmatprep.mubr.bf16.mxu0 0
        %916 = vmatmul.mubr.bf16.gmra.mrb[0].mxu0 %v585
        %v917 = vpop.f32.mrb[0].mxu0
        %v918 = vadd.f32 %v638, %v917
        %v919 = vpop.f32.mrb[0].mxu0
        %v920 = vpop.f32.mrb[0].mxu0
        %v921 = vadd.f32 %v638, %v920
        %v922 = vpop.f32.mrb[0].mxu0
        %923 = vmatprep.mubr.bf16.mxu0 0
        %924 = vmatmul.mubr.bf16.gmra.mrb[0].mxu0 %v586
        %v925 = vpop.f32.mrb[0].mxu0
        %v926 = vadd.f32 %v638, %v925
        %v927 = vpop.f32.mrb[0].mxu0
        %v928 = vpop.f32.mrb[0].mxu0
        %v929 = vadd.f32 %v638, %v928
        %v930 = vpop.f32.mrb[0].mxu0
        %931 = vmatprep.mubr.bf16.mxu0 0
        %932 = vmatmul.mubr.bf16.gmra.mrb[0].mxu0 %v587
        %v933 = vpop.f32.mrb[0].mxu0
        %v934 = vadd.f32 %v638, %v933
        %v935 = vpop.f32.mrb[0].mxu0
        %v936 = vpop.f32.mrb[0].mxu0
        %v937 = vadd.f32 %v638, %v936
        %v938 = vpop.f32.mrb[0].mxu0
        %939 = vmatprep.mubr.bf16.mxu0 0
        %940 = vmatmul.mubr.bf16.gmra.mrb[0].mxu0 %v588
        %v941 = vpop.f32.mrb[0].mxu0
        %v942 = vadd.f32 %v638, %v941
        %v943 = vpop.f32.mrb[0].mxu0
        %v944 = vpop.f32.mrb[0].mxu0
        %v945 = vadd.f32 %v638, %v944
        %v946 = vpop.f32.mrb[0].mxu0
        %947 = vmatprep.mubr.bf16.mxu0 0
        %948 = vmatmul.mubr.bf16.gmra.mrb[0].mxu0 %v589
        %v949 = vpop.f32.mrb[0].mxu0
        %v950 = vadd.f32 %v638, %v949
        %v951 = vpop.f32.mrb[0].mxu0
        %v952 = vpop.f32.mrb[0].mxu0
        %v953 = vadd.f32 %v638, %v952
        %v954 = vpop.f32.mrb[0].mxu0
        %955 = vmatprep.mubr.bf16.mxu0 0
        %956 = vmatmul.mubr.bf16.gmra.mrb[0].mxu0 %v590
        %v957 = vpop.f32.mrb[0].mxu0
        %v958 = vadd.f32 %v638, %v957
        %v959 = vpop.f32.mrb[0].mxu0
        %v960 = vpop.f32.mrb[0].mxu0
        %v961 = vadd.f32 %v638, %v960
        %v962 = vpop.f32.mrb[0].mxu0
        %963 = vmatprep.mubr.bf16.mxu0 0
        %964 = vmatmul.mubr.bf16.gmra.mrb[0].mxu0 %v591
        %v965 = vpop.f32.mrb[0].mxu0
        %v966 = vadd.f32 %v638, %v965
        %v967 = vpop.f32.mrb[0].mxu0
        %v968 = vpop.f32.mrb[0].mxu0
        %v969 = vadd.f32 %v638, %v968
        %v970 = vpop.f32.mrb[0].mxu0
        %971 = vmatprep.mubr.bf16.mxu0 0
        %972 = vmatmul.mubr.bf16.gmra.mrb[0].mxu0 %v592
        %v973 = vpop.f32.mrb[0].mxu0
        %v974 = vadd.f32 %v638, %v973
        %v975 = vpop.f32.mrb[0].mxu0
        %v976 = vpop.f32.mrb[0].mxu0
        %v977 = vadd.f32 %v638, %v976
        %v978 = vpop.f32.mrb[0].mxu0
        %979 = vdwg.mxu0
        %v980 = vpack.c.bf16 %v809, %v805
        %v981 = vpack.c.bf16 %v811, %v807
        %v982 = vpack.c.bf16 %v921, %v918
        %v983 = vpack.c.bf16 %v819, %v815
        %v984 = vpack.c.bf16 %v821, %v817
        %v985 = vpack.c.bf16 %v929, %v926
        %v986 = vpack.c.bf16 %v829, %v825
        %v987 = vpack.c.bf16 %v831, %v827
        %v988 = vpack.c.bf16 %v937, %v934
        %v989 = vpack.c.bf16 %v839, %v835
        %v990 = vpack.c.bf16 %v841, %v837
        %v991 = vpack.c.bf16 %v945, %v942
        %v992 = vpack.c.bf16 %v849, %v845
        %v993 = vpack.c.bf16 %v851, %v847
        %v994 = vpack.c.bf16 %v953, %v950
        %v995 = vpack.c.bf16 %v859, %v855
        %v996 = vpack.c.bf16 %v861, %v857
        %v997 = vpack.c.bf16 %v961, %v958
        %v998 = vpack.c.bf16 %v869, %v865
        %v999 = vpack.c.bf16 %v871, %v867
        %v1000 = vpack.c.bf16 %v969, %v966
        %v1001 = vpack.c.bf16 %v879, %v875
        %v1002 = vpack.c.bf16 %v881, %v877
        %v1003 = vpack.c.bf16 %v977, %v974
        %vm1004 = vcmask 261120
        %v1006 = vsel %vm1004, %v980, 0
        %v1009 = vsel %vm1004, %v983, 0
        %v1012 = vsel %vm1004, %v986, 0
        %v1015 = vsel %vm1004, %v989, 0
        %v1018 = vsel %vm1004, %v981, 0
        %v1021 = vsel %vm1004, %v984, 0
        %v1024 = vsel %vm1004, %v987, 0
        %v1027 = vsel %vm1004, %v990, 0
        %1029 = vmatprep.subr.bf16.mxu0 0
        %1030 = vmatpush1.bf16.xpose.msra.mxu0 %v1018
        %1031 = vmatprep.subr.bf16.mxu0 0
        %1032 = vmatpush1.bf16.xpose.msra.mxu0 %v1021
        %1033 = vmatprep.subr.bf16.mxu0 0
        %1034 = vmatpush1.bf16.xpose.msra.mxu0 %v1024
        %1035 = vmatprep.subr.bf16.mxu0 0
        %1036 = vmatpush1.bf16.xpose.msra.mxu0 %v1027
        %1037 = vmatprep.subr.bf16.mxu0 0
        %1038 = vmatpush1.bf16.xpose.msra.mxu0 0
        %1039 = vmatprep.subr.bf16.mxu0 0
        %1040 = vmatpush1.bf16.xpose.msra.mxu0 0
        %1041 = vmatprep.subr.bf16.mxu0 0
        %1042 = vmatpush1.bf16.xpose.msra.mxu0 0
        %1043 = vmatprep.subr.bf16.mxu0 0
        %1044 = vmatpush1.bf16.xpose.msra.mxu0 0
        %1045 = vmatprep.subr.bf16.mxu0 0
        %1046 = vmatpush1.bf16.xpose.msra.mxu0 0
        %1047 = vmatprep.subr.bf16.mxu0 0
        %1048 = vmatpush1.bf16.xpose.msra.mxu0 0
        %1049 = vmatprep.subr.bf16.mxu0 0
        %1050 = vmatpush1.bf16.xpose.msra.mxu0 0
        %1051 = vmatprep.subr.bf16.mxu0 0
        %1052 = vmatpush1.bf16.xpose.msra.mxu0 0
        %1053 = vmatprep.subr.bf16.mxu0 0
        %1054 = vmatpush1.bf16.xpose.msra.mxu0 0
        %1055 = vmatprep.subr.bf16.mxu0 0
        %1056 = vmatpush1.bf16.xpose.msra.mxu0 0
        %1057 = vmatprep.subr.bf16.mxu0 0
        %1058 = vmatpush1.bf16.xpose.msra.mxu0 0
        %1059 = vmatprep.subr.bf16.mxu0 0
        %1060 = vmatpush1.bf16.xpose.msra.mxu0 0
        %1061 = vmatprep.mubr.bf16.mxu0 0
        %1062 = vmatmul.mubr.bf16.gmra.mrb[0].mxu0 %v1006
        %v1063 = vpop.f32.mrb[0].mxu0
        %v1064 = vadd.f32 0.0, %v1063
        %v1065 = vpop.f32.mrb[0].mxu0
        %v1066 = vpop.f32.mrb[0].mxu0
        %v1067 = vadd.f32 0.0, %v1066
        %v1068 = vpop.f32.mrb[0].mxu0
        %1069 = vmatprep.mubr.bf16.mxu0 0
        %1070 = vmatmul.mubr.bf16.gmra.mrb[0].mxu0 %v1009
        %v1071 = vpop.f32.mrb[0].mxu0
        %v1072 = vadd.f32 0.0, %v1071
        %v1073 = vpop.f32.mrb[0].mxu0
        %v1074 = vpop.f32.mrb[0].mxu0
        %v1075 = vadd.f32 0.0, %v1074
        %v1076 = vpop.f32.mrb[0].mxu0
        %1077 = vmatprep.mubr.bf16.mxu0 0
        %1078 = vmatmul.mubr.bf16.gmra.mrb[0].mxu0 %v1012
        %v1079 = vpop.f32.mrb[0].mxu0
        %v1080 = vadd.f32 0.0, %v1079
        %v1081 = vpop.f32.mrb[0].mxu0
        %v1082 = vpop.f32.mrb[0].mxu0
        %v1083 = vadd.f32 0.0, %v1082
        %v1084 = vpop.f32.mrb[0].mxu0
        %1085 = vmatprep.mubr.bf16.mxu0 0
        %1086 = vmatmul.mubr.bf16.gmra.mrb[0].mxu0 %v1015
        %v1087 = vpop.f32.mrb[0].mxu0
        %v1088 = vadd.f32 0.0, %v1087
        %v1089 = vpop.f32.mrb[0].mxu0
        %v1090 = vpop.f32.mrb[0].mxu0
        %v1091 = vadd.f32 0.0, %v1090
        %v1092 = vpop.f32.mrb[0].mxu0
        %1093 = vdwg.mxu0
        %v1095 = vsel %vm1004, %v992, 0
        %v1098 = vsel %vm1004, %v995, 0
        %v1101 = vsel %vm1004, %v998, 0
        %v1104 = vsel %vm1004, %v1001, 0
        %v1107 = vsel %vm1004, %v993, 0
        %v1110 = vsel %vm1004, %v996, 0
        %v1113 = vsel %vm1004, %v999, 0
        %v1116 = vsel %vm1004, %v1002, 0
        %1118 = vmatprep.subr.bf16.mxu0 0
        %1119 = vmatpush1.bf16.xpose.msra.mxu0 %v1107
        %1120 = vmatprep.subr.bf16.mxu0 0
        %1121 = vmatpush1.bf16.xpose.msra.mxu0 %v1110
        %1122 = vmatprep.subr.bf16.mxu0 0
        %1123 = vmatpush1.bf16.xpose.msra.mxu0 %v1113
        %1124 = vmatprep.subr.bf16.mxu0 0
        %1125 = vmatpush1.bf16.xpose.msra.mxu0 %v1116
        %1126 = vmatprep.subr.bf16.mxu0 0
        %1127 = vmatpush1.bf16.xpose.msra.mxu0 0
        %1128 = vmatprep.subr.bf16.mxu0 0
        %1129 = vmatpush1.bf16.xpose.msra.mxu0 0
        %1130 = vmatprep.subr.bf16.mxu0 0
        %1131 = vmatpush1.bf16.xpose.msra.mxu0 0
        %1132 = vmatprep.subr.bf16.mxu0 0
        %1133 = vmatpush1.bf16.xpose.msra.mxu0 0
        %1134 = vmatprep.subr.bf16.mxu0 0
        %1135 = vmatpush1.bf16.xpose.msra.mxu0 0
        %1136 = vmatprep.subr.bf16.mxu0 0
        %1137 = vmatpush1.bf16.xpose.msra.mxu0 0
        %1138 = vmatprep.subr.bf16.mxu0 0
        %1139 = vmatpush1.bf16.xpose.msra.mxu0 0
        %1140 = vmatprep.subr.bf16.mxu0 0
        %1141 = vmatpush1.bf16.xpose.msra.mxu0 0
        %1142 = vmatprep.subr.bf16.mxu0 0
        %1143 = vmatpush1.bf16.xpose.msra.mxu0 0
        %1144 = vmatprep.subr.bf16.mxu0 0
        %1145 = vmatpush1.bf16.xpose.msra.mxu0 0
        %1146 = vmatprep.subr.bf16.mxu0 0
        %1147 = vmatpush1.bf16.xpose.msra.mxu0 0
        %1148 = vmatprep.subr.bf16.mxu0 0
        %1149 = vmatpush1.bf16.xpose.msra.mxu0 0
        %1150 = vmatprep.mubr.bf16.mxu0 0
        %1151 = vmatmul.mubr.bf16.gmra.mrb[0].mxu0 %v1095
        %v1152 = vpop.f32.mrb[0].mxu0
        %v1153 = vadd.f32 0.0, %v1152
        %v1154 = vpop.f32.mrb[0].mxu0
        %v1155 = vpop.f32.mrb[0].mxu0
        %v1156 = vadd.f32 0.0, %v1155
        %v1157 = vpop.f32.mrb[0].mxu0
        %1158 = vmatprep.mubr.bf16.mxu0 0
        %1159 = vmatmul.mubr.bf16.gmra.mrb[0].mxu0 %v1098
        %v1160 = vpop.f32.mrb[0].mxu0
        %v1161 = vadd.f32 0.0, %v1160
        %v1162 = vpop.f32.mrb[0].mxu0
        %v1163 = vpop.f32.mrb[0].mxu0
        %v1164 = vadd.f32 0.0, %v1163
        %v1165 = vpop.f32.mrb[0].mxu0
        %1166 = vmatprep.mubr.bf16.mxu0 0
        %1167 = vmatmul.mubr.bf16.gmra.mrb[0].mxu0 %v1101
        %v1168 = vpop.f32.mrb[0].mxu0
        %v1169 = vadd.f32 0.0, %v1168
        %v1170 = vpop.f32.mrb[0].mxu0
        %v1171 = vpop.f32.mrb[0].mxu0
        %v1172 = vadd.f32 0.0, %v1171
        %v1173 = vpop.f32.mrb[0].mxu0
        %1174 = vmatprep.mubr.bf16.mxu0 0
        %1175 = vmatmul.mubr.bf16.gmra.mrb[0].mxu0 %v1104
        %v1176 = vpop.f32.mrb[0].mxu0
        %v1177 = vadd.f32 0.0, %v1176
        %v1178 = vpop.f32.mrb[0].mxu0
        %v1179 = vpop.f32.mrb[0].mxu0
        %v1180 = vadd.f32 0.0, %v1179
        %v1181 = vpop.f32.mrb[0].mxu0
        %1182 = vdwg.mxu0
        %vm1183 = vcmask 523264
        %v1184 = vsel %vm1183, %v1064, -inf
        %1185 = vmax.xlane.f32.xlu0 %v1184
        %v1186 = vpop.xlane.xlu0 %1185
        %v1187 = vsel %vm1183, %v1067, -inf
        %1188 = vmax.xlane.f32.xlu0 %v1187
        %v1189 = vpop.xlane.xlu0 %1188
        %v1190 = vsel %vm1183, %v1072, -inf
        %1191 = vmax.xlane.f32.xlu0 %v1190
        %v1192 = vpop.xlane.xlu0 %1191
        %v1193 = vsel %vm1183, %v1075, -inf
        %1194 = vmax.xlane.f32.xlu0 %v1193
        %v1195 = vpop.xlane.xlu0 %1194
        %v1196 = vsel %vm1183, %v1080, -inf
        %1197 = vmax.xlane.f32.xlu0 %v1196
        %v1198 = vpop.xlane.xlu0 %1197
        %v1199 = vsel %vm1183, %v1083, -inf
        %1200 = vmax.xlane.f32.xlu0 %v1199
        %v1201 = vpop.xlane.xlu0 %1200
        %v1202 = vsel %vm1183, %v1088, -inf
        %1203 = vmax.xlane.f32.xlu0 %v1202
        %v1204 = vpop.xlane.xlu0 %1203
        %v1205 = vsel %vm1183, %v1091, -inf
        %1206 = vmax.xlane.f32.xlu0 %v1205
        %v1207 = vpop.xlane.xlu0 %1206
        %v1208 = vsel %vm1183, %v1153, -inf
        %1209 = vmax.xlane.f32.xlu0 %v1208
        %v1210 = vpop.xlane.xlu0 %1209
        %v1211 = vsel %vm1183, %v1156, -inf
        %1212 = vmax.xlane.f32.xlu0 %v1211
        %v1213 = vpop.xlane.xlu0 %1212
        %v1214 = vsel %vm1183, %v1161, -inf
        %1215 = vmax.xlane.f32.xlu0 %v1214
        %v1216 = vpop.xlane.xlu0 %1215
        %v1217 = vsel %vm1183, %v1164, -inf
        %1218 = vmax.xlane.f32.xlu0 %v1217
        %v1219 = vpop.xlane.xlu0 %1218
        %v1220 = vsel %vm1183, %v1169, -inf
        %1221 = vmax.xlane.f32.xlu0 %v1220
        %v1222 = vpop.xlane.xlu0 %1221
        %v1223 = vsel %vm1183, %v1172, -inf
        %1224 = vmax.xlane.f32.xlu0 %v1223
        %v1225 = vpop.xlane.xlu0 %1224
        %v1226 = vsel %vm1183, %v1177, -inf
        %1227 = vmax.xlane.f32.xlu0 %v1226
        %v1228 = vpop.xlane.xlu0 %1227
        %v1229 = vsel %vm1183, %v1180, -inf
        %1230 = vmax.xlane.f32.xlu0 %v1229
        %v1231 = vpop.xlane.xlu0 %1230
        %v1232 = vsub.f32 %v1064, %v1186
        %v1233 = vsub.f32 %v1067, %v1189
        %v1234 = vsub.f32 %v1072, %v1192
        %v1235 = vsub.f32 %v1075, %v1195
        %v1236 = vsub.f32 %v1080, %v1198
        %v1237 = vsub.f32 %v1083, %v1201
        %v1238 = vsub.f32 %v1088, %v1204
        %v1239 = vsub.f32 %v1091, %v1207
        %v1240 = vsub.f32 %v1153, %v1210
        %v1241 = vsub.f32 %v1156, %v1213
        %v1242 = vsub.f32 %v1161, %v1216
        %v1243 = vsub.f32 %v1164, %v1219
        %v1244 = vsub.f32 %v1169, %v1222
        %v1245 = vsub.f32 %v1172, %v1225
        %v1246 = vsub.f32 %v1177, %v1228
        %v1247 = vsub.f32 %v1180, %v1231
        %v1248 = vmul.f32 %v1232, 1.442695
        %v1249 = vpow.pop %v1248
        %v1250 = vmul.f32 %v1233, 1.442695
        %v1251 = vpow.pop %v1250
        %v1252 = vmul.f32 %v1234, 1.442695
        %v1253 = vpow.pop %v1252
        %v1254 = vmul.f32 %v1235, 1.442695
        %v1255 = vpow.pop %v1254
        %v1256 = vmul.f32 %v1236, 1.442695
        %v1257 = vpow.pop %v1256
        %v1258 = vmul.f32 %v1237, 1.442695
        %v1259 = vpow.pop %v1258
        %v1260 = vmul.f32 %v1238, 1.442695
        %v1261 = vpow.pop %v1260
        %v1262 = vmul.f32 %v1239, 1.442695
        %v1263 = vpow.pop %v1262
        %v1264 = vmul.f32 %v1240, 1.442695
        %v1265 = vpow.pop %v1264
        %v1266 = vmul.f32 %v1241, 1.442695
        %v1267 = vpow.pop %v1266
        %v1268 = vmul.f32 %v1242, 1.442695
        %v1269 = vpow.pop %v1268
        %v1270 = vmul.f32 %v1243, 1.442695
        %v1271 = vpow.pop %v1270
        %v1272 = vmul.f32 %v1244, 1.442695
        %v1273 = vpow.pop %v1272
        %v1274 = vmul.f32 %v1245, 1.442695
        %v1275 = vpow.pop %v1274
        %v1276 = vmul.f32 %v1246, 1.442695
        %v1277 = vpow.pop %v1276
        %v1278 = vmul.f32 %v1247, 1.442695
        %v1279 = vpow.pop %v1278
        %v1280 = vsel %vm1183, %v1249, 0.0
        %1281 = vadd.xlane.f32.xlu0 %v1280
        %v1282 = vpop.xlane.xlu0 %1281
        %v1283 = vsel %vm1183, %v1251, 0.0
        %1284 = vadd.xlane.f32.xlu0 %v1283
        %v1285 = vpop.xlane.xlu0 %1284
        %v1286 = vsel %vm1183, %v1253, 0.0
        %1287 = vadd.xlane.f32.xlu0 %v1286
        %v1288 = vpop.xlane.xlu0 %1287
        %v1289 = vsel %vm1183, %v1255, 0.0
        %1290 = vadd.xlane.f32.xlu0 %v1289
        %v1291 = vpop.xlane.xlu0 %1290
        %v1292 = vsel %vm1183, %v1257, 0.0
        %1293 = vadd.xlane.f32.xlu0 %v1292
        %v1294 = vpop.xlane.xlu0 %1293
        %v1295 = vsel %vm1183, %v1259, 0.0
        %1296 = vadd.xlane.f32.xlu0 %v1295
        %v1297 = vpop.xlane.xlu0 %1296
        %v1298 = vsel %vm1183, %v1261, 0.0
        %1299 = vadd.xlane.f32.xlu0 %v1298
        %v1300 = vpop.xlane.xlu0 %1299
        %v1301 = vsel %vm1183, %v1263, 0.0
        %1302 = vadd.xlane.f32.xlu0 %v1301
        %v1303 = vpop.xlane.xlu0 %1302
        %v1304 = vsel %vm1183, %v1265, 0.0
        %1305 = vadd.xlane.f32.xlu0 %v1304
        %v1306 = vpop.xlane.xlu0 %1305
        %v1307 = vsel %vm1183, %v1267, 0.0
        %1308 = vadd.xlane.f32.xlu0 %v1307
        %v1309 = vpop.xlane.xlu0 %1308
        %v1310 = vsel %vm1183, %v1269, 0.0
        %1311 = vadd.xlane.f32.xlu0 %v1310
        %v1312 = vpop.xlane.xlu0 %1311
        %v1313 = vsel %vm1183, %v1271, 0.0
        %1314 = vadd.xlane.f32.xlu0 %v1313
        %v1315 = vpop.xlane.xlu0 %1314
        %v1316 = vsel %vm1183, %v1273, 0.0
        %1317 = vadd.xlane.f32.xlu0 %v1316
        %v1318 = vpop.xlane.xlu0 %1317
        %v1319 = vsel %vm1183, %v1275, 0.0
        %1320 = vadd.xlane.f32.xlu0 %v1319
        %v1321 = vpop.xlane.xlu0 %1320
        %v1322 = vsel %vm1183, %v1277, 0.0
        %1323 = vadd.xlane.f32.xlu0 %v1322
        %v1324 = vpop.xlane.xlu0 %1323
        %v1325 = vsel %vm1183, %v1279, 0.0
        %1326 = vadd.xlane.f32.xlu0 %v1325
        %v1327 = vpop.xlane.xlu0 %1326
        %v1328 = vrcp.pop %v1282
        %v1329 = vrcp.pop %v1285
        %v1330 = vrcp.pop %v1288
        %v1331 = vrcp.pop %v1291
        %v1332 = vrcp.pop %v1294
        %v1333 = vrcp.pop %v1297
        %v1334 = vrcp.pop %v1300
        %v1335 = vrcp.pop %v1303
        %v1336 = vrcp.pop %v1306
        %v1337 = vrcp.pop %v1309
        %v1338 = vrcp.pop %v1312
        %v1339 = vrcp.pop %v1315
        %v1340 = vrcp.pop %v1318
        %v1341 = vrcp.pop %v1321
        %v1342 = vrcp.pop %v1324
        %v1343 = vrcp.pop %v1327
        %v1344 = vmul.f32 %v1249, %v1328
        %v1345 = vmul.f32 %v1251, %v1329
        %v1346 = vmul.f32 %v1253, %v1330
        %v1347 = vmul.f32 %v1255, %v1331
        %v1348 = vmul.f32 %v1257, %v1332
        %v1349 = vmul.f32 %v1259, %v1333
        %v1350 = vmul.f32 %v1261, %v1334
        %v1351 = vmul.f32 %v1263, %v1335
        %v1352 = vmul.f32 %v1265, %v1336
        %v1353 = vmul.f32 %v1267, %v1337
        %v1354 = vmul.f32 %v1269, %v1338
        %v1355 = vmul.f32 %v1271, %v1339
        %v1356 = vmul.f32 %v1273, %v1340
        %v1357 = vmul.f32 %v1275, %v1341
        %v1358 = vmul.f32 %v1277, %v1342
        %v1359 = vmul.f32 %v1279, %v1343
        %v1360 = vpack.c.bf16 %v1345, %v1344
        %v1361 = vpack.c.bf16 %v1347, %v1346
        %v1362 = vpack.c.bf16 %v1349, %v1348
        %v1363 = vpack.c.bf16 %v1351, %v1350
        %v1364 = vpack.c.bf16 %v1353, %v1352
        %v1365 = vpack.c.bf16 %v1355, %v1354
        %v1366 = vpack.c.bf16 %v1357, %v1356
        %v1367 = vpack.c.bf16 %v1359, %v1358
        %v1369 = vsel %vm1183, %v1360, 0
        %v1372 = vsel %vm1183, %v1361, 0
        %v1375 = vsel %vm1183, %v1362, 0
        %v1378 = vsel %vm1183, %v1363, 0
        %1380 = vmatprep.subr.bf16.mxu0 0
        %1381 = vmatpush1.bf16.msra.mxu0 %v982
        %1382 = vmatprep.subr.bf16.mxu0 0
        %1383 = vmatpush1.bf16.msra.mxu0 %v985
        %1384 = vmatprep.subr.bf16.mxu0 0
        %1385 = vmatpush1.bf16.msra.mxu0 %v988
        %1386 = vmatprep.subr.bf16.mxu0 0
        %1387 = vmatpush1.bf16.msra.mxu0 %v991
        %1388 = vmatprep.subr.bf16.mxu0 0
        %1389 = vmatpush1.bf16.msra.mxu0 0
        %1390 = vmatprep.subr.bf16.mxu0 0
        %1391 = vmatpush1.bf16.msra.mxu0 0
        %1392 = vmatprep.subr.bf16.mxu0 0
        %1393 = vmatpush1.bf16.msra.mxu0 0
        %1394 = vmatprep.subr.bf16.mxu0 0
        %1395 = vmatpush1.bf16.msra.mxu0 0
        %1396 = vmatprep.subr.bf16.mxu0 0
        %1397 = vmatpush1.bf16.msra.mxu0 0
        %1398 = vmatprep.subr.bf16.mxu0 0
        %1399 = vmatpush1.bf16.msra.mxu0 0
        %1400 = vmatprep.subr.bf16.mxu0 0
        %1401 = vmatpush1.bf16.msra.mxu0 0
        %1402 = vmatprep.subr.bf16.mxu0 0
        %1403 = vmatpush1.bf16.msra.mxu0 0
        %1404 = vmatprep.subr.bf16.mxu0 0
        %1405 = vmatpush1.bf16.msra.mxu0 0
        %1406 = vmatprep.subr.bf16.mxu0 0
        %1407 = vmatpush1.bf16.msra.mxu0 0
        %1408 = vmatprep.subr.bf16.mxu0 0
        %1409 = vmatpush1.bf16.msra.mxu0 0
        %1410 = vmatprep.subr.bf16.mxu0 0
        %1411 = vmatpush1.bf16.msra.mxu0 0
        %1412 = vmatprep.mubr.bf16.mxu0 0
        %1413 = vmatmul.mubr.bf16.gmra.mrb[0].mxu0 %v1369
        %v1414 = vpop.f32.mrb[0].mxu0
        %v1415 = vadd.f32 0.0, %v1414
        %v1416 = vpop.f32.mrb[0].mxu0
        %v1417 = vpop.f32.mrb[0].mxu0
        %v1418 = vadd.f32 0.0, %v1417
        %v1419 = vpop.f32.mrb[0].mxu0
        %1420 = vmatprep.mubr.bf16.mxu0 0
        %1421 = vmatmul.mubr.bf16.gmra.mrb[0].mxu0 %v1372
        %v1422 = vpop.f32.mrb[0].mxu0
        %v1423 = vadd.f32 0.0, %v1422
        %v1424 = vpop.f32.mrb[0].mxu0
        %v1425 = vpop.f32.mrb[0].mxu0
        %v1426 = vadd.f32 0.0, %v1425
        %v1427 = vpop.f32.mrb[0].mxu0
        %1428 = vmatprep.mubr.bf16.mxu0 0
        %1429 = vmatmul.mubr.bf16.gmra.mrb[0].mxu0 %v1375
        %v1430 = vpop.f32.mrb[0].mxu0
        %v1431 = vadd.f32 0.0, %v1430
        %v1432 = vpop.f32.mrb[0].mxu0
        %v1433 = vpop.f32.mrb[0].mxu0
        %v1434 = vadd.f32 0.0, %v1433
        %v1435 = vpop.f32.mrb[0].mxu0
        %1436 = vmatprep.mubr.bf16.mxu0 0
        %1437 = vmatmul.mubr.bf16.gmra.mrb[0].mxu0 %v1378
        %v1438 = vpop.f32.mrb[0].mxu0
        %v1439 = vadd.f32 0.0, %v1438
        %v1440 = vpop.f32.mrb[0].mxu0
        %v1441 = vpop.f32.mrb[0].mxu0
        %v1442 = vadd.f32 0.0, %v1441
        %v1443 = vpop.f32.mrb[0].mxu0
        %1444 = vdwg.mxu0
        %v1446 = vsel %vm1183, %v1364, 0
        %v1449 = vsel %vm1183, %v1365, 0
        %v1452 = vsel %vm1183, %v1366, 0
        %v1455 = vsel %vm1183, %v1367, 0
        %1457 = vmatprep.subr.bf16.mxu0 0
        %1458 = vmatpush1.bf16.msra.mxu0 %v994
        %1459 = vmatprep.subr.bf16.mxu0 0
        %1460 = vmatpush1.bf16.msra.mxu0 %v997
        %1461 = vmatprep.subr.bf16.mxu0 0
        %1462 = vmatpush1.bf16.msra.mxu0 %v1000
        %1463 = vmatprep.subr.bf16.mxu0 0
        %1464 = vmatpush1.bf16.msra.mxu0 %v1003
        %1465 = vmatprep.subr.bf16.mxu0 0
        %1466 = vmatpush1.bf16.msra.mxu0 0
        %1467 = vmatprep.subr.bf16.mxu0 0
        %1468 = vmatpush1.bf16.msra.mxu0 0
        %1469 = vmatprep.subr.bf16.mxu0 0
        %1470 = vmatpush1.bf16.msra.mxu0 0
        %1471 = vmatprep.subr.bf16.mxu0 0
        %1472 = vmatpush1.bf16.msra.mxu0 0
        %1473 = vmatprep.subr.bf16.mxu0 0
        %1474 = vmatpush1.bf16.msra.mxu0 0
        %1475 = vmatprep.subr.bf16.mxu0 0
        %1476 = vmatpush1.bf16.msra.mxu0 0
        %1477 = vmatprep.subr.bf16.mxu0 0
        %1478 = vmatpush1.bf16.msra.mxu0 0
        %1479 = vmatprep.subr.bf16.mxu0 0
        %1480 = vmatpush1.bf16.msra.mxu0 0
        %1481 = vmatprep.subr.bf16.mxu0 0
        %1482 = vmatpush1.bf16.msra.mxu0 0
        %1483 = vmatprep.subr.bf16.mxu0 0
        %1484 = vmatpush1.bf16.msra.mxu0 0
        %1485 = vmatprep.subr.bf16.mxu0 0
        %1486 = vmatpush1.bf16.msra.mxu0 0
        %1487 = vmatprep.subr.bf16.mxu0 0
        %1488 = vmatpush1.bf16.msra.mxu0 0
        %1489 = vmatprep.mubr.bf16.mxu0 0
        %1490 = vmatmul.mubr.bf16.gmra.mrb[0].mxu0 %v1446
        %v1491 = vpop.f32.mrb[0].mxu0
        %v1492 = vadd.f32 0.0, %v1491
        %v1493 = vpop.f32.mrb[0].mxu0
        %v1494 = vpop.f32.mrb[0].mxu0
        %v1495 = vadd.f32 0.0, %v1494
        %v1496 = vpop.f32.mrb[0].mxu0
        %1497 = vmatprep.mubr.bf16.mxu0 0
        %1498 = vmatmul.mubr.bf16.gmra.mrb[0].mxu0 %v1449
        %v1499 = vpop.f32.mrb[0].mxu0
        %v1500 = vadd.f32 0.0, %v1499
        %v1501 = vpop.f32.mrb[0].mxu0
        %v1502 = vpop.f32.mrb[0].mxu0
        %v1503 = vadd.f32 0.0, %v1502
        %v1504 = vpop.f32.mrb[0].mxu0
        %1505 = vmatprep.mubr.bf16.mxu0 0
        %1506 = vmatmul.mubr.bf16.gmra.mrb[0].mxu0 %v1452
        %v1507 = vpop.f32.mrb[0].mxu0
        %v1508 = vadd.f32 0.0, %v1507
        %v1509 = vpop.f32.mrb[0].mxu0
        %v1510 = vpop.f32.mrb[0].mxu0
        %v1511 = vadd.f32 0.0, %v1510
        %v1512 = vpop.f32.mrb[0].mxu0
        %1513 = vmatprep.mubr.bf16.mxu0 0
        %1514 = vmatmul.mubr.bf16.gmra.mrb[0].mxu0 %v1455
        %v1515 = vpop.f32.mrb[0].mxu0
        %v1516 = vadd.f32 0.0, %v1515
        %v1517 = vpop.f32.mrb[0].mxu0
        %v1518 = vpop.f32.mrb[0].mxu0
        %v1519 = vadd.f32 0.0, %v1518
        %v1520 = vpop.f32.mrb[0].mxu0
        %1521 = vdwg.mxu0
        %v1522 = vpack.c.bf16 %v1418, %v1415
        %v1523 = vpack.c.bf16 %v1426, %v1423
        %v1524 = vpack.c.bf16 %v1434, %v1431
        %v1525 = vpack.c.bf16 %v1442, %v1439
        %v1526 = vpack.c.bf16 %v1495, %v1492
        %v1527 = vpack.c.bf16 %v1503, %v1500
        %v1528 = vpack.c.bf16 %v1511, %v1508
        %v1529 = vpack.c.bf16 %v1519, %v1516
        %1530 = vst.msk [vmem:[#allocation2] sm:$0xff] %vm1004, %v1522
        %1531 = vst.msk [vmem:[#allocation2 + $0x8] sm:$0xff] %vm1004, %v1523
        %1532 = vst.msk [vmem:[#allocation2 + $0x10] sm:$0xff] %vm1004, %v1524
        %1533 = vst.msk [vmem:[#allocation2 + $0x18] sm:$0xff] %vm1004, %v1525
        %1534 = vst.msk [vmem:[#allocation2 + $0x20] sm:$0xff] %vm1004, %v1526
        %1535 = vst.msk [vmem:[#allocation2 + $0x28] sm:$0xff] %vm1004, %v1527
        %1536 = vst.msk [vmem:[#allocation2 + $0x30] sm:$0xff] %vm1004, %v1528
        %1537 = vst.msk [vmem:[#allocation2 + $0x38] sm:$0xff] %vm1004, %v1529
        %1542 = vrot.lane.b32.xlu0 %v980, 96
        %v1543 = vpop.permute.xlu0 %1542
        %1544 = vrot.lane.b32.xlu0 %v983, 96
        %v1545 = vpop.permute.xlu0 %1544
        %1546 = vrot.lane.b32.xlu0 %v986, 96
        %v1547 = vpop.permute.xlu0 %1546
        %1548 = vrot.lane.b32.xlu0 %v989, 96
        %v1549 = vpop.permute.xlu0 %1548
        %1554 = vrot.lane.b32.xlu0 %v981, 96
        %v1555 = vpop.permute.xlu0 %1554
        %1556 = vrot.lane.b32.xlu0 %v984, 96
        %v1557 = vpop.permute.xlu0 %1556
        %1558 = vrot.lane.b32.xlu0 %v987, 96
        %v1559 = vpop.permute.xlu0 %1558
        %1560 = vrot.lane.b32.xlu0 %v990, 96
        %v1561 = vpop.permute.xlu0 %1560
        %v1563 = vsel %vm1004, %v1543, 0
        %v1566 = vsel %vm1004, %v1545, 0
        %v1569 = vsel %vm1004, %v1547, 0
        %v1572 = vsel %vm1004, %v1549, 0
        %v1575 = vsel %vm1004, %v1555, 0
        %v1578 = vsel %vm1004, %v1557, 0
        %v1581 = vsel %vm1004, %v1559, 0
        %v1584 = vsel %vm1004, %v1561, 0
        %1586 = vmatprep.subr.bf16.mxu0 0
        %1587 = vmatpush1.bf16.xpose.msra.mxu0 %v1575
        %1588 = vmatprep.subr.bf16.mxu0 0
        %1589 = vmatpush1.bf16.xpose.msra.mxu0 %v1578
        %1590 = vmatprep.subr.bf16.mxu0 0
        %1591 = vmatpush1.bf16.xpose.msra.mxu0 %v1581
        %1592 = vmatprep.subr.bf16.mxu0 0
        %1593 = vmatpush1.bf16.xpose.msra.mxu0 %v1584
        %1594 = vmatprep.subr.bf16.mxu0 0
        %1595 = vmatpush1.bf16.xpose.msra.mxu0 0
        %1596 = vmatprep.subr.bf16.mxu0 0
        %1597 = vmatpush1.bf16.xpose.msra.mxu0 0
        %1598 = vmatprep.subr.bf16.mxu0 0
        %1599 = vmatpush1.bf16.xpose.msra.mxu0 0
        %1600 = vmatprep.subr.bf16.mxu0 0
        %1601 = vmatpush1.bf16.xpose.msra.mxu0 0
        %1602 = vmatprep.subr.bf16.mxu0 0
        %1603 = vmatpush1.bf16.xpose.msra.mxu0 0
        %1604 = vmatprep.subr.bf16.mxu0 0
        %1605 = vmatpush1.bf16.xpose.msra.mxu0 0
        %1606 = vmatprep.subr.bf16.mxu0 0
        %1607 = vmatpush1.bf16.xpose.msra.mxu0 0
        %1608 = vmatprep.subr.bf16.mxu0 0
        %1609 = vmatpush1.bf16.xpose.msra.mxu0 0
        %1610 = vmatprep.subr.bf16.mxu0 0
        %1611 = vmatpush1.bf16.xpose.msra.mxu0 0
        %1612 = vmatprep.subr.bf16.mxu0 0
        %1613 = vmatpush1.bf16.xpose.msra.mxu0 0
        %1614 = vmatprep.subr.bf16.mxu0 0
        %1615 = vmatpush1.bf16.xpose.msra.mxu0 0
        %1616 = vmatprep.subr.bf16.mxu0 0
        %1617 = vmatpush1.bf16.xpose.msra.mxu0 0
        %1618 = vmatprep.mubr.bf16.mxu0 0
        %1619 = vmatmul.mubr.bf16.gmra.mrb[0].mxu0 %v1563
        %v1620 = vpop.f32.mrb[0].mxu0
        %v1621 = vadd.f32 0.0, %v1620
        %v1622 = vpop.f32.mrb[0].mxu0
        %v1623 = vpop.f32.mrb[0].mxu0
        %v1624 = vadd.f32 0.0, %v1623
        %v1625 = vpop.f32.mrb[0].mxu0
        %1626 = vmatprep.mubr.bf16.mxu0 0
        %1627 = vmatmul.mubr.bf16.gmra.mrb[0].mxu0 %v1566
        %v1628 = vpop.f32.mrb[0].mxu0
        %v1629 = vadd.f32 0.0, %v1628
        %v1630 = vpop.f32.mrb[0].mxu0
        %v1631 = vpop.f32.mrb[0].mxu0
        %v1632 = vadd.f32 0.0, %v1631
        %v1633 = vpop.f32.mrb[0].mxu0
        %1634 = vmatprep.mubr.bf16.mxu0 0
        %1635 = vmatmul.mubr.bf16.gmra.mrb[0].mxu0 %v1569
        %v1636 = vpop.f32.mrb[0].mxu0
        %v1637 = vadd.f32 0.0, %v1636
        %v1638 = vpop.f32.mrb[0].mxu0
        %v1639 = vpop.f32.mrb[0].mxu0
        %v1640 = vadd.f32 0.0, %v1639
        %v1641 = vpop.f32.mrb[0].mxu0
        %1642 = vmatprep.mubr.bf16.mxu0 0
        %1643 = vmatmul.mubr.bf16.gmra.mrb[0].mxu0 %v1572
        %v1644 = vpop.f32.mrb[0].mxu0
        %v1645 = vadd.f32 0.0, %v1644
        %v1646 = vpop.f32.mrb[0].mxu0
        %v1647 = vpop.f32.mrb[0].mxu0
        %v1648 = vadd.f32 0.0, %v1647
        %v1649 = vpop.f32.mrb[0].mxu0
        %1650 = vdwg.mxu0
        %1655 = vrot.lane.b32.xlu0 %v992, 96
        %v1656 = vpop.permute.xlu0 %1655
        %1657 = vrot.lane.b32.xlu0 %v995, 96
        %v1658 = vpop.permute.xlu0 %1657
        %1659 = vrot.lane.b32.xlu0 %v998, 96
        %v1660 = vpop.permute.xlu0 %1659
        %1661 = vrot.lane.b32.xlu0 %v1001, 96
        %v1662 = vpop.permute.xlu0 %1661
        %1667 = vrot.lane.b32.xlu0 %v993, 96
        %v1668 = vpop.permute.xlu0 %1667
        %1669 = vrot.lane.b32.xlu0 %v996, 96
        %v1670 = vpop.permute.xlu0 %1669
        %1671 = vrot.lane.b32.xlu0 %v999, 96
        %v1672 = vpop.permute.xlu0 %1671
        %1673 = vrot.lane.b32.xlu0 %v1002, 96
        %v1674 = vpop.permute.xlu0 %1673
        %v1676 = vsel %vm1004, %v1656, 0
        %v1679 = vsel %vm1004, %v1658, 0
        %v1682 = vsel %vm1004, %v1660, 0
        %v1685 = vsel %vm1004, %v1662, 0
        %v1688 = vsel %vm1004, %v1668, 0
        %v1691 = vsel %vm1004, %v1670, 0
        %v1694 = vsel %vm1004, %v1672, 0
        %v1697 = vsel %vm1004, %v1674, 0
        %1699 = vmatprep.subr.bf16.mxu0 0
        %1700 = vmatpush1.bf16.xpose.msra.mxu0 %v1688
        %1701 = vmatprep.subr.bf16.mxu0 0
        %1702 = vmatpush1.bf16.xpose.msra.mxu0 %v1691
        %1703 = vmatprep.subr.bf16.mxu0 0
        %1704 = vmatpush1.bf16.xpose.msra.mxu0 %v1694
        %1705 = vmatprep.subr.bf16.mxu0 0
        %1706 = vmatpush1.bf16.xpose.msra.mxu0 %v1697
        %1707 = vmatprep.subr.bf16.mxu0 0
        %1708 = vmatpush1.bf16.xpose.msra.mxu0 0
        %1709 = vmatprep.subr.bf16.mxu0 0
        %1710 = vmatpush1.bf16.xpose.msra.mxu0 0
        %1711 = vmatprep.subr.bf16.mxu0 0
        %1712 = vmatpush1.bf16.xpose.msra.mxu0 0
        %1713 = vmatprep.subr.bf16.mxu0 0
        %1714 = vmatpush1.bf16.xpose.msra.mxu0 0
        %1715 = vmatprep.subr.bf16.mxu0 0
        %1716 = vmatpush1.bf16.xpose.msra.mxu0 0
        %1717 = vmatprep.subr.bf16.mxu0 0
        %1718 = vmatpush1.bf16.xpose.msra.mxu0 0
        %1719 = vmatprep.subr.bf16.mxu0 0
        %1720 = vmatpush1.bf16.xpose.msra.mxu0 0
        %1721 = vmatprep.subr.bf16.mxu0 0
        %1722 = vmatpush1.bf16.xpose.msra.mxu0 0
        %1723 = vmatprep.subr.bf16.mxu0 0
        %1724 = vmatpush1.bf16.xpose.msra.mxu0 0
        %1725 = vmatprep.subr.bf16.mxu0 0
        %1726 = vmatpush1.bf16.xpose.msra.mxu0 0
        %1727 = vmatprep.subr.bf16.mxu0 0
        %1728 = vmatpush1.bf16.xpose.msra.mxu0 0
        %1729 = vmatprep.subr.bf16.mxu0 0
        %1730 = vmatpush1.bf16.xpose.msra.mxu0 0
        %1731 = vmatprep.mubr.bf16.mxu0 0
        %1732 = vmatmul.mubr.bf16.gmra.mrb[0].mxu0 %v1676
        %v1733 = vpop.f32.mrb[0].mxu0
        %v1734 = vadd.f32 0.0, %v1733
        %v1735 = vpop.f32.mrb[0].mxu0
        %v1736 = vpop.f32.mrb[0].mxu0
        %v1737 = vadd.f32 0.0, %v1736
        %v1738 = vpop.f32.mrb[0].mxu0
        %1739 = vmatprep.mubr.bf16.mxu0 0
        %1740 = vmatmul.mubr.bf16.gmra.mrb[0].mxu0 %v1679
        %v1741 = vpop.f32.mrb[0].mxu0
        %v1742 = vadd.f32 0.0, %v1741
        %v1743 = vpop.f32.mrb[0].mxu0
        %v1744 = vpop.f32.mrb[0].mxu0
        %v1745 = vadd.f32 0.0, %v1744
        %v1746 = vpop.f32.mrb[0].mxu0
        %1747 = vmatprep.mubr.bf16.mxu0 0
        %1748 = vmatmul.mubr.bf16.gmra.mrb[0].mxu0 %v1682
        %v1749 = vpop.f32.mrb[0].mxu0
        %v1750 = vadd.f32 0.0, %v1749
        %v1751 = vpop.f32.mrb[0].mxu0
        %v1752 = vpop.f32.mrb[0].mxu0
        %v1753 = vadd.f32 0.0, %v1752
        %v1754 = vpop.f32.mrb[0].mxu0
        %1755 = vmatprep.mubr.bf16.mxu0 0
        %1756 = vmatmul.mubr.bf16.gmra.mrb[0].mxu0 %v1685
        %v1757 = vpop.f32.mrb[0].mxu0
        %v1758 = vadd.f32 0.0, %v1757
        %v1759 = vpop.f32.mrb[0].mxu0
        %v1760 = vpop.f32.mrb[0].mxu0
        %v1761 = vadd.f32 0.0, %v1760
        %v1762 = vpop.f32.mrb[0].mxu0
        %1763 = vdwg.mxu0
        %v1764 = vsel %vm1183, %v1621, -inf
        %1765 = vmax.xlane.f32.xlu0 %v1764
        %v1766 = vpop.xlane.xlu0 %1765
        %v1767 = vsel %vm1183, %v1624, -inf
        %1768 = vmax.xlane.f32.xlu0 %v1767
        %v1769 = vpop.xlane.xlu0 %1768
        %v1770 = vsel %vm1183, %v1629, -inf
        %1771 = vmax.xlane.f32.xlu0 %v1770
        %v1772 = vpop.xlane.xlu0 %1771
        %v1773 = vsel %vm1183, %v1632, -inf
        %1774 = vmax.xlane.f32.xlu0 %v1773
        %v1775 = vpop.xlane.xlu0 %1774
        %v1776 = vsel %vm1183, %v1637, -inf
        %1777 = vmax.xlane.f32.xlu0 %v1776
        %v1778 = vpop.xlane.xlu0 %1777
        %v1779 = vsel %vm1183, %v1640, -inf
        %1780 = vmax.xlane.f32.xlu0 %v1779
        %v1781 = vpop.xlane.xlu0 %1780
        %v1782 = vsel %vm1183, %v1645, -inf
        %1783 = vmax.xlane.f32.xlu0 %v1782
        %v1784 = vpop.xlane.xlu0 %1783
        %v1785 = vsel %vm1183, %v1648, -inf
        %1786 = vmax.xlane.f32.xlu0 %v1785
        %v1787 = vpop.xlane.xlu0 %1786
        %v1788 = vsel %vm1183, %v1734, -inf
        %1789 = vmax.xlane.f32.xlu0 %v1788
        %v1790 = vpop.xlane.xlu0 %1789
        %v1791 = vsel %vm1183, %v1737, -inf
        %1792 = vmax.xlane.f32.xlu0 %v1791
        %v1793 = vpop.xlane.xlu0 %1792
        %v1794 = vsel %vm1183, %v1742, -inf
        %1795 = vmax.xlane.f32.xlu0 %v1794
        %v1796 = vpop.xlane.xlu0 %1795
        %v1797 = vsel %vm1183, %v1745, -inf
        %1798 = vmax.xlane.f32.xlu0 %v1797
        %v1799 = vpop.xlane.xlu0 %1798
        %v1800 = vsel %vm1183, %v1750, -inf
        %1801 = vmax.xlane.f32.xlu0 %v1800
        %v1802 = vpop.xlane.xlu0 %1801
        %v1803 = vsel %vm1183, %v1753, -inf
        %1804 = vmax.xlane.f32.xlu0 %v1803
        %v1805 = vpop.xlane.xlu0 %1804
        %v1806 = vsel %vm1183, %v1758, -inf
        %1807 = vmax.xlane.f32.xlu0 %v1806
        %v1808 = vpop.xlane.xlu0 %1807
        %v1809 = vsel %vm1183, %v1761, -inf
        %1810 = vmax.xlane.f32.xlu0 %v1809
        %v1811 = vpop.xlane.xlu0 %1810
        %v1812 = vsub.f32 %v1621, %v1766
        %v1813 = vsub.f32 %v1624, %v1769
        %v1814 = vsub.f32 %v1629, %v1772
        %v1815 = vsub.f32 %v1632, %v1775
        %v1816 = vsub.f32 %v1637, %v1778
        %v1817 = vsub.f32 %v1640, %v1781
        %v1818 = vsub.f32 %v1645, %v1784
        %v1819 = vsub.f32 %v1648, %v1787
        %v1820 = vsub.f32 %v1734, %v1790
        %v1821 = vsub.f32 %v1737, %v1793
        %v1822 = vsub.f32 %v1742, %v1796
        %v1823 = vsub.f32 %v1745, %v1799
        %v1824 = vsub.f32 %v1750, %v1802
        %v1825 = vsub.f32 %v1753, %v1805
        %v1826 = vsub.f32 %v1758, %v1808
        %v1827 = vsub.f32 %v1761, %v1811
        %v1828 = vmul.f32 %v1812, 1.442695
        %v1829 = vpow.pop %v1828
        %v1830 = vmul.f32 %v1813, 1.442695
        %v1831 = vpow.pop %v1830
        %v1832 = vmul.f32 %v1814, 1.442695
        %v1833 = vpow.pop %v1832
        %v1834 = vmul.f32 %v1815, 1.442695
        %v1835 = vpow.pop %v1834
        %v1836 = vmul.f32 %v1816, 1.442695
        %v1837 = vpow.pop %v1836
        %v1838 = vmul.f32 %v1817, 1.442695
        %v1839 = vpow.pop %v1838
        %v1840 = vmul.f32 %v1818, 1.442695
        %v1841 = vpow.pop %v1840
        %v1842 = vmul.f32 %v1819, 1.442695
        %v1843 = vpow.pop %v1842
        %v1844 = vmul.f32 %v1820, 1.442695
        %v1845 = vpow.pop %v1844
        %v1846 = vmul.f32 %v1821, 1.442695
        %v1847 = vpow.pop %v1846
        %v1848 = vmul.f32 %v1822, 1.442695
        %v1849 = vpow.pop %v1848
        %v1850 = vmul.f32 %v1823, 1.442695
        %v1851 = vpow.pop %v1850
        %v1852 = vmul.f32 %v1824, 1.442695
        %v1853 = vpow.pop %v1852
        %v1854 = vmul.f32 %v1825, 1.442695
        %v1855 = vpow.pop %v1854
        %v1856 = vmul.f32 %v1826, 1.442695
        %v1857 = vpow.pop %v1856
        %v1858 = vmul.f32 %v1827, 1.442695
        %v1859 = vpow.pop %v1858
        %v1860 = vsel %vm1183, %v1829, 0.0
        %1861 = vadd.xlane.f32.xlu0 %v1860
        %v1862 = vpop.xlane.xlu0 %1861
        %v1863 = vsel %vm1183, %v1831, 0.0
        %1864 = vadd.xlane.f32.xlu0 %v1863
        %v1865 = vpop.xlane.xlu0 %1864
        %v1866 = vsel %vm1183, %v1833, 0.0
        %1867 = vadd.xlane.f32.xlu0 %v1866
        %v1868 = vpop.xlane.xlu0 %1867
        %v1869 = vsel %vm1183, %v1835, 0.0
        %1870 = vadd.xlane.f32.xlu0 %v1869
        %v1871 = vpop.xlane.xlu0 %1870
        %v1872 = vsel %vm1183, %v1837, 0.0
        %1873 = vadd.xlane.f32.xlu0 %v1872
        %v1874 = vpop.xlane.xlu0 %1873
        %v1875 = vsel %vm1183, %v1839, 0.0
        %1876 = vadd.xlane.f32.xlu0 %v1875
        %v1877 = vpop.xlane.xlu0 %1876
        %v1878 = vsel %vm1183, %v1841, 0.0
        %1879 = vadd.xlane.f32.xlu0 %v1878
        %v1880 = vpop.xlane.xlu0 %1879
        %v1881 = vsel %vm1183, %v1843, 0.0
        %1882 = vadd.xlane.f32.xlu0 %v1881
        %v1883 = vpop.xlane.xlu0 %1882
        %v1884 = vsel %vm1183, %v1845, 0.0
        %1885 = vadd.xlane.f32.xlu0 %v1884
        %v1886 = vpop.xlane.xlu0 %1885
        %v1887 = vsel %vm1183, %v1847, 0.0
        %1888 = vadd.xlane.f32.xlu0 %v1887
        %v1889 = vpop.xlane.xlu0 %1888
        %v1890 = vsel %vm1183, %v1849, 0.0
        %1891 = vadd.xlane.f32.xlu0 %v1890
        %v1892 = vpop.xlane.xlu0 %1891
        %v1893 = vsel %vm1183, %v1851, 0.0
        %1894 = vadd.xlane.f32.xlu0 %v1893
        %v1895 = vpop.xlane.xlu0 %1894
        %v1896 = vsel %vm1183, %v1853, 0.0
        %1897 = vadd.xlane.f32.xlu0 %v1896
        %v1898 = vpop.xlane.xlu0 %1897
        %v1899 = vsel %vm1183, %v1855, 0.0
        %1900 = vadd.xlane.f32.xlu0 %v1899
        %v1901 = vpop.xlane.xlu0 %1900
        %v1902 = vsel %vm1183, %v1857, 0.0
        %1903 = vadd.xlane.f32.xlu0 %v1902
        %v1904 = vpop.xlane.xlu0 %1903
        %v1905 = vsel %vm1183, %v1859, 0.0
        %1906 = vadd.xlane.f32.xlu0 %v1905
        %v1907 = vpop.xlane.xlu0 %1906
        %v1908 = vrcp.pop %v1862
        %v1909 = vrcp.pop %v1865
        %v1910 = vrcp.pop %v1868
        %v1911 = vrcp.pop %v1871
        %v1912 = vrcp.pop %v1874
        %v1913 = vrcp.pop %v1877
        %v1914 = vrcp.pop %v1880
        %v1915 = vrcp.pop %v1883
        %v1916 = vrcp.pop %v1886
        %v1917 = vrcp.pop %v1889
        %v1918 = vrcp.pop %v1892
        %v1919 = vrcp.pop %v1895
        %v1920 = vrcp.pop %v1898
        %v1921 = vrcp.pop %v1901
        %v1922 = vrcp.pop %v1904
        %v1923 = vrcp.pop %v1907
        %v1924 = vmul.f32 %v1829, %v1908
        %v1925 = vmul.f32 %v1831, %v1909
        %v1926 = vmul.f32 %v1833, %v1910
        %v1927 = vmul.f32 %v1835, %v1911
        %v1928 = vmul.f32 %v1837, %v1912
        %v1929 = vmul.f32 %v1839, %v1913
        %v1930 = vmul.f32 %v1841, %v1914
        %v1931 = vmul.f32 %v1843, %v1915
        %v1932 = vmul.f32 %v1845, %v1916
        %v1933 = vmul.f32 %v1847, %v1917
        %v1934 = vmul.f32 %v1849, %v1918
        %v1935 = vmul.f32 %v1851, %v1919
        %v1936 = vmul.f32 %v1853, %v1920
        %v1937 = vmul.f32 %v1855, %v1921
        %v1938 = vmul.f32 %v1857, %v1922
        %v1939 = vmul.f32 %v1859, %v1923
        %v1940 = vpack.c.bf16 %v1925, %v1924
        %v1941 = vpack.c.bf16 %v1927, %v1926
        %v1942 = vpack.c.bf16 %v1929, %v1928
        %v1943 = vpack.c.bf16 %v1931, %v1930
        %v1944 = vpack.c.bf16 %v1933, %v1932
        %v1945 = vpack.c.bf16 %v1935, %v1934
        %v1946 = vpack.c.bf16 %v1937, %v1936
        %v1947 = vpack.c.bf16 %v1939, %v1938
        %1952 = vrot.lane.b32.xlu0 %v982, 96
        %v1953 = vpop.permute.xlu0 %1952
        %1954 = vrot.lane.b32.xlu0 %v985, 96
        %v1955 = vpop.permute.xlu0 %1954
        %1956 = vrot.lane.b32.xlu0 %v988, 96
        %v1957 = vpop.permute.xlu0 %1956
        %1958 = vrot.lane.b32.xlu0 %v991, 96
        %v1959 = vpop.permute.xlu0 %1958
        %v1965 = vsel %vm1183, %v1940, 0
        %v1968 = vsel %vm1183, %v1941, 0
        %v1971 = vsel %vm1183, %v1942, 0
        %v1974 = vsel %vm1183, %v1943, 0
        %1976 = vmatprep.subr.bf16.mxu0 0
        %1977 = vmatpush1.bf16.msra.mxu0 %v1953
        %1978 = vmatprep.subr.bf16.mxu0 0
        %1979 = vmatpush1.bf16.msra.mxu0 %v1955
        %1980 = vmatprep.subr.bf16.mxu0 0
        %1981 = vmatpush1.bf16.msra.mxu0 %v1957
        %1982 = vmatprep.subr.bf16.mxu0 0
        %1983 = vmatpush1.bf16.msra.mxu0 %v1959
        %1984 = vmatprep.subr.bf16.mxu0 0
        %1985 = vmatpush1.bf16.msra.mxu0 0
        %1986 = vmatprep.subr.bf16.mxu0 0
        %1987 = vmatpush1.bf16.msra.mxu0 0
        %1988 = vmatprep.subr.bf16.mxu0 0
        %1989 = vmatpush1.bf16.msra.mxu0 0
        %1990 = vmatprep.subr.bf16.mxu0 0
        %1991 = vmatpush1.bf16.msra.mxu0 0
        %1992 = vmatprep.subr.bf16.mxu0 0
        %1993 = vmatpush1.bf16.msra.mxu0 0
        %1994 = vmatprep.subr.bf16.mxu0 0
        %1995 = vmatpush1.bf16.msra.mxu0 0
        %1996 = vmatprep.subr.bf16.mxu0 0
        %1997 = vmatpush1.bf16.msra.mxu0 0
        %1998 = vmatprep.subr.bf16.mxu0 0
        %1999 = vmatpush1.bf16.msra.mxu0 0
        %2000 = vmatprep.subr.bf16.mxu0 0
        %2001 = vmatpush1.bf16.msra.mxu0 0
        %2002 = vmatprep.subr.bf16.mxu0 0
        %2003 = vmatpush1.bf16.msra.mxu0 0
        %2004 = vmatprep.subr.bf16.mxu0 0
        %2005 = vmatpush1.bf16.msra.mxu0 0
        %2006 = vmatprep.subr.bf16.mxu0 0
        %2007 = vmatpush1.bf16.msra.mxu0 0
        %2008 = vmatprep.mubr.bf16.mxu0 0
        %2009 = vmatmul.mubr.bf16.gmra.mrb[0].mxu0 %v1965
        %v2010 = vpop.f32.mrb[0].mxu0
        %v2011 = vadd.f32 0.0, %v2010
        %v2012 = vpop.f32.mrb[0].mxu0
        %v2013 = vpop.f32.mrb[0].mxu0
        %v2014 = vadd.f32 0.0, %v2013
        %v2015 = vpop.f32.mrb[0].mxu0
        %2016 = vmatprep.mubr.bf16.mxu0 0
        %2017 = vmatmul.mubr.bf16.gmra.mrb[0].mxu0 %v1968
        %v2018 = vpop.f32.mrb[0].mxu0
        %v2019 = vadd.f32 0.0, %v2018
        %v2020 = vpop.f32.mrb[0].mxu0
        %v2021 = vpop.f32.mrb[0].mxu0
        %v2022 = vadd.f32 0.0, %v2021
        %v2023 = vpop.f32.mrb[0].mxu0
        %2024 = vmatprep.mubr.bf16.mxu0 0
        %2025 = vmatmul.mubr.bf16.gmra.mrb[0].mxu0 %v1971
        %v2026 = vpop.f32.mrb[0].mxu0
        %v2027 = vadd.f32 0.0, %v2026
        %v2028 = vpop.f32.mrb[0].mxu0
        %v2029 = vpop.f32.mrb[0].mxu0
        %v2030 = vadd.f32 0.0, %v2029
        %v2031 = vpop.f32.mrb[0].mxu0
        %2032 = vmatprep.mubr.bf16.mxu0 0
        %2033 = vmatmul.mubr.bf16.gmra.mrb[0].mxu0 %v1974
        %v2034 = vpop.f32.mrb[0].mxu0
        %v2035 = vadd.f32 0.0, %v2034
        %v2036 = vpop.f32.mrb[0].mxu0
        %v2037 = vpop.f32.mrb[0].mxu0
        %v2038 = vadd.f32 0.0, %v2037
        %v2039 = vpop.f32.mrb[0].mxu0
        %2040 = vdwg.mxu0
        %2045 = vrot.lane.b32.xlu0 %v994, 96
        %v2046 = vpop.permute.xlu0 %2045
        %2047 = vrot.lane.b32.xlu0 %v997, 96
        %v2048 = vpop.permute.xlu0 %2047
        %2049 = vrot.lane.b32.xlu0 %v1000, 96
        %v2050 = vpop.permute.xlu0 %2049
        %2051 = vrot.lane.b32.xlu0 %v1003, 96
        %v2052 = vpop.permute.xlu0 %2051
        %v2058 = vsel %vm1183, %v1944, 0
        %v2061 = vsel %vm1183, %v1945, 0
        %v2064 = vsel %vm1183, %v1946, 0
        %v2067 = vsel %vm1183, %v1947, 0
        %2069 = vmatprep.subr.bf16.mxu0 0
        %2070 = vmatpush1.bf16.msra.mxu0 %v2046
        %2071 = vmatprep.subr.bf16.mxu0 0
        %2072 = vmatpush1.bf16.msra.mxu0 %v2048
        %2073 = vmatprep.subr.bf16.mxu0 0
        %2074 = vmatpush1.bf16.msra.mxu0 %v2050
        %2075 = vmatprep.subr.bf16.mxu0 0
        %2076 = vmatpush1.bf16.msra.mxu0 %v2052
        %2077 = vmatprep.subr.bf16.mxu0 0
        %2078 = vmatpush1.bf16.msra.mxu0 0
        %2079 = vmatprep.subr.bf16.mxu0 0
        %2080 = vmatpush1.bf16.msra.mxu0 0
        %2081 = vmatprep.subr.bf16.mxu0 0
        %2082 = vmatpush1.bf16.msra.mxu0 0
        %2083 = vmatprep.subr.bf16.mxu0 0
        %2084 = vmatpush1.bf16.msra.mxu0 0
        %2085 = vmatprep.subr.bf16.mxu0 0
        %2086 = vmatpush1.bf16.msra.mxu0 0
        %2087 = vmatprep.subr.bf16.mxu0 0
        %2088 = vmatpush1.bf16.msra.mxu0 0
        %2089 = vmatprep.subr.bf16.mxu0 0
        %2090 = vmatpush1.bf16.msra.mxu0 0
        %2091 = vmatprep.subr.bf16.mxu0 0
        %2092 = vmatpush1.bf16.msra.mxu0 0
        %2093 = vmatprep.subr.bf16.mxu0 0
        %2094 = vmatpush1.bf16.msra.mxu0 0
        %2095 = vmatprep.subr.bf16.mxu0 0
        %2096 = vmatpush1.bf16.msra.mxu0 0
        %2097 = vmatprep.subr.bf16.mxu0 0
        %2098 = vmatpush1.bf16.msra.mxu0 0
        %2099 = vmatprep.subr.bf16.mxu0 0
        %2100 = vmatpush1.bf16.msra.mxu0 0
        %2101 = vmatprep.mubr.bf16.mxu0 0
        %2102 = vmatmul.mubr.bf16.gmra.mrb[0].mxu0 %v2058
        %v2103 = vpop.f32.mrb[0].mxu0
        %v2104 = vadd.f32 0.0, %v2103
        %v2105 = vpop.f32.mrb[0].mxu0
        %v2106 = vpop.f32.mrb[0].mxu0
        %v2107 = vadd.f32 0.0, %v2106
        %v2108 = vpop.f32.mrb[0].mxu0
        %2109 = vmatprep.mubr.bf16.mxu0 0
        %2110 = vmatmul.mubr.bf16.gmra.mrb[0].mxu0 %v2061
        %v2111 = vpop.f32.mrb[0].mxu0
        %v2112 = vadd.f32 0.0, %v2111
        %v2113 = vpop.f32.mrb[0].mxu0
        %v2114 = vpop.f32.mrb[0].mxu0
        %v2115 = vadd.f32 0.0, %v2114
        %v2116 = vpop.f32.mrb[0].mxu0
        %2117 = vmatprep.mubr.bf16.mxu0 0
        %2118 = vmatmul.mubr.bf16.gmra.mrb[0].mxu0 %v2064
        %v2119 = vpop.f32.mrb[0].mxu0
        %v2120 = vadd.f32 0.0, %v2119
        %v2121 = vpop.f32.mrb[0].mxu0
        %v2122 = vpop.f32.mrb[0].mxu0
        %v2123 = vadd.f32 0.0, %v2122
        %v2124 = vpop.f32.mrb[0].mxu0
        %2125 = vmatprep.mubr.bf16.mxu0 0
        %2126 = vmatmul.mubr.bf16.gmra.mrb[0].mxu0 %v2067
        %v2127 = vpop.f32.mrb[0].mxu0
        %v2128 = vadd.f32 0.0, %v2127
        %v2129 = vpop.f32.mrb[0].mxu0
        %v2130 = vpop.f32.mrb[0].mxu0
        %v2131 = vadd.f32 0.0, %v2130
        %v2132 = vpop.f32.mrb[0].mxu0
        %2133 = vdwg.mxu0
        %v2134 = vpack.c.bf16 %v2014, %v2011
        %v2135 = vpack.c.bf16 %v2022, %v2019
        %v2136 = vpack.c.bf16 %v2030, %v2027
        %v2137 = vpack.c.bf16 %v2038, %v2035
        %v2138 = vpack.c.bf16 %v2107, %v2104
        %v2139 = vpack.c.bf16 %v2115, %v2112
        %v2140 = vpack.c.bf16 %v2123, %v2120
        %v2141 = vpack.c.bf16 %v2131, %v2128
        %2150 = vrot.lane.b32.xlu0 %v2134, 32
        %v2151 = vpop.permute.xlu0 %2150
        %2152 = vrot.lane.b32.xlu0 %v2135, 32
        %v2153 = vpop.permute.xlu0 %2152
        %2154 = vrot.lane.b32.xlu0 %v2136, 32
        %v2155 = vpop.permute.xlu0 %2154
        %2156 = vrot.lane.b32.xlu0 %v2137, 32
        %v2157 = vpop.permute.xlu0 %2156
        %2158 = vrot.lane.b32.xlu0 %v2138, 32
        %v2159 = vpop.permute.xlu0 %2158
        %2160 = vrot.lane.b32.xlu0 %v2139, 32
        %v2161 = vpop.permute.xlu0 %2160
        %2162 = vrot.lane.b32.xlu0 %v2140, 32
        %v2163 = vpop.permute.xlu0 %2162
        %2164 = vrot.lane.b32.xlu0 %v2141, 32
        %v2165 = vpop.permute.xlu0 %2164
        %vm2174 = vcmask 523520
        %2175 = vst.msk [vmem:[#allocation2] sm:$0xff] %vm2174, %v2151
        %2176 = vst.msk [vmem:[#allocation2 + $0x8] sm:$0xff] %vm2174, %v2153
        %2177 = vst.msk [vmem:[#allocation2 + $0x10] sm:$0xff] %vm2174, %v2155
        %2178 = vst.msk [vmem:[#allocation2 + $0x18] sm:$0xff] %vm2174, %v2157
        %2179 = vst.msk [vmem:[#allocation2 + $0x20] sm:$0xff] %vm2174, %v2159
        %2180 = vst.msk [vmem:[#allocation2 + $0x28] sm:$0xff] %vm2174, %v2161
        %2181 = vst.msk [vmem:[#allocation2 + $0x30] sm:$0xff] %vm2174, %v2163
        %2182 = vst.msk [vmem:[#allocation2 + $0x38] sm:$0xff] %vm2174, %v2165
        %2183 = vrot.lane.b32.xlu0 %v980, 64
        %v2184 = vpop.permute.xlu0 %2183
        %2185 = vrot.lane.b32.xlu0 %v983, 64
        %v2186 = vpop.permute.xlu0 %2185
        %2187 = vrot.lane.b32.xlu0 %v986, 64
        %v2188 = vpop.permute.xlu0 %2187
        %2189 = vrot.lane.b32.xlu0 %v989, 64
        %v2190 = vpop.permute.xlu0 %2189
        %2191 = vrot.lane.b32.xlu0 %v981, 64
        %v2192 = vpop.permute.xlu0 %2191
        %2193 = vrot.lane.b32.xlu0 %v984, 64
        %v2194 = vpop.permute.xlu0 %2193
        %2195 = vrot.lane.b32.xlu0 %v987, 64
        %v2196 = vpop.permute.xlu0 %2195
        %2197 = vrot.lane.b32.xlu0 %v990, 64
        %v2198 = vpop.permute.xlu0 %2197
        %v2200 = vsel %vm1004, %v2184, 0
        %v2203 = vsel %vm1004, %v2186, 0
        %v2206 = vsel %vm1004, %v2188, 0
        %v2209 = vsel %vm1004, %v2190, 0
        %v2212 = vsel %vm1004, %v2192, 0
        %v2215 = vsel %vm1004, %v2194, 0
        %v2218 = vsel %vm1004, %v2196, 0
        %v2221 = vsel %vm1004, %v2198, 0
        %2223 = vmatprep.subr.bf16.mxu0 0
        %2224 = vmatpush1.bf16.xpose.msra.mxu0 %v2212
        %2225 = vmatprep.subr.bf16.mxu0 0
        %2226 = vmatpush1.bf16.xpose.msra.mxu0 %v2215
        %2227 = vmatprep.subr.bf16.mxu0 0
        %2228 = vmatpush1.bf16.xpose.msra.mxu0 %v2218
        %2229 = vmatprep.subr.bf16.mxu0 0
        %2230 = vmatpush1.bf16.xpose.msra.mxu0 %v2221
        %2231 = vmatprep.subr.bf16.mxu0 0
        %2232 = vmatpush1.bf16.xpose.msra.mxu0 0
        %2233 = vmatprep.subr.bf16.mxu0 0
        %2234 = vmatpush1.bf16.xpose.msra.mxu0 0
        %2235 = vmatprep.subr.bf16.mxu0 0
        %2236 = vmatpush1.bf16.xpose.msra.mxu0 0
        %2237 = vmatprep.subr.bf16.mxu0 0
        %2238 = vmatpush1.bf16.xpose.msra.mxu0 0
        %2239 = vmatprep.subr.bf16.mxu0 0
        %2240 = vmatpush1.bf16.xpose.msra.mxu0 0
        %2241 = vmatprep.subr.bf16.mxu0 0
        %2242 = vmatpush1.bf16.xpose.msra.mxu0 0
        %2243 = vmatprep.subr.bf16.mxu0 0
        %2244 = vmatpush1.bf16.xpose.msra.mxu0 0
        %2245 = vmatprep.subr.bf16.mxu0 0
        %2246 = vmatpush1.bf16.xpose.msra.mxu0 0
        %2247 = vmatprep.subr.bf16.mxu0 0
        %2248 = vmatpush1.bf16.xpose.msra.mxu0 0
        %2249 = vmatprep.subr.bf16.mxu0 0
        %2250 = vmatpush1.bf16.xpose.msra.mxu0 0
        %2251 = vmatprep.subr.bf16.mxu0 0
        %2252 = vmatpush1.bf16.xpose.msra.mxu0 0
        %2253 = vmatprep.subr.bf16.mxu0 0
        %2254 = vmatpush1.bf16.xpose.msra.mxu0 0
        %2255 = vmatprep.mubr.bf16.mxu0 0
        %2256 = vmatmul.mubr.bf16.gmra.mrb[0].mxu0 %v2200
        %v2257 = vpop.f32.mrb[0].mxu0
        %v2258 = vadd.f32 0.0, %v2257
        %v2259 = vpop.f32.mrb[0].mxu0
        %v2260 = vpop.f32.mrb[0].mxu0
        %v2261 = vadd.f32 0.0, %v2260
        %v2262 = vpop.f32.mrb[0].mxu0
        %2263 = vmatprep.mubr.bf16.mxu0 0
        %2264 = vmatmul.mubr.bf16.gmra.mrb[0].mxu0 %v2203
        %v2265 = vpop.f32.mrb[0].mxu0
        %v2266 = vadd.f32 0.0, %v2265
        %v2267 = vpop.f32.mrb[0].mxu0
        %v2268 = vpop.f32.mrb[0].mxu0
        %v2269 = vadd.f32 0.0, %v2268
        %v2270 = vpop.f32.mrb[0].mxu0
        %2271 = vmatprep.mubr.bf16.mxu0 0
        %2272 = vmatmul.mubr.bf16.gmra.mrb[0].mxu0 %v2206
        %v2273 = vpop.f32.mrb[0].mxu0
        %v2274 = vadd.f32 0.0, %v2273
        %v2275 = vpop.f32.mrb[0].mxu0
        %v2276 = vpop.f32.mrb[0].mxu0
        %v2277 = vadd.f32 0.0, %v2276
        %v2278 = vpop.f32.mrb[0].mxu0
        %2279 = vmatprep.mubr.bf16.mxu0 0
        %2280 = vmatmul.mubr.bf16.gmra.mrb[0].mxu0 %v2209
        %v2281 = vpop.f32.mrb[0].mxu0
        %v2282 = vadd.f32 0.0, %v2281
        %v2283 = vpop.f32.mrb[0].mxu0
        %v2284 = vpop.f32.mrb[0].mxu0
        %v2285 = vadd.f32 0.0, %v2284
        %v2286 = vpop.f32.mrb[0].mxu0
        %2287 = vdwg.mxu0
        %2288 = vrot.lane.b32.xlu0 %v992, 64
        %v2289 = vpop.permute.xlu0 %2288
        %2290 = vrot.lane.b32.xlu0 %v995, 64
        %v2291 = vpop.permute.xlu0 %2290
        %2292 = vrot.lane.b32.xlu0 %v998, 64
        %v2293 = vpop.permute.xlu0 %2292
        %2294 = vrot.lane.b32.xlu0 %v1001, 64
        %v2295 = vpop.permute.xlu0 %2294
        %2296 = vrot.lane.b32.xlu0 %v993, 64
        %v2297 = vpop.permute.xlu0 %2296
        %2298 = vrot.lane.b32.xlu0 %v996, 64
        %v2299 = vpop.permute.xlu0 %2298
        %2300 = vrot.lane.b32.xlu0 %v999, 64
        %v2301 = vpop.permute.xlu0 %2300
        %2302 = vrot.lane.b32.xlu0 %v1002, 64
        %v2303 = vpop.permute.xlu0 %2302
        %v2305 = vsel %vm1004, %v2289, 0
        %v2308 = vsel %vm1004, %v2291, 0
        %v2311 = vsel %vm1004, %v2293, 0
        %v2314 = vsel %vm1004, %v2295, 0
        %v2317 = vsel %vm1004, %v2297, 0
        %v2320 = vsel %vm1004, %v2299, 0
        %v2323 = vsel %vm1004, %v2301, 0
        %v2326 = vsel %vm1004, %v2303, 0
        %2328 = vmatprep.subr.bf16.mxu0 0
        %2329 = vmatpush1.bf16.xpose.msra.mxu0 %v2317
        %2330 = vmatprep.subr.bf16.mxu0 0
        %2331 = vmatpush1.bf16.xpose.msra.mxu0 %v2320
        %2332 = vmatprep.subr.bf16.mxu0 0
        %2333 = vmatpush1.bf16.xpose.msra.mxu0 %v2323
        %2334 = vmatprep.subr.bf16.mxu0 0
        %2335 = vmatpush1.bf16.xpose.msra.mxu0 %v2326
        %2336 = vmatprep.subr.bf16.mxu0 0
        %2337 = vmatpush1.bf16.xpose.msra.mxu0 0
        %2338 = vmatprep.subr.bf16.mxu0 0
        %2339 = vmatpush1.bf16.xpose.msra.mxu0 0
        %2340 = vmatprep.subr.bf16.mxu0 0
        %2341 = vmatpush1.bf16.xpose.msra.mxu0 0
        %2342 = vmatprep.subr.bf16.mxu0 0
        %2343 = vmatpush1.bf16.xpose.msra.mxu0 0
        %2344 = vmatprep.subr.bf16.mxu0 0
        %2345 = vmatpush1.bf16.xpose.msra.mxu0 0
        %2346 = vmatprep.subr.bf16.mxu0 0
        %2347 = vmatpush1.bf16.xpose.msra.mxu0 0
        %2348 = vmatprep.subr.bf16.mxu0 0
        %2349 = vmatpush1.bf16.xpose.msra.mxu0 0
        %2350 = vmatprep.subr.bf16.mxu0 0
        %2351 = vmatpush1.bf16.xpose.msra.mxu0 0
        %2352 = vmatprep.subr.bf16.mxu0 0
        %2353 = vmatpush1.bf16.xpose.msra.mxu0 0
        %2354 = vmatprep.subr.bf16.mxu0 0
        %2355 = vmatpush1.bf16.xpose.msra.mxu0 0
        %2356 = vmatprep.subr.bf16.mxu0 0
        %2357 = vmatpush1.bf16.xpose.msra.mxu0 0
        %2358 = vmatprep.subr.bf16.mxu0 0
        %2359 = vmatpush1.bf16.xpose.msra.mxu0 0
        %2360 = vmatprep.mubr.bf16.mxu0 0
        %2361 = vmatmul.mubr.bf16.gmra.mrb[0].mxu0 %v2305
        %v2362 = vpop.f32.mrb[0].mxu0
        %v2363 = vadd.f32 0.0, %v2362
        %v2364 = vpop.f32.mrb[0].mxu0
        %v2365 = vpop.f32.mrb[0].mxu0
        %v2366 = vadd.f32 0.0, %v2365
        %v2367 = vpop.f32.mrb[0].mxu0
        %2368 = vmatprep.mubr.bf16.mxu0 0
        %2369 = vmatmul.mubr.bf16.gmra.mrb[0].mxu0 %v2308
        %v2370 = vpop.f32.mrb[0].mxu0
        %v2371 = vadd.f32 0.0, %v2370
        %v2372 = vpop.f32.mrb[0].mxu0
        %v2373 = vpop.f32.mrb[0].mxu0
        %v2374 = vadd.f32 0.0, %v2373
        %v2375 = vpop.f32.mrb[0].mxu0
        %2376 = vmatprep.mubr.bf16.mxu0 0
        %2377 = vmatmul.mubr.bf16.gmra.mrb[0].mxu0 %v2311
        %v2378 = vpop.f32.mrb[0].mxu0
        %v2379 = vadd.f32 0.0, %v2378
        %v2380 = vpop.f32.mrb[0].mxu0
        %v2381 = vpop.f32.mrb[0].mxu0
        %v2382 = vadd.f32 0.0, %v2381
        %v2383 = vpop.f32.mrb[0].mxu0
        %2384 = vmatprep.mubr.bf16.mxu0 0
        %2385 = vmatmul.mubr.bf16.gmra.mrb[0].mxu0 %v2314
        %v2386 = vpop.f32.mrb[0].mxu0
        %v2387 = vadd.f32 0.0, %v2386
        %v2388 = vpop.f32.mrb[0].mxu0
        %v2389 = vpop.f32.mrb[0].mxu0
        %v2390 = vadd.f32 0.0, %v2389
        %v2391 = vpop.f32.mrb[0].mxu0
        %2392 = vdwg.mxu0
        %v2393 = vsel %vm1183, %v2258, -inf
        %2394 = vmax.xlane.f32.xlu0 %v2393
        %v2395 = vpop.xlane.xlu0 %2394
        %v2396 = vsel %vm1183, %v2261, -inf
        %2397 = vmax.xlane.f32.xlu0 %v2396
        %v2398 = vpop.xlane.xlu0 %2397
        %v2399 = vsel %vm1183, %v2266, -inf
        %2400 = vmax.xlane.f32.xlu0 %v2399
        %v2401 = vpop.xlane.xlu0 %2400
        %v2402 = vsel %vm1183, %v2269, -inf
        %2403 = vmax.xlane.f32.xlu0 %v2402
        %v2404 = vpop.xlane.xlu0 %2403
        %v2405 = vsel %vm1183, %v2274, -inf
        %2406 = vmax.xlane.f32.xlu0 %v2405
        %v2407 = vpop.xlane.xlu0 %2406
        %v2408 = vsel %vm1183, %v2277, -inf
        %2409 = vmax.xlane.f32.xlu0 %v2408
        %v2410 = vpop.xlane.xlu0 %2409
        %v2411 = vsel %vm1183, %v2282, -inf
        %2412 = vmax.xlane.f32.xlu0 %v2411
        %v2413 = vpop.xlane.xlu0 %2412
        %v2414 = vsel %vm1183, %v2285, -inf
        %2415 = vmax.xlane.f32.xlu0 %v2414
        %v2416 = vpop.xlane.xlu0 %2415
        %v2417 = vsel %vm1183, %v2363, -inf
        %2418 = vmax.xlane.f32.xlu0 %v2417
        %v2419 = vpop.xlane.xlu0 %2418
        %v2420 = vsel %vm1183, %v2366, -inf
        %2421 = vmax.xlane.f32.xlu0 %v2420
        %v2422 = vpop.xlane.xlu0 %2421
        %v2423 = vsel %vm1183, %v2371, -inf
        %2424 = vmax.xlane.f32.xlu0 %v2423
        %v2425 = vpop.xlane.xlu0 %2424
        %v2426 = vsel %vm1183, %v2374, -inf
        %2427 = vmax.xlane.f32.xlu0 %v2426
        %v2428 = vpop.xlane.xlu0 %2427
        %v2429 = vsel %vm1183, %v2379, -inf
        %2430 = vmax.xlane.f32.xlu0 %v2429
        %v2431 = vpop.xlane.xlu0 %2430
        %v2432 = vsel %vm1183, %v2382, -inf
        %2433 = vmax.xlane.f32.xlu0 %v2432
        %v2434 = vpop.xlane.xlu0 %2433
        %v2435 = vsel %vm1183, %v2387, -inf
        %2436 = vmax.xlane.f32.xlu0 %v2435
        %v2437 = vpop.xlane.xlu0 %2436
        %v2438 = vsel %vm1183, %v2390, -inf
        %2439 = vmax.xlane.f32.xlu0 %v2438
        %v2440 = vpop.xlane.xlu0 %2439
        %v2441 = vsub.f32 %v2258, %v2395
        %v2442 = vsub.f32 %v2261, %v2398
        %v2443 = vsub.f32 %v2266, %v2401
        %v2444 = vsub.f32 %v2269, %v2404
        %v2445 = vsub.f32 %v2274, %v2407
        %v2446 = vsub.f32 %v2277, %v2410
        %v2447 = vsub.f32 %v2282, %v2413
        %v2448 = vsub.f32 %v2285, %v2416
        %v2449 = vsub.f32 %v2363, %v2419
        %v2450 = vsub.f32 %v2366, %v2422
        %v2451 = vsub.f32 %v2371, %v2425
        %v2452 = vsub.f32 %v2374, %v2428
        %v2453 = vsub.f32 %v2379, %v2431
        %v2454 = vsub.f32 %v2382, %v2434
        %v2455 = vsub.f32 %v2387, %v2437
        %v2456 = vsub.f32 %v2390, %v2440
        %v2457 = vmul.f32 %v2441, 1.442695
        %v2458 = vpow.pop %v2457
        %v2459 = vmul.f32 %v2442, 1.442695
        %v2460 = vpow.pop %v2459
        %v2461 = vmul.f32 %v2443, 1.442695
        %v2462 = vpow.pop %v2461
        %v2463 = vmul.f32 %v2444, 1.442695
        %v2464 = vpow.pop %v2463
        %v2465 = vmul.f32 %v2445, 1.442695
        %v2466 = vpow.pop %v2465
        %v2467 = vmul.f32 %v2446, 1.442695
        %v2468 = vpow.pop %v2467
        %v2469 = vmul.f32 %v2447, 1.442695
        %v2470 = vpow.pop %v2469
        %v2471 = vmul.f32 %v2448, 1.442695
        %v2472 = vpow.pop %v2471
        %v2473 = vmul.f32 %v2449, 1.442695
        %v2474 = vpow.pop %v2473
        %v2475 = vmul.f32 %v2450, 1.442695
        %v2476 = vpow.pop %v2475
        %v2477 = vmul.f32 %v2451, 1.442695
        %v2478 = vpow.pop %v2477
        %v2479 = vmul.f32 %v2452, 1.442695
        %v2480 = vpow.pop %v2479
        %v2481 = vmul.f32 %v2453, 1.442695
        %v2482 = vpow.pop %v2481
        %v2483 = vmul.f32 %v2454, 1.442695
        %v2484 = vpow.pop %v2483
        %v2485 = vmul.f32 %v2455, 1.442695
        %v2486 = vpow.pop %v2485
        %v2487 = vmul.f32 %v2456, 1.442695
        %v2488 = vpow.pop %v2487
        %v2489 = vsel %vm1183, %v2458, 0.0
        %2490 = vadd.xlane.f32.xlu0 %v2489
        %v2491 = vpop.xlane.xlu0 %2490
        %v2492 = vsel %vm1183, %v2460, 0.0
        %2493 = vadd.xlane.f32.xlu0 %v2492
        %v2494 = vpop.xlane.xlu0 %2493
        %v2495 = vsel %vm1183, %v2462, 0.0
        %2496 = vadd.xlane.f32.xlu0 %v2495
        %v2497 = vpop.xlane.xlu0 %2496
        %v2498 = vsel %vm1183, %v2464, 0.0
        %2499 = vadd.xlane.f32.xlu0 %v2498
        %v2500 = vpop.xlane.xlu0 %2499
        %v2501 = vsel %vm1183, %v2466, 0.0
        %2502 = vadd.xlane.f32.xlu0 %v2501
        %v2503 = vpop.xlane.xlu0 %2502
        %v2504 = vsel %vm1183, %v2468, 0.0
        %2505 = vadd.xlane.f32.xlu0 %v2504
        %v2506 = vpop.xlane.xlu0 %2505
        %v2507 = vsel %vm1183, %v2470, 0.0
        %2508 = vadd.xlane.f32.xlu0 %v2507
        %v2509 = vpop.xlane.xlu0 %2508
        %v2510 = vsel %vm1183, %v2472, 0.0
        %2511 = vadd.xlane.f32.xlu0 %v2510
        %v2512 = vpop.xlane.xlu0 %2511
        %v2513 = vsel %vm1183, %v2474, 0.0
        %2514 = vadd.xlane.f32.xlu0 %v2513
        %v2515 = vpop.xlane.xlu0 %2514
        %v2516 = vsel %vm1183, %v2476, 0.0
        %2517 = vadd.xlane.f32.xlu0 %v2516
        %v2518 = vpop.xlane.xlu0 %2517
        %v2519 = vsel %vm1183, %v2478, 0.0
        %2520 = vadd.xlane.f32.xlu0 %v2519
        %v2521 = vpop.xlane.xlu0 %2520
        %v2522 = vsel %vm1183, %v2480, 0.0
        %2523 = vadd.xlane.f32.xlu0 %v2522
        %v2524 = vpop.xlane.xlu0 %2523
        %v2525 = vsel %vm1183, %v2482, 0.0
        %2526 = vadd.xlane.f32.xlu0 %v2525
        %v2527 = vpop.xlane.xlu0 %2526
        %v2528 = vsel %vm1183, %v2484, 0.0
        %2529 = vadd.xlane.f32.xlu0 %v2528
        %v2530 = vpop.xlane.xlu0 %2529
        %v2531 = vsel %vm1183, %v2486, 0.0
        %2532 = vadd.xlane.f32.xlu0 %v2531
        %v2533 = vpop.xlane.xlu0 %2532
        %v2534 = vsel %vm1183, %v2488, 0.0
        %2535 = vadd.xlane.f32.xlu0 %v2534
        %v2536 = vpop.xlane.xlu0 %2535
        %v2537 = vrcp.pop %v2491
        %v2538 = vrcp.pop %v2494
        %v2539 = vrcp.pop %v2497
        %v2540 = vrcp.pop %v2500
        %v2541 = vrcp.pop %v2503
        %v2542 = vrcp.pop %v2506
        %v2543 = vrcp.pop %v2509
        %v2544 = vrcp.pop %v2512
        %v2545 = vrcp.pop %v2515
        %v2546 = vrcp.pop %v2518
        %v2547 = vrcp.pop %v2521
        %v2548 = vrcp.pop %v2524
        %v2549 = vrcp.pop %v2527
        %v2550 = vrcp.pop %v2530
        %v2551 = vrcp.pop %v2533
        %v2552 = vrcp.pop %v2536
        %v2553 = vmul.f32 %v2458, %v2537
        %v2554 = vmul.f32 %v2460, %v2538
        %v2555 = vmul.f32 %v2462, %v2539
        %v2556 = vmul.f32 %v2464, %v2540
        %v2557 = vmul.f32 %v2466, %v2541
        %v2558 = vmul.f32 %v2468, %v2542
        %v2559 = vmul.f32 %v2470, %v2543
        %v2560 = vmul.f32 %v2472, %v2544
        %v2561 = vmul.f32 %v2474, %v2545
        %v2562 = vmul.f32 %v2476, %v2546
        %v2563 = vmul.f32 %v2478, %v2547
        %v2564 = vmul.f32 %v2480, %v2548
        %v2565 = vmul.f32 %v2482, %v2549
        %v2566 = vmul.f32 %v2484, %v2550
        %v2567 = vmul.f32 %v2486, %v2551
        %v2568 = vmul.f32 %v2488, %v2552
        %v2569 = vpack.c.bf16 %v2554, %v2553
        %v2570 = vpack.c.bf16 %v2556, %v2555
        %v2571 = vpack.c.bf16 %v2558, %v2557
        %v2572 = vpack.c.bf16 %v2560, %v2559
        %v2573 = vpack.c.bf16 %v2562, %v2561
        %v2574 = vpack.c.bf16 %v2564, %v2563
        %v2575 = vpack.c.bf16 %v2566, %v2565
        %v2576 = vpack.c.bf16 %v2568, %v2567
        %2577 = vrot.lane.b32.xlu0 %v982, 64
        %v2578 = vpop.permute.xlu0 %2577
        %2579 = vrot.lane.b32.xlu0 %v985, 64
        %v2580 = vpop.permute.xlu0 %2579
        %2581 = vrot.lane.b32.xlu0 %v988, 64
        %v2582 = vpop.permute.xlu0 %2581
        %2583 = vrot.lane.b32.xlu0 %v991, 64
        %v2584 = vpop.permute.xlu0 %2583
        %v2590 = vsel %vm1183, %v2569, 0
        %v2593 = vsel %vm1183, %v2570, 0
        %v2596 = vsel %vm1183, %v2571, 0
        %v2599 = vsel %vm1183, %v2572, 0
        %2601 = vmatprep.subr.bf16.mxu0 0
        %2602 = vmatpush1.bf16.msra.mxu0 %v2578
        %2603 = vmatprep.subr.bf16.mxu0 0
        %2604 = vmatpush1.bf16.msra.mxu0 %v2580
        %2605 = vmatprep.subr.bf16.mxu0 0
        %2606 = vmatpush1.bf16.msra.mxu0 %v2582
        %2607 = vmatprep.subr.bf16.mxu0 0
        %2608 = vmatpush1.bf16.msra.mxu0 %v2584
        %2609 = vmatprep.subr.bf16.mxu0 0
        %2610 = vmatpush1.bf16.msra.mxu0 0
        %2611 = vmatprep.subr.bf16.mxu0 0
        %2612 = vmatpush1.bf16.msra.mxu0 0
        %2613 = vmatprep.subr.bf16.mxu0 0
        %2614 = vmatpush1.bf16.msra.mxu0 0
        %2615 = vmatprep.subr.bf16.mxu0 0
        %2616 = vmatpush1.bf16.msra.mxu0 0
        %2617 = vmatprep.subr.bf16.mxu0 0
        %2618 = vmatpush1.bf16.msra.mxu0 0
        %2619 = vmatprep.subr.bf16.mxu0 0
        %2620 = vmatpush1.bf16.msra.mxu0 0
        %2621 = vmatprep.subr.bf16.mxu0 0
        %2622 = vmatpush1.bf16.msra.mxu0 0
        %2623 = vmatprep.subr.bf16.mxu0 0
        %2624 = vmatpush1.bf16.msra.mxu0 0
        %2625 = vmatprep.subr.bf16.mxu0 0
        %2626 = vmatpush1.bf16.msra.mxu0 0
        %2627 = vmatprep.subr.bf16.mxu0 0
        %2628 = vmatpush1.bf16.msra.mxu0 0
        %2629 = vmatprep.subr.bf16.mxu0 0
        %2630 = vmatpush1.bf16.msra.mxu0 0
        %2631 = vmatprep.subr.bf16.mxu0 0
        %2632 = vmatpush1.bf16.msra.mxu0 0
        %2633 = vmatprep.mubr.bf16.mxu0 0
        %2634 = vmatmul.mubr.bf16.gmra.mrb[0].mxu0 %v2590
        %v2635 = vpop.f32.mrb[0].mxu0
        %v2636 = vadd.f32 0.0, %v2635
        %v2637 = vpop.f32.mrb[0].mxu0
        %v2638 = vpop.f32.mrb[0].mxu0
        %v2639 = vadd.f32 0.0, %v2638
        %v2640 = vpop.f32.mrb[0].mxu0
        %2641 = vmatprep.mubr.bf16.mxu0 0
        %2642 = vmatmul.mubr.bf16.gmra.mrb[0].mxu0 %v2593
        %v2643 = vpop.f32.mrb[0].mxu0
        %v2644 = vadd.f32 0.0, %v2643
        %v2645 = vpop.f32.mrb[0].mxu0
        %v2646 = vpop.f32.mrb[0].mxu0
        %v2647 = vadd.f32 0.0, %v2646
        %v2648 = vpop.f32.mrb[0].mxu0
        %2649 = vmatprep.mubr.bf16.mxu0 0
        %2650 = vmatmul.mubr.bf16.gmra.mrb[0].mxu0 %v2596
        %v2651 = vpop.f32.mrb[0].mxu0
        %v2652 = vadd.f32 0.0, %v2651
        %v2653 = vpop.f32.mrb[0].mxu0
        %v2654 = vpop.f32.mrb[0].mxu0
        %v2655 = vadd.f32 0.0, %v2654
        %v2656 = vpop.f32.mrb[0].mxu0
        %2657 = vmatprep.mubr.bf16.mxu0 0
        %2658 = vmatmul.mubr.bf16.gmra.mrb[0].mxu0 %v2599
        %v2659 = vpop.f32.mrb[0].mxu0
        %v2660 = vadd.f32 0.0, %v2659
        %v2661 = vpop.f32.mrb[0].mxu0
        %v2662 = vpop.f32.mrb[0].mxu0
        %v2663 = vadd.f32 0.0, %v2662
        %v2664 = vpop.f32.mrb[0].mxu0
        %2665 = vdwg.mxu0
        %2666 = vrot.lane.b32.xlu0 %v994, 64
        %v2667 = vpop.permute.xlu0 %2666
        %2668 = vrot.lane.b32.xlu0 %v997, 64
        %v2669 = vpop.permute.xlu0 %2668
        %2670 = vrot.lane.b32.xlu0 %v1000, 64
        %v2671 = vpop.permute.xlu0 %2670
        %2672 = vrot.lane.b32.xlu0 %v1003, 64
        %v2673 = vpop.permute.xlu0 %2672
        %v2679 = vsel %vm1183, %v2573, 0
        %v2682 = vsel %vm1183, %v2574, 0
        %v2685 = vsel %vm1183, %v2575, 0
        %v2688 = vsel %vm1183, %v2576, 0
        %2690 = vmatprep.subr.bf16.mxu0 0
        %2691 = vmatpush1.bf16.msra.mxu0 %v2667
        %2692 = vmatprep.subr.bf16.mxu0 0
        %2693 = vmatpush1.bf16.msra.mxu0 %v2669
        %2694 = vmatprep.subr.bf16.mxu0 0
        %2695 = vmatpush1.bf16.msra.mxu0 %v2671
        %2696 = vmatprep.subr.bf16.mxu0 0
        %2697 = vmatpush1.bf16.msra.mxu0 %v2673
        %2698 = vmatprep.subr.bf16.mxu0 0
        %2699 = vmatpush1.bf16.msra.mxu0 0
        %2700 = vmatprep.subr.bf16.mxu0 0
        %2701 = vmatpush1.bf16.msra.mxu0 0
        %2702 = vmatprep.subr.bf16.mxu0 0
        %2703 = vmatpush1.bf16.msra.mxu0 0
        %2704 = vmatprep.subr.bf16.mxu0 0
        %2705 = vmatpush1.bf16.msra.mxu0 0
        %2706 = vmatprep.subr.bf16.mxu0 0
        %2707 = vmatpush1.bf16.msra.mxu0 0
        %2708 = vmatprep.subr.bf16.mxu0 0
        %2709 = vmatpush1.bf16.msra.mxu0 0
        %2710 = vmatprep.subr.bf16.mxu0 0
        %2711 = vmatpush1.bf16.msra.mxu0 0
        %2712 = vmatprep.subr.bf16.mxu0 0
        %2713 = vmatpush1.bf16.msra.mxu0 0
        %2714 = vmatprep.subr.bf16.mxu0 0
        %2715 = vmatpush1.bf16.msra.mxu0 0
        %2716 = vmatprep.subr.bf16.mxu0 0
        %2717 = vmatpush1.bf16.msra.mxu0 0
        %2718 = vmatprep.subr.bf16.mxu0 0
        %2719 = vmatpush1.bf16.msra.mxu0 0
        %2720 = vmatprep.subr.bf16.mxu0 0
        %2721 = vmatpush1.bf16.msra.mxu0 0
        %2722 = vmatprep.mubr.bf16.mxu0 0
        %2723 = vmatmul.mubr.bf16.gmra.mrb[0].mxu0 %v2679
        %v2724 = vpop.f32.mrb[0].mxu0
        %v2725 = vadd.f32 0.0, %v2724
        %v2726 = vpop.f32.mrb[0].mxu0
        %v2727 = vpop.f32.mrb[0].mxu0
        %v2728 = vadd.f32 0.0, %v2727
        %v2729 = vpop.f32.mrb[0].mxu0
        %2730 = vmatprep.mubr.bf16.mxu0 0
        %2731 = vmatmul.mubr.bf16.gmra.mrb[0].mxu0 %v2682
        %v2732 = vpop.f32.mrb[0].mxu0
        %v2733 = vadd.f32 0.0, %v2732
        %v2734 = vpop.f32.mrb[0].mxu0
        %v2735 = vpop.f32.mrb[0].mxu0
        %v2736 = vadd.f32 0.0, %v2735
        %v2737 = vpop.f32.mrb[0].mxu0
        %2738 = vmatprep.mubr.bf16.mxu0 0
        %2739 = vmatmul.mubr.bf16.gmra.mrb[0].mxu0 %v2685
        %v2740 = vpop.f32.mrb[0].mxu0
        %v2741 = vadd.f32 0.0, %v2740
        %v2742 = vpop.f32.mrb[0].mxu0
        %v2743 = vpop.f32.mrb[0].mxu0
        %v2744 = vadd.f32 0.0, %v2743
        %v2745 = vpop.f32.mrb[0].mxu0
        %2746 = vmatprep.mubr.bf16.mxu0 0
        %2747 = vmatmul.mubr.bf16.gmra.mrb[0].mxu0 %v2688
        %v2748 = vpop.f32.mrb[0].mxu0
        %v2749 = vadd.f32 0.0, %v2748
        %v2750 = vpop.f32.mrb[0].mxu0
        %v2751 = vpop.f32.mrb[0].mxu0
        %v2752 = vadd.f32 0.0, %v2751
        %v2753 = vpop.f32.mrb[0].mxu0
        %2754 = vdwg.mxu0
        %v2755 = vpack.c.bf16 %v2639, %v2636
        %v2756 = vpack.c.bf16 %v2647, %v2644
        %v2757 = vpack.c.bf16 %v2655, %v2652
        %v2758 = vpack.c.bf16 %v2663, %v2660
        %v2759 = vpack.c.bf16 %v2728, %v2725
        %v2760 = vpack.c.bf16 %v2736, %v2733
        %v2761 = vpack.c.bf16 %v2744, %v2741
        %v2762 = vpack.c.bf16 %v2752, %v2749
        %2771 = vrot.lane.b32.xlu0 %v2755, 64
        %v2772 = vpop.permute.xlu0 %2771
        %2773 = vrot.lane.b32.xlu0 %v2756, 64
        %v2774 = vpop.permute.xlu0 %2773
        %2775 = vrot.lane.b32.xlu0 %v2757, 64
        %v2776 = vpop.permute.xlu0 %2775
        %2777 = vrot.lane.b32.xlu0 %v2758, 64
        %v2778 = vpop.permute.xlu0 %2777
        %2779 = vrot.lane.b32.xlu0 %v2759, 64
        %v2780 = vpop.permute.xlu0 %2779
        %2781 = vrot.lane.b32.xlu0 %v2760, 64
        %v2782 = vpop.permute.xlu0 %2781
        %2783 = vrot.lane.b32.xlu0 %v2761, 64
        %v2784 = vpop.permute.xlu0 %2783
        %2785 = vrot.lane.b32.xlu0 %v2762, 64
        %v2786 = vpop.permute.xlu0 %2785
        %vm2795 = vcmask 785920
        %2796 = vst.msk [vmem:[#allocation2] sm:$0xff] %vm2795, %v2772
        %2797 = vst.msk [vmem:[#allocation2 + $0x8] sm:$0xff] %vm2795, %v2774
        %2798 = vst.msk [vmem:[#allocation2 + $0x10] sm:$0xff] %vm2795, %v2776
        %2799 = vst.msk [vmem:[#allocation2 + $0x18] sm:$0xff] %vm2795, %v2778
        %2800 = vst.msk [vmem:[#allocation2 + $0x20] sm:$0xff] %vm2795, %v2780
        %2801 = vst.msk [vmem:[#allocation2 + $0x28] sm:$0xff] %vm2795, %v2782
        %2802 = vst.msk [vmem:[#allocation2 + $0x30] sm:$0xff] %vm2795, %v2784
        %2803 = vst.msk [vmem:[#allocation2 + $0x38] sm:$0xff] %vm2795, %v2786
        %2804 = vrot.lane.b32.xlu0 %v980, 32
        %v2805 = vpop.permute.xlu0 %2804
        %2806 = vrot.lane.b32.xlu0 %v983, 32
        %v2807 = vpop.permute.xlu0 %2806
        %2808 = vrot.lane.b32.xlu0 %v986, 32
        %v2809 = vpop.permute.xlu0 %2808
        %2810 = vrot.lane.b32.xlu0 %v989, 32
        %v2811 = vpop.permute.xlu0 %2810
        %2812 = vrot.lane.b32.xlu0 %v981, 32
        %v2813 = vpop.permute.xlu0 %2812
        %2814 = vrot.lane.b32.xlu0 %v984, 32
        %v2815 = vpop.permute.xlu0 %2814
        %2816 = vrot.lane.b32.xlu0 %v987, 32
        %v2817 = vpop.permute.xlu0 %2816
        %2818 = vrot.lane.b32.xlu0 %v990, 32
        %v2819 = vpop.permute.xlu0 %2818
        %v2821 = vsel %vm1004, %v2805, 0
        %v2824 = vsel %vm1004, %v2807, 0
        %v2827 = vsel %vm1004, %v2809, 0
        %v2830 = vsel %vm1004, %v2811, 0
        %v2833 = vsel %vm1004, %v2813, 0
        %v2836 = vsel %vm1004, %v2815, 0
        %v2839 = vsel %vm1004, %v2817, 0
        %v2842 = vsel %vm1004, %v2819, 0
        %2844 = vmatprep.subr.bf16.mxu0 0
        %2845 = vmatpush1.bf16.xpose.msra.mxu0 %v2833
        %2846 = vmatprep.subr.bf16.mxu0 0
        %2847 = vmatpush1.bf16.xpose.msra.mxu0 %v2836
        %2848 = vmatprep.subr.bf16.mxu0 0
        %2849 = vmatpush1.bf16.xpose.msra.mxu0 %v2839
        %2850 = vmatprep.subr.bf16.mxu0 0
        %2851 = vmatpush1.bf16.xpose.msra.mxu0 %v2842
        %2852 = vmatprep.subr.bf16.mxu0 0
        %2853 = vmatpush1.bf16.xpose.msra.mxu0 0
        %2854 = vmatprep.subr.bf16.mxu0 0
        %2855 = vmatpush1.bf16.xpose.msra.mxu0 0
        %2856 = vmatprep.subr.bf16.mxu0 0
        %2857 = vmatpush1.bf16.xpose.msra.mxu0 0
        %2858 = vmatprep.subr.bf16.mxu0 0
        %2859 = vmatpush1.bf16.xpose.msra.mxu0 0
        %2860 = vmatprep.subr.bf16.mxu0 0
        %2861 = vmatpush1.bf16.xpose.msra.mxu0 0
        %2862 = vmatprep.subr.bf16.mxu0 0
        %2863 = vmatpush1.bf16.xpose.msra.mxu0 0
        %2864 = vmatprep.subr.bf16.mxu0 0
        %2865 = vmatpush1.bf16.xpose.msra.mxu0 0
        %2866 = vmatprep.subr.bf16.mxu0 0
        %2867 = vmatpush1.bf16.xpose.msra.mxu0 0
        %2868 = vmatprep.subr.bf16.mxu0 0
        %2869 = vmatpush1.bf16.xpose.msra.mxu0 0
        %2870 = vmatprep.subr.bf16.mxu0 0
        %2871 = vmatpush1.bf16.xpose.msra.mxu0 0
        %2872 = vmatprep.subr.bf16.mxu0 0
        %2873 = vmatpush1.bf16.xpose.msra.mxu0 0
        %2874 = vmatprep.subr.bf16.mxu0 0
        %2875 = vmatpush1.bf16.xpose.msra.mxu0 0
        %2876 = vmatprep.mubr.bf16.mxu0 0
        %2877 = vmatmul.mubr.bf16.gmra.mrb[0].mxu0 %v2821
        %v2878 = vpop.f32.mrb[0].mxu0
        %v2879 = vadd.f32 0.0, %v2878
        %v2880 = vpop.f32.mrb[0].mxu0
        %v2881 = vpop.f32.mrb[0].mxu0
        %v2882 = vadd.f32 0.0, %v2881
        %v2883 = vpop.f32.mrb[0].mxu0
        %2884 = vmatprep.mubr.bf16.mxu0 0
        %2885 = vmatmul.mubr.bf16.gmra.mrb[0].mxu0 %v2824
        %v2886 = vpop.f32.mrb[0].mxu0
        %v2887 = vadd.f32 0.0, %v2886
        %v2888 = vpop.f32.mrb[0].mxu0
        %v2889 = vpop.f32.mrb[0].mxu0
        %v2890 = vadd.f32 0.0, %v2889
        %v2891 = vpop.f32.mrb[0].mxu0
        %2892 = vmatprep.mubr.bf16.mxu0 0
        %2893 = vmatmul.mubr.bf16.gmra.mrb[0].mxu0 %v2827
        %v2894 = vpop.f32.mrb[0].mxu0
        %v2895 = vadd.f32 0.0, %v2894
        %v2896 = vpop.f32.mrb[0].mxu0
        %v2897 = vpop.f32.mrb[0].mxu0
        %v2898 = vadd.f32 0.0, %v2897
        %v2899 = vpop.f32.mrb[0].mxu0
        %2900 = vmatprep.mubr.bf16.mxu0 0
        %2901 = vmatmul.mubr.bf16.gmra.mrb[0].mxu0 %v2830
        %v2902 = vpop.f32.mrb[0].mxu0
        %v2903 = vadd.f32 0.0, %v2902
        %v2904 = vpop.f32.mrb[0].mxu0
        %v2905 = vpop.f32.mrb[0].mxu0
        %v2906 = vadd.f32 0.0, %v2905
        %v2907 = vpop.f32.mrb[0].mxu0
        %2908 = vdwg.mxu0
        %2909 = vrot.lane.b32.xlu0 %v992, 32
        %v2910 = vpop.permute.xlu0 %2909
        %2911 = vrot.lane.b32.xlu0 %v995, 32
        %v2912 = vpop.permute.xlu0 %2911
        %2913 = vrot.lane.b32.xlu0 %v998, 32
        %v2914 = vpop.permute.xlu0 %2913
        %2915 = vrot.lane.b32.xlu0 %v1001, 32
        %v2916 = vpop.permute.xlu0 %2915
        %2917 = vrot.lane.b32.xlu0 %v993, 32
        %v2918 = vpop.permute.xlu0 %2917
        %2919 = vrot.lane.b32.xlu0 %v996, 32
        %v2920 = vpop.permute.xlu0 %2919
        %2921 = vrot.lane.b32.xlu0 %v999, 32
        %v2922 = vpop.permute.xlu0 %2921
        %2923 = vrot.lane.b32.xlu0 %v1002, 32
        %v2924 = vpop.permute.xlu0 %2923
        %v2926 = vsel %vm1004, %v2910, 0
        %v2929 = vsel %vm1004, %v2912, 0
        %v2932 = vsel %vm1004, %v2914, 0
        %v2935 = vsel %vm1004, %v2916, 0
        %v2938 = vsel %vm1004, %v2918, 0
        %v2941 = vsel %vm1004, %v2920, 0
        %v2944 = vsel %vm1004, %v2922, 0
        %v2947 = vsel %vm1004, %v2924, 0
        %2949 = vmatprep.subr.bf16.mxu0 0
        %2950 = vmatpush1.bf16.xpose.msra.mxu0 %v2938
        %2951 = vmatprep.subr.bf16.mxu0 0
        %2952 = vmatpush1.bf16.xpose.msra.mxu0 %v2941
        %2953 = vmatprep.subr.bf16.mxu0 0
        %2954 = vmatpush1.bf16.xpose.msra.mxu0 %v2944
        %2955 = vmatprep.subr.bf16.mxu0 0
        %2956 = vmatpush1.bf16.xpose.msra.mxu0 %v2947
        %2957 = vmatprep.subr.bf16.mxu0 0
        %2958 = vmatpush1.bf16.xpose.msra.mxu0 0
        %2959 = vmatprep.subr.bf16.mxu0 0
        %2960 = vmatpush1.bf16.xpose.msra.mxu0 0
        %2961 = vmatprep.subr.bf16.mxu0 0
        %2962 = vmatpush1.bf16.xpose.msra.mxu0 0
        %2963 = vmatprep.subr.bf16.mxu0 0
        %2964 = vmatpush1.bf16.xpose.msra.mxu0 0
        %2965 = vmatprep.subr.bf16.mxu0 0
        %2966 = vmatpush1.bf16.xpose.msra.mxu0 0
        %2967 = vmatprep.subr.bf16.mxu0 0
        %2968 = vmatpush1.bf16.xpose.msra.mxu0 0
        %2969 = vmatprep.subr.bf16.mxu0 0
        %2970 = vmatpush1.bf16.xpose.msra.mxu0 0
        %2971 = vmatprep.subr.bf16.mxu0 0
        %2972 = vmatpush1.bf16.xpose.msra.mxu0 0
        %2973 = vmatprep.subr.bf16.mxu0 0
        %2974 = vmatpush1.bf16.xpose.msra.mxu0 0
        %2975 = vmatprep.subr.bf16.mxu0 0
        %2976 = vmatpush1.bf16.xpose.msra.mxu0 0
        %2977 = vmatprep.subr.bf16.mxu0 0
        %2978 = vmatpush1.bf16.xpose.msra.mxu0 0
        %2979 = vmatprep.subr.bf16.mxu0 0
        %2980 = vmatpush1.bf16.xpose.msra.mxu0 0
        %2981 = vmatprep.mubr.bf16.mxu0 0
        %2982 = vmatmul.mubr.bf16.gmra.mrb[0].mxu0 %v2926
        %v2983 = vpop.f32.mrb[0].mxu0
        %v2984 = vadd.f32 0.0, %v2983
        %v2985 = vpop.f32.mrb[0].mxu0
        %v2986 = vpop.f32.mrb[0].mxu0
        %v2987 = vadd.f32 0.0, %v2986
        %v2988 = vpop.f32.mrb[0].mxu0
        %2989 = vmatprep.mubr.bf16.mxu0 0
        %2990 = vmatmul.mubr.bf16.gmra.mrb[0].mxu0 %v2929
        %v2991 = vpop.f32.mrb[0].mxu0
        %v2992 = vadd.f32 0.0, %v2991
        %v2993 = vpop.f32.mrb[0].mxu0
        %v2994 = vpop.f32.mrb[0].mxu0
        %v2995 = vadd.f32 0.0, %v2994
        %v2996 = vpop.f32.mrb[0].mxu0
        %2997 = vmatprep.mubr.bf16.mxu0 0
        %2998 = vmatmul.mubr.bf16.gmra.mrb[0].mxu0 %v2932
        %v2999 = vpop.f32.mrb[0].mxu0
        %v3000 = vadd.f32 0.0, %v2999
        %v3001 = vpop.f32.mrb[0].mxu0
        %v3002 = vpop.f32.mrb[0].mxu0
        %v3003 = vadd.f32 0.0, %v3002
        %v3004 = vpop.f32.mrb[0].mxu0
        %3005 = vmatprep.mubr.bf16.mxu0 0
        %3006 = vmatmul.mubr.bf16.gmra.mrb[0].mxu0 %v2935
        %v3007 = vpop.f32.mrb[0].mxu0
        %v3008 = vadd.f32 0.0, %v3007
        %v3009 = vpop.f32.mrb[0].mxu0
        %v3010 = vpop.f32.mrb[0].mxu0
        %v3011 = vadd.f32 0.0, %v3010
        %v3012 = vpop.f32.mrb[0].mxu0
        %3013 = vdwg.mxu0
        %v3014 = vsel %vm1183, %v2879, -inf
        %3015 = vmax.xlane.f32.xlu0 %v3014
        %v3016 = vpop.xlane.xlu0 %3015
        %v3017 = vsel %vm1183, %v2882, -inf
        %3018 = vmax.xlane.f32.xlu0 %v3017
        %v3019 = vpop.xlane.xlu0 %3018
        %v3020 = vsel %vm1183, %v2887, -inf
        %3021 = vmax.xlane.f32.xlu0 %v3020
        %v3022 = vpop.xlane.xlu0 %3021
        %v3023 = vsel %vm1183, %v2890, -inf
        %3024 = vmax.xlane.f32.xlu0 %v3023
        %v3025 = vpop.xlane.xlu0 %3024
        %v3026 = vsel %vm1183, %v2895, -inf
        %3027 = vmax.xlane.f32.xlu0 %v3026
        %v3028 = vpop.xlane.xlu0 %3027
        %v3029 = vsel %vm1183, %v2898, -inf
        %3030 = vmax.xlane.f32.xlu0 %v3029
        %v3031 = vpop.xlane.xlu0 %3030
        %v3032 = vsel %vm1183, %v2903, -inf
        %3033 = vmax.xlane.f32.xlu0 %v3032
        %v3034 = vpop.xlane.xlu0 %3033
        %v3035 = vsel %vm1183, %v2906, -inf
        %3036 = vmax.xlane.f32.xlu0 %v3035
        %v3037 = vpop.xlane.xlu0 %3036
        %v3038 = vsel %vm1183, %v2984, -inf
        %3039 = vmax.xlane.f32.xlu0 %v3038
        %v3040 = vpop.xlane.xlu0 %3039
        %v3041 = vsel %vm1183, %v2987, -inf
        %3042 = vmax.xlane.f32.xlu0 %v3041
        %v3043 = vpop.xlane.xlu0 %3042
        %v3044 = vsel %vm1183, %v2992, -inf
        %3045 = vmax.xlane.f32.xlu0 %v3044
        %v3046 = vpop.xlane.xlu0 %3045
        %v3047 = vsel %vm1183, %v2995, -inf
        %3048 = vmax.xlane.f32.xlu0 %v3047
        %v3049 = vpop.xlane.xlu0 %3048
        %v3050 = vsel %vm1183, %v3000, -inf
        %3051 = vmax.xlane.f32.xlu0 %v3050
        %v3052 = vpop.xlane.xlu0 %3051
        %v3053 = vsel %vm1183, %v3003, -inf
        %3054 = vmax.xlane.f32.xlu0 %v3053
        %v3055 = vpop.xlane.xlu0 %3054
        %v3056 = vsel %vm1183, %v3008, -inf
        %3057 = vmax.xlane.f32.xlu0 %v3056
        %v3058 = vpop.xlane.xlu0 %3057
        %v3059 = vsel %vm1183, %v3011, -inf
        %3060 = vmax.xlane.f32.xlu0 %v3059
        %v3061 = vpop.xlane.xlu0 %3060
        %v3062 = vsub.f32 %v2879, %v3016
        %v3063 = vsub.f32 %v2882, %v3019
        %v3064 = vsub.f32 %v2887, %v3022
        %v3065 = vsub.f32 %v2890, %v3025
        %v3066 = vsub.f32 %v2895, %v3028
        %v3067 = vsub.f32 %v2898, %v3031
        %v3068 = vsub.f32 %v2903, %v3034
        %v3069 = vsub.f32 %v2906, %v3037
        %v3070 = vsub.f32 %v2984, %v3040
        %v3071 = vsub.f32 %v2987, %v3043
        %v3072 = vsub.f32 %v2992, %v3046
        %v3073 = vsub.f32 %v2995, %v3049
        %v3074 = vsub.f32 %v3000, %v3052
        %v3075 = vsub.f32 %v3003, %v3055
        %v3076 = vsub.f32 %v3008, %v3058
        %v3077 = vsub.f32 %v3011, %v3061
        %v3078 = vmul.f32 %v3062, 1.442695
        %v3079 = vpow.pop %v3078
        %v3080 = vmul.f32 %v3063, 1.442695
        %v3081 = vpow.pop %v3080
        %v3082 = vmul.f32 %v3064, 1.442695
        %v3083 = vpow.pop %v3082
        %v3084 = vmul.f32 %v3065, 1.442695
        %v3085 = vpow.pop %v3084
        %v3086 = vmul.f32 %v3066, 1.442695
        %v3087 = vpow.pop %v3086
        %v3088 = vmul.f32 %v3067, 1.442695
        %v3089 = vpow.pop %v3088
        %v3090 = vmul.f32 %v3068, 1.442695
        %v3091 = vpow.pop %v3090
        %v3092 = vmul.f32 %v3069, 1.442695
        %v3093 = vpow.pop %v3092
        %v3094 = vmul.f32 %v3070, 1.442695
        %v3095 = vpow.pop %v3094
        %v3096 = vmul.f32 %v3071, 1.442695
        %v3097 = vpow.pop %v3096
        %v3098 = vmul.f32 %v3072, 1.442695
        %v3099 = vpow.pop %v3098
        %v3100 = vmul.f32 %v3073, 1.442695
        %v3101 = vpow.pop %v3100
        %v3102 = vmul.f32 %v3074, 1.442695
        %v3103 = vpow.pop %v3102
        %v3104 = vmul.f32 %v3075, 1.442695
        %v3105 = vpow.pop %v3104
        %v3106 = vmul.f32 %v3076, 1.442695
        %v3107 = vpow.pop %v3106
        %v3108 = vmul.f32 %v3077, 1.442695
        %v3109 = vpow.pop %v3108
        %v3110 = vsel %vm1183, %v3079, 0.0
        %3111 = vadd.xlane.f32.xlu0 %v3110
        %v3112 = vpop.xlane.xlu0 %3111
        %v3113 = vsel %vm1183, %v3081, 0.0
        %3114 = vadd.xlane.f32.xlu0 %v3113
        %v3115 = vpop.xlane.xlu0 %3114
        %v3116 = vsel %vm1183, %v3083, 0.0
        %3117 = vadd.xlane.f32.xlu0 %v3116
        %v3118 = vpop.xlane.xlu0 %3117
        %v3119 = vsel %vm1183, %v3085, 0.0
        %3120 = vadd.xlane.f32.xlu0 %v3119
        %v3121 = vpop.xlane.xlu0 %3120
        %v3122 = vsel %vm1183, %v3087, 0.0
        %3123 = vadd.xlane.f32.xlu0 %v3122
        %v3124 = vpop.xlane.xlu0 %3123
        %v3125 = vsel %vm1183, %v3089, 0.0
        %3126 = vadd.xlane.f32.xlu0 %v3125
        %v3127 = vpop.xlane.xlu0 %3126
        %v3128 = vsel %vm1183, %v3091, 0.0
        %3129 = vadd.xlane.f32.xlu0 %v3128
        %v3130 = vpop.xlane.xlu0 %3129
        %v3131 = vsel %vm1183, %v3093, 0.0
        %3132 = vadd.xlane.f32.xlu0 %v3131
        %v3133 = vpop.xlane.xlu0 %3132
        %v3134 = vsel %vm1183, %v3095, 0.0
        %3135 = vadd.xlane.f32.xlu0 %v3134
        %v3136 = vpop.xlane.xlu0 %3135
        %v3137 = vsel %vm1183, %v3097, 0.0
        %3138 = vadd.xlane.f32.xlu0 %v3137
        %v3139 = vpop.xlane.xlu0 %3138
        %v3140 = vsel %vm1183, %v3099, 0.0
        %3141 = vadd.xlane.f32.xlu0 %v3140
        %v3142 = vpop.xlane.xlu0 %3141
        %v3143 = vsel %vm1183, %v3101, 0.0
        %3144 = vadd.xlane.f32.xlu0 %v3143
        %v3145 = vpop.xlane.xlu0 %3144
        %v3146 = vsel %vm1183, %v3103, 0.0
        %3147 = vadd.xlane.f32.xlu0 %v3146
        %v3148 = vpop.xlane.xlu0 %3147
        %v3149 = vsel %vm1183, %v3105, 0.0
        %3150 = vadd.xlane.f32.xlu0 %v3149
        %v3151 = vpop.xlane.xlu0 %3150
        %v3152 = vsel %vm1183, %v3107, 0.0
        %3153 = vadd.xlane.f32.xlu0 %v3152
        %v3154 = vpop.xlane.xlu0 %3153
        %v3155 = vsel %vm1183, %v3109, 0.0
        %3156 = vadd.xlane.f32.xlu0 %v3155
        %v3157 = vpop.xlane.xlu0 %3156
        %v3158 = vrcp.pop %v3112
        %v3159 = vrcp.pop %v3115
        %v3160 = vrcp.pop %v3118
        %v3161 = vrcp.pop %v3121
        %v3162 = vrcp.pop %v3124
        %v3163 = vrcp.pop %v3127
        %v3164 = vrcp.pop %v3130
        %v3165 = vrcp.pop %v3133
        %v3166 = vrcp.pop %v3136
        %v3167 = vrcp.pop %v3139
        %v3168 = vrcp.pop %v3142
        %v3169 = vrcp.pop %v3145
        %v3170 = vrcp.pop %v3148
        %v3171 = vrcp.pop %v3151
        %v3172 = vrcp.pop %v3154
        %v3173 = vrcp.pop %v3157
        %v3174 = vmul.f32 %v3079, %v3158
        %v3175 = vmul.f32 %v3081, %v3159
        %v3176 = vmul.f32 %v3083, %v3160
        %v3177 = vmul.f32 %v3085, %v3161
        %v3178 = vmul.f32 %v3087, %v3162
        %v3179 = vmul.f32 %v3089, %v3163
        %v3180 = vmul.f32 %v3091, %v3164
        %v3181 = vmul.f32 %v3093, %v3165
        %v3182 = vmul.f32 %v3095, %v3166
        %v3183 = vmul.f32 %v3097, %v3167
        %v3184 = vmul.f32 %v3099, %v3168
        %v3185 = vmul.f32 %v3101, %v3169
        %v3186 = vmul.f32 %v3103, %v3170
        %v3187 = vmul.f32 %v3105, %v3171
        %v3188 = vmul.f32 %v3107, %v3172
        %v3189 = vmul.f32 %v3109, %v3173
        %v3190 = vpack.c.bf16 %v3175, %v3174
        %v3191 = vpack.c.bf16 %v3177, %v3176
        %v3192 = vpack.c.bf16 %v3179, %v3178
        %v3193 = vpack.c.bf16 %v3181, %v3180
        %v3194 = vpack.c.bf16 %v3183, %v3182
        %v3195 = vpack.c.bf16 %v3185, %v3184
        %v3196 = vpack.c.bf16 %v3187, %v3186
        %v3197 = vpack.c.bf16 %v3189, %v3188
        %3198 = vrot.lane.b32.xlu0 %v982, 32
        %v3199 = vpop.permute.xlu0 %3198
        %3200 = vrot.lane.b32.xlu0 %v985, 32
        %v3201 = vpop.permute.xlu0 %3200
        %3202 = vrot.lane.b32.xlu0 %v988, 32
        %v3203 = vpop.permute.xlu0 %3202
        %3204 = vrot.lane.b32.xlu0 %v991, 32
        %v3205 = vpop.permute.xlu0 %3204
        %v3211 = vsel %vm1183, %v3190, 0
        %v3214 = vsel %vm1183, %v3191, 0
        %v3217 = vsel %vm1183, %v3192, 0
        %v3220 = vsel %vm1183, %v3193, 0
        %3222 = vmatprep.subr.bf16.mxu0 0
        %3223 = vmatpush1.bf16.msra.mxu0 %v3199
        %3224 = vmatprep.subr.bf16.mxu0 0
        %3225 = vmatpush1.bf16.msra.mxu0 %v3201
        %3226 = vmatprep.subr.bf16.mxu0 0
        %3227 = vmatpush1.bf16.msra.mxu0 %v3203
        %3228 = vmatprep.subr.bf16.mxu0 0
        %3229 = vmatpush1.bf16.msra.mxu0 %v3205
        %3230 = vmatprep.subr.bf16.mxu0 0
        %3231 = vmatpush1.bf16.msra.mxu0 0
        %3232 = vmatprep.subr.bf16.mxu0 0
        %3233 = vmatpush1.bf16.msra.mxu0 0
        %3234 = vmatprep.subr.bf16.mxu0 0
        %3235 = vmatpush1.bf16.msra.mxu0 0
        %3236 = vmatprep.subr.bf16.mxu0 0
        %3237 = vmatpush1.bf16.msra.mxu0 0
        %3238 = vmatprep.subr.bf16.mxu0 0
        %3239 = vmatpush1.bf16.msra.mxu0 0
        %3240 = vmatprep.subr.bf16.mxu0 0
        %3241 = vmatpush1.bf16.msra.mxu0 0
        %3242 = vmatprep.subr.bf16.mxu0 0
        %3243 = vmatpush1.bf16.msra.mxu0 0
        %3244 = vmatprep.subr.bf16.mxu0 0
        %3245 = vmatpush1.bf16.msra.mxu0 0
        %3246 = vmatprep.subr.bf16.mxu0 0
        %3247 = vmatpush1.bf16.msra.mxu0 0
        %3248 = vmatprep.subr.bf16.mxu0 0
        %3249 = vmatpush1.bf16.msra.mxu0 0
        %3250 = vmatprep.subr.bf16.mxu0 0
        %3251 = vmatpush1.bf16.msra.mxu0 0
        %3252 = vmatprep.subr.bf16.mxu0 0
        %3253 = vmatpush1.bf16.msra.mxu0 0
        %3254 = vmatprep.mubr.bf16.mxu0 0
        %3255 = vmatmul.mubr.bf16.gmra.mrb[0].mxu0 %v3211
        %v3256 = vpop.f32.mrb[0].mxu0
        %v3257 = vadd.f32 0.0, %v3256
        %v3258 = vpop.f32.mrb[0].mxu0
        %v3259 = vpop.f32.mrb[0].mxu0
        %v3260 = vadd.f32 0.0, %v3259
        %v3261 = vpop.f32.mrb[0].mxu0
        %3262 = vmatprep.mubr.bf16.mxu0 0
        %3263 = vmatmul.mubr.bf16.gmra.mrb[0].mxu0 %v3214
        %v3264 = vpop.f32.mrb[0].mxu0
        %v3265 = vadd.f32 0.0, %v3264
        %v3266 = vpop.f32.mrb[0].mxu0
        %v3267 = vpop.f32.mrb[0].mxu0
        %v3268 = vadd.f32 0.0, %v3267
        %v3269 = vpop.f32.mrb[0].mxu0
        %3270 = vmatprep.mubr.bf16.mxu0 0
        %3271 = vmatmul.mubr.bf16.gmra.mrb[0].mxu0 %v3217
        %v3272 = vpop.f32.mrb[0].mxu0
        %v3273 = vadd.f32 0.0, %v3272
        %v3274 = vpop.f32.mrb[0].mxu0
        %v3275 = vpop.f32.mrb[0].mxu0
        %v3276 = vadd.f32 0.0, %v3275
        %v3277 = vpop.f32.mrb[0].mxu0
        %3278 = vmatprep.mubr.bf16.mxu0 0
        %3279 = vmatmul.mubr.bf16.gmra.mrb[0].mxu0 %v3220
        %v3280 = vpop.f32.mrb[0].mxu0
        %v3281 = vadd.f32 0.0, %v3280
        %v3282 = vpop.f32.mrb[0].mxu0
        %v3283 = vpop.f32.mrb[0].mxu0
        %v3284 = vadd.f32 0.0, %v3283
        %v3285 = vpop.f32.mrb[0].mxu0
        %3286 = vdwg.mxu0
        %3287 = vrot.lane.b32.xlu0 %v994, 32
        %v3288 = vpop.permute.xlu0 %3287
        %3289 = vrot.lane.b32.xlu0 %v997, 32
        %v3290 = vpop.permute.xlu0 %3289
        %3291 = vrot.lane.b32.xlu0 %v1000, 32
        %v3292 = vpop.permute.xlu0 %3291
        %3293 = vrot.lane.b32.xlu0 %v1003, 32
        %v3294 = vpop.permute.xlu0 %3293
        %v3300 = vsel %vm1183, %v3194, 0
        %v3303 = vsel %vm1183, %v3195, 0
        %v3306 = vsel %vm1183, %v3196, 0
        %v3309 = vsel %vm1183, %v3197, 0
        %3311 = vmatprep.subr.bf16.mxu0 0
        %3312 = vmatpush1.bf16.msra.mxu0 %v3288
        %3313 = vmatprep.subr.bf16.mxu0 0
        %3314 = vmatpush1.bf16.msra.mxu0 %v3290
        %3315 = vmatprep.subr.bf16.mxu0 0
        %3316 = vmatpush1.bf16.msra.mxu0 %v3292
        %3317 = vmatprep.subr.bf16.mxu0 0
        %3318 = vmatpush1.bf16.msra.mxu0 %v3294
        %3319 = vmatprep.subr.bf16.mxu0 0
        %3320 = vmatpush1.bf16.msra.mxu0 0
        %3321 = vmatprep.subr.bf16.mxu0 0
        %3322 = vmatpush1.bf16.msra.mxu0 0
        %3323 = vmatprep.subr.bf16.mxu0 0
        %3324 = vmatpush1.bf16.msra.mxu0 0
        %3325 = vmatprep.subr.bf16.mxu0 0
        %3326 = vmatpush1.bf16.msra.mxu0 0
        %3327 = vmatprep.subr.bf16.mxu0 0
        %3328 = vmatpush1.bf16.msra.mxu0 0
        %3329 = vmatprep.subr.bf16.mxu0 0
        %3330 = vmatpush1.bf16.msra.mxu0 0
        %3331 = vmatprep.subr.bf16.mxu0 0
        %3332 = vmatpush1.bf16.msra.mxu0 0
        %3333 = vmatprep.subr.bf16.mxu0 0
        %3334 = vmatpush1.bf16.msra.mxu0 0
        %3335 = vmatprep.subr.bf16.mxu0 0
        %3336 = vmatpush1.bf16.msra.mxu0 0
        %3337 = vmatprep.subr.bf16.mxu0 0
        %3338 = vmatpush1.bf16.msra.mxu0 0
        %3339 = vmatprep.subr.bf16.mxu0 0
        %3340 = vmatpush1.bf16.msra.mxu0 0
        %3341 = vmatprep.subr.bf16.mxu0 0
        %3342 = vmatpush1.bf16.msra.mxu0 0
        %3343 = vmatprep.mubr.bf16.mxu0 0
        %3344 = vmatmul.mubr.bf16.gmra.mrb[0].mxu0 %v3300
        %v3345 = vpop.f32.mrb[0].mxu0
        %v3346 = vadd.f32 0.0, %v3345
        %v3347 = vpop.f32.mrb[0].mxu0
        %v3348 = vpop.f32.mrb[0].mxu0
        %v3349 = vadd.f32 0.0, %v3348
        %v3350 = vpop.f32.mrb[0].mxu0
        %3351 = vmatprep.mubr.bf16.mxu0 0
        %3352 = vmatmul.mubr.bf16.gmra.mrb[0].mxu0 %v3303
        %v3353 = vpop.f32.mrb[0].mxu0
        %v3354 = vadd.f32 0.0, %v3353
        %v3355 = vpop.f32.mrb[0].mxu0
        %v3356 = vpop.f32.mrb[0].mxu0
        %v3357 = vadd.f32 0.0, %v3356
        %v3358 = vpop.f32.mrb[0].mxu0
        %3359 = vmatprep.mubr.bf16.mxu0 0
        %3360 = vmatmul.mubr.bf16.gmra.mrb[0].mxu0 %v3306
        %v3361 = vpop.f32.mrb[0].mxu0
        %v3362 = vadd.f32 0.0, %v3361
        %v3363 = vpop.f32.mrb[0].mxu0
        %v3364 = vpop.f32.mrb[0].mxu0
        %v3365 = vadd.f32 0.0, %v3364
        %v3366 = vpop.f32.mrb[0].mxu0
        %3367 = vmatprep.mubr.bf16.mxu0 0
        %3368 = vmatmul.mubr.bf16.gmra.mrb[0].mxu0 %v3309
        %v3369 = vpop.f32.mrb[0].mxu0
        %v3370 = vadd.f32 0.0, %v3369
        %v3371 = vpop.f32.mrb[0].mxu0
        %v3372 = vpop.f32.mrb[0].mxu0
        %v3373 = vadd.f32 0.0, %v3372
        %v3374 = vpop.f32.mrb[0].mxu0
        %3375 = vdwg.mxu0
        %v3376 = vpack.c.bf16 %v3260, %v3257
        %v3377 = vpack.c.bf16 %v3268, %v3265
        %v3378 = vpack.c.bf16 %v3276, %v3273
        %v3379 = vpack.c.bf16 %v3284, %v3281
        %v3380 = vpack.c.bf16 %v3349, %v3346
        %v3381 = vpack.c.bf16 %v3357, %v3354
        %v3382 = vpack.c.bf16 %v3365, %v3362
        %v3383 = vpack.c.bf16 %v3373, %v3370
        %3392 = vrot.lane.b32.xlu0 %v3376, 96
        %v3393 = vpop.permute.xlu0 %3392
        %3394 = vrot.lane.b32.xlu0 %v3377, 96
        %v3395 = vpop.permute.xlu0 %3394
        %3396 = vrot.lane.b32.xlu0 %v3378, 96
        %v3397 = vpop.permute.xlu0 %3396
        %3398 = vrot.lane.b32.xlu0 %v3379, 96
        %v3399 = vpop.permute.xlu0 %3398
        %3400 = vrot.lane.b32.xlu0 %v3380, 96
        %v3401 = vpop.permute.xlu0 %3400
        %3402 = vrot.lane.b32.xlu0 %v3381, 96
        %v3403 = vpop.permute.xlu0 %3402
        %3404 = vrot.lane.b32.xlu0 %v3382, 96
        %v3405 = vpop.permute.xlu0 %3404
        %3406 = vrot.lane.b32.xlu0 %v3383, 96
        %v3407 = vpop.permute.xlu0 %3406
        %vm3416 = vcmask 1048320
        %3417 = vst.msk [vmem:[#allocation2] sm:$0xff] %vm3416, %v3393
        %3418 = vst.msk [vmem:[#allocation2 + $0x8] sm:$0xff] %vm3416, %v3395
        %3419 = vst.msk [vmem:[#allocation2 + $0x10] sm:$0xff] %vm3416, %v3397
        %3420 = vst.msk [vmem:[#allocation2 + $0x18] sm:$0xff] %vm3416, %v3399
        %3421 = vst.msk [vmem:[#allocation2 + $0x20] sm:$0xff] %vm3416, %v3401
        %3422 = vst.msk [vmem:[#allocation2 + $0x28] sm:$0xff] %vm3416, %v3403
        %3423 = vst.msk [vmem:[#allocation2 + $0x30] sm:$0xff] %vm3416, %v3405
        %3424 = vst.msk [vmem:[#allocation2 + $0x38] sm:$0xff] %vm3416, %v3407
        %v3425 = vld [vmem:[#allocation2] sm:$0xff]
        %v3426 = vld [vmem:[#allocation2 + $0x8] sm:$0xff]
        %v3427 = vld [vmem:[#allocation2 + $0x10] sm:$0xff]
        %v3428 = vld [vmem:[#allocation2 + $0x18] sm:$0xff]
        %v3429 = vld [vmem:[#allocation2 + $0x20] sm:$0xff]
        %v3430 = vld [vmem:[#allocation2 + $0x28] sm:$0xff]
        %v3431 = vld [vmem:[#allocation2 + $0x30] sm:$0xff]
        %v3432 = vld [vmem:[#allocation2 + $0x38] sm:$0xff]
        %v3433 = vld [vmem:[#allocation8] sm:$0xf]
        %v3434 = vld [vmem:[#allocation8 + $0x4] sm:$0xf]
        %v3435 = vld [vmem:[#allocation8 + $0x8] sm:$0xf]
        %v3436 = vld [vmem:[#allocation8 + $0xc] sm:$0xf]
        %v3437 = vld [vmem:[#allocation8 + $0x10] sm:$0xf]
        %v3438 = vld [vmem:[#allocation8 + $0x14] sm:$0xf]
        %v3439 = vld [vmem:[#allocation8 + $0x18] sm:$0xf]
        %v3440 = vld [vmem:[#allocation8 + $0x1c] sm:$0xf]
        %v3441 = vld [vmem:[#allocation8 + $0x20] sm:$0xf]
        %v3442 = vld [vmem:[#allocation8 + $0x24] sm:$0xf]
        %v3443 = vld [vmem:[#allocation8 + $0x28] sm:$0xf]
        %v3444 = vld [vmem:[#allocation8 + $0x2c] sm:$0xf]
        %v3445 = vld [vmem:[#allocation8 + $0x30] sm:$0xf]
        %v3446 = vld [vmem:[#allocation8 + $0x34] sm:$0xf]
        %v3447 = vld [vmem:[#allocation8 + $0x38] sm:$0xf]
        %v3448 = vld [vmem:[#allocation8 + $0x3c] sm:$0xf]
        %v3449 = vld [vmem:[%s6] sm:$0x1]
        %v3451 = vlaneseq
        %v3452 = vshrl.u32 %v3451, 7
        %v3453 = vsub.s32 0, %v3452
        %v3454 = vrot.slane %v3449, %v3453
        %v3472 = vunpack.c.l.b16 %v3433
        %v3473 = vunpack.c.l.b16 %v3434
        %v3474 = vunpack.c.l.b16 %v3435
        %v3475 = vunpack.c.l.b16 %v3436
        %v3476 = vunpack.c.l.b16 %v3437
        %v3477 = vunpack.c.l.b16 %v3438
        %v3478 = vunpack.c.l.b16 %v3439
        %v3479 = vunpack.c.l.b16 %v3440
        %v3480 = vunpack.c.l.b16 %v3441
        %v3481 = vunpack.c.l.b16 %v3442
        %v3482 = vunpack.c.l.b16 %v3443
        %v3483 = vunpack.c.l.b16 %v3444
        %v3484 = vunpack.c.l.b16 %v3445
        %v3485 = vunpack.c.l.b16 %v3446
        %v3486 = vunpack.c.l.b16 %v3447
        %v3487 = vunpack.c.l.b16 %v3448
        %v3488 = vpack.c.b16 %v3473, %v3472
        %v3489 = vpack.c.b16 %v3475, %v3474
        %v3490 = vpack.c.b16 %v3477, %v3476
        %v3491 = vpack.c.b16 %v3479, %v3478
        %v3492 = vpack.c.b16 %v3481, %v3480
        %v3493 = vpack.c.b16 %v3483, %v3482
        %v3494 = vpack.c.b16 %v3485, %v3484
        %v3495 = vpack.c.b16 %v3487, %v3486
        %3504 = vmatprep.subr.bf16.mxu0 0
        %3505 = vmatpush1.bf16.msra.mxu0 %v3488
        %3506 = vmatprep.subr.bf16.mxu0 0
        %3507 = vmatpush1.bf16.msra.mxu0 %v3489
        %3508 = vmatprep.subr.bf16.mxu0 0
        %3509 = vmatpush1.bf16.msra.mxu0 %v3490
        %3510 = vmatprep.subr.bf16.mxu0 0
        %3511 = vmatpush1.bf16.msra.mxu0 %v3491
        %3512 = vmatprep.subr.bf16.mxu0 0
        %3513 = vmatpush1.bf16.msra.mxu0 %v3492
        %3514 = vmatprep.subr.bf16.mxu0 0
        %3515 = vmatpush1.bf16.msra.mxu0 %v3493
        %3516 = vmatprep.subr.bf16.mxu0 0
        %3517 = vmatpush1.bf16.msra.mxu0 %v3494
        %3518 = vmatprep.subr.bf16.mxu0 0
        %3519 = vmatpush1.bf16.msra.mxu0 %v3495
        %3520 = vmatprep.subr.bf16.mxu0 0
        %3521 = vmatpush1.bf16.msra.mxu0 0
        %3522 = vmatprep.subr.bf16.mxu0 0
        %3523 = vmatpush1.bf16.msra.mxu0 0
        %3524 = vmatprep.subr.bf16.mxu0 0
        %3525 = vmatpush1.bf16.msra.mxu0 0
        %3526 = vmatprep.subr.bf16.mxu0 0
        %3527 = vmatpush1.bf16.msra.mxu0 0
        %3528 = vmatprep.subr.bf16.mxu0 0
        %3529 = vmatpush1.bf16.msra.mxu0 0
        %3530 = vmatprep.subr.bf16.mxu0 0
        %3531 = vmatpush1.bf16.msra.mxu0 0
        %3532 = vmatprep.subr.bf16.mxu0 0
        %3533 = vmatpush1.bf16.msra.mxu0 0
        %3534 = vmatprep.subr.bf16.mxu0 0
        %3535 = vmatpush1.bf16.msra.mxu0 0
        %3536 = vmatprep.mubr.bf16.mxu0 0
        %3537 = vmatmul.mubr.bf16.gmra.mrb[0].mxu0 %v3425
        %v3538 = vpop.f32.mrb[0].mxu0
        %v3539 = vadd.f32 %v3454, %v3538
        %v3540 = vpop.f32.mrb[0].mxu0
        %v3541 = vpop.f32.mrb[0].mxu0
        %v3542 = vadd.f32 %v3454, %v3541
        %v3543 = vpop.f32.mrb[0].mxu0
        %3544 = vmatprep.mubr.bf16.mxu0 0
        %3545 = vmatmul.mubr.bf16.gmra.mrb[0].mxu0 %v3426
        %v3546 = vpop.f32.mrb[0].mxu0
        %v3547 = vadd.f32 %v3454, %v3546
        %v3548 = vpop.f32.mrb[0].mxu0
        %v3549 = vpop.f32.mrb[0].mxu0
        %v3550 = vadd.f32 %v3454, %v3549
        %v3551 = vpop.f32.mrb[0].mxu0
        %3552 = vmatprep.mubr.bf16.mxu0 0
        %3553 = vmatmul.mubr.bf16.gmra.mrb[0].mxu0 %v3427
        %v3554 = vpop.f32.mrb[0].mxu0
        %v3555 = vadd.f32 %v3454, %v3554
        %v3556 = vpop.f32.mrb[0].mxu0
        %v3557 = vpop.f32.mrb[0].mxu0
        %v3558 = vadd.f32 %v3454, %v3557
        %v3559 = vpop.f32.mrb[0].mxu0
        %3560 = vmatprep.mubr.bf16.mxu0 0
        %3561 = vmatmul.mubr.bf16.gmra.mrb[0].mxu0 %v3428
        %v3562 = vpop.f32.mrb[0].mxu0
        %v3563 = vadd.f32 %v3454, %v3562
        %v3564 = vpop.f32.mrb[0].mxu0
        %v3565 = vpop.f32.mrb[0].mxu0
        %v3566 = vadd.f32 %v3454, %v3565
        %v3567 = vpop.f32.mrb[0].mxu0
        %3568 = vmatprep.mubr.bf16.mxu0 0
        %3569 = vmatmul.mubr.bf16.gmra.mrb[0].mxu0 %v3429
        %v3570 = vpop.f32.mrb[0].mxu0
        %v3571 = vadd.f32 %v3454, %v3570
        %v3572 = vpop.f32.mrb[0].mxu0
        %v3573 = vpop.f32.mrb[0].mxu0
        %v3574 = vadd.f32 %v3454, %v3573
        %v3575 = vpop.f32.mrb[0].mxu0
        %3576 = vmatprep.mubr.bf16.mxu0 0
        %3577 = vmatmul.mubr.bf16.gmra.mrb[0].mxu0 %v3430
        %v3578 = vpop.f32.mrb[0].mxu0
        %v3579 = vadd.f32 %v3454, %v3578
        %v3580 = vpop.f32.mrb[0].mxu0
        %v3581 = vpop.f32.mrb[0].mxu0
        %v3582 = vadd.f32 %v3454, %v3581
        %v3583 = vpop.f32.mrb[0].mxu0
        %3584 = vmatprep.mubr.bf16.mxu0 0
        %3585 = vmatmul.mubr.bf16.gmra.mrb[0].mxu0 %v3431
        %v3586 = vpop.f32.mrb[0].mxu0
        %v3587 = vadd.f32 %v3454, %v3586
        %v3588 = vpop.f32.mrb[0].mxu0
        %v3589 = vpop.f32.mrb[0].mxu0
        %v3590 = vadd.f32 %v3454, %v3589
        %v3591 = vpop.f32.mrb[0].mxu0
        %3592 = vmatprep.mubr.bf16.mxu0 0
        %3593 = vmatmul.mubr.bf16.gmra.mrb[0].mxu0 %v3432
        %v3594 = vpop.f32.mrb[0].mxu0
        %v3595 = vadd.f32 %v3454, %v3594
        %v3596 = vpop.f32.mrb[0].mxu0
        %v3597 = vpop.f32.mrb[0].mxu0
        %v3598 = vadd.f32 %v3454, %v3597
        %v3599 = vpop.f32.mrb[0].mxu0
        %3600 = vdwg.mxu0
        %v3601 = vadd.f32 %v3539, %v3542
        %v3602 = vadd.f32 %v3601, %v3547
        %v3603 = vadd.f32 %v3602, %v3550
        %v3604 = vadd.f32 %v3603, %v3555
        %v3605 = vadd.f32 %v3604, %v3558
        %v3606 = vadd.f32 %v3605, %v3563
        %v3607 = vadd.f32 %v3606, %v3566
        %v3608 = vrot.slane %v3607, 4
        %v3609 = vadd.f32 %v3607, %v3608
        %v3610 = vrot.slane %v3609, 2
        %v3611 = vadd.f32 %v3609, %v3610
        %v3612 = vrot.slane %v3611, 1
        %v3613 = vadd.f32 %v3611, %v3612
        %v3614 = vadd.f32 %v3571, %v3574
        %v3615 = vadd.f32 %v3614, %v3579
        %v3616 = vadd.f32 %v3615, %v3582
        %v3617 = vadd.f32 %v3616, %v3587
        %v3618 = vadd.f32 %v3617, %v3590
        %v3619 = vadd.f32 %v3618, %v3595
        %v3620 = vadd.f32 %v3619, %v3598
        %v3621 = vrot.slane %v3620, 4
        %v3622 = vadd.f32 %v3620, %v3621
        %v3623 = vrot.slane %v3622, 2
        %v3624 = vadd.f32 %v3622, %v3623
        %v3625 = vrot.slane %v3624, 1
        %v3626 = vadd.f32 %v3624, %v3625
        %v3627 = vmul.f32 %v3613, 0.015625
        %v3628 = vmul.f32 %v3626, 0.015625
        %3629 = vst [vmem:[%s326] sm:$0x1] %v3627
        %3630 = vst [vmem:[%s326 + $0x1] sm:$0x1] %v3628
        %s3631 = sand.u32 %s185, 1
        %s3632 = scalar_lea.sflag [#allocation5], %s3631
        %s3633 = sand.u32 %s185, 1
        %s3634 = smul.addr %s3633, 2
        %s3635 = scalar_lea.vmem [#allocation9], %s3634
        // Predicated region
        $region61: #{tpu_custom_call.1} parent=47 // pred_check
          %p3636 = pneg %p195
        $region62: #{tpu_custom_call.1} parent=47 // pred_check_branch
          %3638 = sbr.rel (%p3636) target = $region64
        $region63: #{tpu_custom_call.1} parent=47 // pred_region
          %s3639 = smul.u32 2, %s25
          %s3641 = ssub.s32 32, 32
          %3642 = vsyncadd %s3632, %s3641
          %s3643 = smul.addr %s3639, 16
          %s3644 = scalar_lea.hbm %s7, %s3643
          %s3645 = sshll.u32 %s3635, 4
          %s3646 = int_to_ptr.vmem [resolvable:$true] %s3645
          %3651 = dma.vmem_to_hbm [thread:$0]  %s3646, 32, %s3644, %s3632, 16, 16, 1
        $region64: #{tpu_custom_call.1} parent=47 // pred_fallthru
          _
      $region48: #{tpu_custom_call.1} parent=5 // pred_fallthru
        _
      %p3652 = scmp.le.s32.totalorder 2, %s20
      // Predicated region
      $region65: #{tpu_custom_call.1} parent=5 // pred_check
        %p3653 = pneg %p3652
      $region66: #{tpu_custom_call.1} parent=5 // pred_check_branch
        %3655 = sbr.rel (%p3653) target = $region68
      $region67: #{tpu_custom_call.1} parent=5 // pred_region
        %s3656 = ssub.s32 %s20, 2
        // Predicated region
        $region69: #{tpu_custom_call.1} parent=67 // pred_check
          %p3657 = pneg %p201
        $region70: #{tpu_custom_call.1} parent=67 // pred_check_branch
          %3659 = sbr.rel (%p3657) target = $region72
        $region71: #{tpu_custom_call.1} parent=67 // pred_region
          %s3660 = sand.u32 %s186, 1
          %s3661 = scalar_lea.sflag [#allocation5], %s3660
          %s3662 = sand.u32 %s186, 1
          %s3663 = smul.addr %s3662, 2
          %s3664 = scalar_lea.vmem [#allocation9], %s3663
          %3665 = dma.done %s3661, 32
        $region72: #{tpu_custom_call.1} parent=67 // pred_fallthru
          _
      $region68: #{tpu_custom_call.1} parent=5 // pred_fallthru
        _
    $region6: #{tpu_custom_call.1} parent=1 // loop_footer
      %s24 = sadd.s32 1, %s20
    $region7: #{tpu_custom_call.1} parent=1 // loop_footer_branch
      %19 = sbr.rel target = $region3
    $region8: #{tpu_custom_call.1} parent=1 // loop_exit
      _
    %3666 = vsyncpa [#allocation4], 1
    %s3667 = scalar_lea.sflag [#allocation4], 1
    %3668 = vsyncpa %s3667, 1
    %3669 = vsyncpa [#allocation7], 1
    %3670 = vsyncpa [#allocation5], 1
    %s3671 = scalar_lea.sflag [#allocation5], 1
    %3672 = vsyncpa %s3671, 1

</llo_original>
